<compile_context>
chip_gen: v6e
topology: v6e:2x2x1
jax: 0.10.0
libtpu: 0.0.40
codegen_flags: <defaults>
</compile_context>

<pallas_src>
import math

import jax
import jax.numpy as jnp
from jax.experimental import pallas as pl
from jax.experimental.pallas import tpu as pltpu

D_MODEL = 32
N_HEADS = 4
D_K = D_MODEL // N_HEADS
D_FF = 64
S_DEC = 8
S_ENC = 8
BATCH = 2
EPS = 1e-6
NEG_INF = -1e9

# Param-slab row layout: every entry lives on its own row at lane offset 0,
# so in-kernel extraction is a plain row slice + lane prefix (no lane offsets).
ROW_B_SELF = 0      # rows 0..3 : self-attn biases  [q, k, v, out]
ROW_B_SRC = 4       # rows 4..7 : src-attn biases   [q, k, v, out]
ROW_B1 = 8          # FFN bias 1 (64 lanes)
ROW_B2 = 9          # FFN bias 2 (32 lanes)
ROW_LN_A = 10       # rows 10..12 : LayerNorm scale for sublayers 0..2
ROW_LN_B = 13       # rows 13..15 : LayerNorm shift for sublayers 0..2
SLAB_ROWS = 16
SLAB_LANES = 128


# ---------------------------------------------------------------- kernel ----
def make_kernel():
    scale = 1.0 / math.sqrt(D_K)

    def layernorm(x, a, b):
        # Annotated-Transformer LayerNorm: unbiased std (ddof=1), eps on std.
        n = x.shape[-1]
        mean = jnp.mean(x, axis=-1, keepdims=True)
        var = jnp.sum((x - mean) ** 2, axis=-1, keepdims=True) / (n - 1)
        inv = 1.0 / (jnp.sqrt(var) + EPS)       # one reciprocal per row
        return a * (x - mean) * inv + b

    def softmax(s):
        m = jnp.max(s, axis=-1, keepdims=True)
        e = jnp.exp(s - m)
        return e * (1.0 / jnp.sum(e, axis=-1, keepdims=True))

    def mha(q_in, kv_in, bias, wq, wk, wv, wo, bq, bk, bv, bo, head_masks):
        # Dense projections over all (batch-folded) rows: 3 MXU issues.
        q_all = jnp.dot(q_in, wq, preferred_element_type=jnp.float32) + bq
        k_all = jnp.dot(kv_in, wk, preferred_element_type=jnp.float32) + bk
        v_all = jnp.dot(kv_in, wv, preferred_element_type=jnp.float32) + bv

        ov = None
        for h in range(N_HEADS):
            m = head_masks[h]                       # (1, D): 1.0 on head-h lanes
            # Head-restricted contraction via constant lane masking (VPU),
            # not lane slicing: zeroed lanes add exactly 0 to the dot.
            s = jax.lax.dot_general(
                q_all * m, k_all, (((1,), (1,)), ((), ())),
                preferred_element_type=jnp.float32) * scale + bias
            p = softmax(s)                          # block-diag bias keeps batches apart
            pv = jnp.dot(p, v_all * m, preferred_element_type=jnp.float32)
            ov = pv if ov is None else ov + pv      # head h lands on its own lanes
        # Single dense output projection over the assembled heads.
        return jnp.dot(ov, wo, preferred_element_type=jnp.float32) + bo

    def kernel(x_ref, mem_ref, bias_self_ref, bias_src_ref, w_attn_ref,
               w1_ref, w2_ref, slab_ref, out_ref):
        x = x_ref[...]                      # (B*Sd, D)
        mem = mem_ref[...]                  # (B*Se, D)
        slab = slab_ref[...]                # (16, 128) packed small params

        def row(r, n):
            return slab[r:r + 1, 0:n]       # (1, n) at lane offset 0

        # Constant per-head lane-selection masks, built once, reused twice.
        lane = jax.lax.broadcasted_iota(jnp.int32, (1, D_MODEL), 1)
        head_masks = [
            ((lane >= h * D_K) & (lane < (h + 1) * D_K)).astype(jnp.float32)
            for h in range(N_HEADS)]

        # sublayer[0]: x + self_attn(LN(x), LN(x), LN(x), tgt_mask)
        y = layernorm(x, row(ROW_LN_A + 0, D_MODEL), row(ROW_LN_B + 0, D_MODEL))
        x = x + mha(y, y, bias_self_ref[...],
                    w_attn_ref[0, 0], w_attn_ref[0, 1],
                    w_attn_ref[0, 2], w_attn_ref[0, 3],
                    row(ROW_B_SELF + 0, D_MODEL), row(ROW_B_SELF + 1, D_MODEL),
                    row(ROW_B_SELF + 2, D_MODEL), row(ROW_B_SELF + 3, D_MODEL),
                    head_masks)

        # sublayer[1]: x + src_attn(LN(x), memory, memory, src_mask)
        y = layernorm(x, row(ROW_LN_A + 1, D_MODEL), row(ROW_LN_B + 1, D_MODEL))
        x = x + mha(y, mem, bias_src_ref[...],
                    w_attn_ref[1, 0], w_attn_ref[1, 1],
                    w_attn_ref[1, 2], w_attn_ref[1, 3],
                    row(ROW_B_SRC + 0, D_MODEL), row(ROW_B_SRC + 1, D_MODEL),
                    row(ROW_B_SRC + 2, D_MODEL), row(ROW_B_SRC + 3, D_MODEL),
                    head_masks)

        # sublayer[2]: x + W2 @ relu(W1 @ LN(x))
        y = layernorm(x, row(ROW_LN_A + 2, D_MODEL), row(ROW_LN_B + 2, D_MODEL))
        h = jnp.maximum(
            jnp.dot(y, w1_ref[...], preferred_element_type=jnp.float32)
            + row(ROW_B1, D_FF), 0.0)
        x = x + jnp.dot(h, w2_ref[...],
                        preferred_element_type=jnp.float32) + row(ROW_B2, D_MODEL)

        out_ref[...] = x.astype(out_ref.dtype)

    return kernel


# --------------------------------------------------------------- wrapper ----
def _block_diag_bias(bias_b, B, Sq, Sk):
    """(B,Sq,Sk) additive bias -> (B*Sq, B*Sk) block-diagonal additive bias.

    Cross-batch blocks are -1e9 so their softmax weights underflow to exactly
    0 -> folding the batch into the attention matmul does not mix batches.
    """
    big = jnp.full((B * Sq, B * Sk), NEG_INF, jnp.float32)
    for b in range(B):
        big = big.at[b * Sq:(b + 1) * Sq, b * Sk:(b + 1) * Sk].set(bias_b[b])
    return big


def _pack_slab(p):
    """Pack all small vectors into one lane-dense (16, 128) f32 slab."""
    slab = jnp.zeros((SLAB_ROWS, SLAB_LANES), jnp.float32)
    slab = slab.at[ROW_B_SELF:ROW_B_SELF + 4, :D_MODEL].set(p["b_self"])
    slab = slab.at[ROW_B_SRC:ROW_B_SRC + 4, :D_MODEL].set(p["b_src"])
    slab = slab.at[ROW_B1, :D_FF].set(p["b1"].reshape(-1))
    slab = slab.at[ROW_B2, :D_MODEL].set(p["b2"].reshape(-1))
    slab = slab.at[ROW_LN_A:ROW_LN_A + 3, :D_MODEL].set(p["ln_a"])
    slab = slab.at[ROW_LN_B:ROW_LN_B + 3, :D_MODEL].set(p["ln_b"])
    return slab


def decoder_layer(x, memory, src_mask, tgt_mask, p):
    B, Sd, D = x.shape
    Se = memory.shape[1]
    assert D == D_MODEL

    # Fold batch into rows (free metadata reshapes outside the kernel).
    x_flat = x.reshape(B * Sd, D)
    mem_flat = memory.reshape(B * Se, D)

    # Additive attention masks (0 / -1e9), folded into block-diagonal biases.
    tgt_bias = jnp.where(tgt_mask == 0, NEG_INF, 0.0).astype(jnp.float32)
    src_bias = jnp.broadcast_to(
        jnp.where(src_mask == 0, NEG_INF, 0.0).astype(jnp.float32), (B, Sd, Se))
    bias_self = _block_diag_bias(tgt_bias, B, Sd, Sd)    # (B*Sd, B*Sd)
    bias_src = _block_diag_bias(src_bias, B, Sd, Se)     # (B*Sd, B*Se)

    # One weight slab for both attention blocks: [self, src] x [Wq,Wk,Wv,Wo].
    w_attn = jnp.stack([p["w_self"], p["w_src"]])        # (2, 4, D, D)
    slab = _pack_slab(p)

    operands = [x_flat, mem_flat, bias_self, bias_src, w_attn,
                p["w1"], p["w2"], slab]

    def full(shape):
        n = len(shape)
        return pl.BlockSpec(tuple(shape), lambda i, n=n: (0,) * n)

    grid_spec = pltpu.PrefetchScalarGridSpec(
        num_scalar_prefetch=0,
        grid=(1,),                           # single step: whole problem fits
        in_specs=[full(op.shape) for op in operands],
        out_specs=full((B * Sd, D)),
    )

    out = pl.pallas_call(
        make_kernel(),
        out_shape=jax.ShapeDtypeStruct((B * Sd, D), jnp.float32),
        grid_spec=grid_spec,
        compiler_params=pltpu.CompilerParams(
            dimension_semantics=("arbitrary",)),
    )(*operands)
    return out.reshape(B, Sd, D)


# ------------------------------------------------------- pure-JAX reference --
def reference(x, memory, src_mask, tgt_mask, p):
    def ln(x, a, b):
        mean = x.mean(-1, keepdims=True)
        var = jnp.sum((x - mean) ** 2, -1, keepdims=True) / (x.shape[-1] - 1)
        return a * (x - mean) / (jnp.sqrt(var) + EPS) + b

    def mha(qx, kvx, mask, W, bv):
        B, Sq, _ = qx.shape
        Sk = kvx.shape[1]
        q = (qx @ W[0] + bv[0]).reshape(B, Sq, N_HEADS, D_K).transpose(0, 2, 1, 3)
        k = (kvx @ W[1] + bv[1]).reshape(B, Sk, N_HEADS, D_K).transpose(0, 2, 1, 3)
        v = (kvx @ W[2] + bv[2]).reshape(B, Sk, N_HEADS, D_K).transpose(0, 2, 1, 3)
        scores = jnp.einsum("bhqd,bhkd->bhqk", q, k) / math.sqrt(D_K)
        scores = jnp.where(mask[:, None] == 0, NEG_INF, scores)
        att = jax.nn.softmax(scores, axis=-1)
        o = jnp.einsum("bhqk,bhkd->bhqd", att, v).transpose(0, 2, 1, 3)
        o = o.reshape(B, Sq, D_MODEL)
        return o @ W[3] + bv[3]

    la, lb = p["ln_a"], p["ln_b"]
    y = ln(x, la[0], lb[0])
    x = x + mha(y, y, tgt_mask, p["w_self"], p["b_self"])
    y = ln(x, la[1], lb[1])
    x = x + mha(y, memory, src_mask, p["w_src"], p["b_src"])
    y = ln(x, la[2], lb[2])
    h = jax.nn.relu(y @ p["w1"] + p["b1"])
    return x + h @ p["w2"] + p["b2"]


# ------------------------------------------------------------------ setup ----
def init_params(key):
    ks = jax.random.split(key, 8)
    s = 0.1
    return dict(
        w_self=s * jax.random.normal(ks[0], (4, D_MODEL, D_MODEL), jnp.float32),
        b_self=s * jax.random.normal(ks[1], (4, D_MODEL), jnp.float32),
        w_src=s * jax.random.normal(ks[2], (4, D_MODEL, D_MODEL), jnp.float32),
        b_src=s * jax.random.normal(ks[3], (4, D_MODEL), jnp.float32),
        w1=s * jax.random.normal(ks[4], (D_MODEL, D_FF), jnp.float32),
        b1=s * jax.random.normal(ks[5], (1, D_FF), jnp.float32),
        w2=s * jax.random.normal(ks[6], (D_FF, D_MODEL), jnp.float32),
        b2=s * jax.random.normal(ks[7], (1, D_MODEL), jnp.float32),
        ln_a=jnp.ones((3, D_MODEL), jnp.float32),
        ln_b=jnp.zeros((3, D_MODEL), jnp.float32),
    )


if __name__ == "__main__":
    key = jax.random.PRNGKey(0)
    kx, km, kp = jax.random.split(key, 3)

    x = jax.random.normal(kx, (BATCH, S_DEC, D_MODEL), jnp.float32)
    memory = jax.random.normal(km, (BATCH, S_ENC, D_MODEL), jnp.float32)
    src_mask = jnp.ones((BATCH, 1, S_ENC), jnp.float32)
    tgt_mask = jnp.broadcast_to(
        jnp.tril(jnp.ones((S_DEC, S_DEC), jnp.float32)), (BATCH, S_DEC, S_DEC))
    params = init_params(kp)

    out = decoder_layer(x, memory, src_mask, tgt_mask, params)
    out = jax.block_until_ready(out)

    ref = reference(x, memory, src_mask, tgt_mask, params)
    assert out.shape == (BATCH, S_DEC, D_MODEL)
    assert jnp.allclose(out, ref, atol=2e-4, rtol=2e-4), (
        float(jnp.max(jnp.abs(out - ref))))
    print("KERNEL_OK")
</pallas_src>

<mosaic_0001>
module attributes {stable_mosaic.version = 11 : i64} {
  func.func @kernel(%arg0: i32, %arg1: memref<16x32xf32, #tpu.memory_space<vmem>>, %arg2: memref<16x32xf32, #tpu.memory_space<vmem>>, %arg3: memref<16x16xf32, #tpu.memory_space<vmem>>, %arg4: memref<16x16xf32, #tpu.memory_space<vmem>>, %arg5: memref<2x4x32x32xf32, #tpu.memory_space<vmem>>, %arg6: memref<32x64xf32, #tpu.memory_space<vmem>>, %arg7: memref<64x32xf32, #tpu.memory_space<vmem>>, %arg8: memref<16x128xf32, #tpu.memory_space<vmem>>, %arg9: memref<16x32xf32, #tpu.memory_space<vmem>>) attributes {dimension_semantics = [#tpu.dimension_semantics<arbitrary>], iteration_bounds = array<i64: 1>, scalar_prefetch = 0 : i64, scratch_operands = 0 : i64, tpu.core_type = #tpu.core_type<tc>, window_params = [{pipeline_mode = #tpu.pipeline_mode<synchronous>, transform_indices = @transform_0, window_bounds = array<i64: 16, 32>}, {pipeline_mode = #tpu.pipeline_mode<synchronous>, transform_indices = @transform_1, window_bounds = array<i64: 16, 32>}, {pipeline_mode = #tpu.pipeline_mode<synchronous>, transform_indices = @transform_2, window_bounds = array<i64: 16, 16>}, {pipeline_mode = #tpu.pipeline_mode<synchronous>, transform_indices = @transform_3, window_bounds = array<i64: 16, 16>}, {pipeline_mode = #tpu.pipeline_mode<synchronous>, transform_indices = @transform_4, window_bounds = array<i64: 2, 4, 32, 32>}, {pipeline_mode = #tpu.pipeline_mode<synchronous>, transform_indices = @transform_5, window_bounds = array<i64: 32, 64>}, {pipeline_mode = #tpu.pipeline_mode<synchronous>, transform_indices = @transform_6, window_bounds = array<i64: 64, 32>}, {pipeline_mode = #tpu.pipeline_mode<synchronous>, transform_indices = @transform_7, window_bounds = array<i64: 16, 128>}, {pipeline_mode = #tpu.pipeline_mode<synchronous>, transform_indices = @transform_8, window_bounds = array<i64: 16, 32>}]} {
    %c0 = arith.constant 0 : index
    %c0_0 = arith.constant 0 : index
    %0 = vector.load %arg1[%c0, %c0_0] : memref<16x32xf32, #tpu.memory_space<vmem>>, vector<16x32xf32>
    %c0_1 = arith.constant 0 : index
    %c0_2 = arith.constant 0 : index
    %1 = vector.load %arg2[%c0_1, %c0_2] : memref<16x32xf32, #tpu.memory_space<vmem>>, vector<16x32xf32>
    %c0_3 = arith.constant 0 : index
    %c0_4 = arith.constant 0 : index
    %2 = vector.load %arg8[%c0_3, %c0_4] : memref<16x128xf32, #tpu.memory_space<vmem>>, vector<16x128xf32>
    %3 = tpu.iota {dimensions = array<i32: 1>} : vector<1x32xi32>
    %c0_i32 = arith.constant 0 : i32
    %4 = vector.broadcast %c0_i32 : i32 to vector<1x32xi32>
    %5 = arith.cmpi sge, %3, %4 : vector<1x32xi32>
    %c8_i32 = arith.constant 8 : i32
    %6 = vector.broadcast %c8_i32 : i32 to vector<1x32xi32>
    %7 = arith.cmpi slt, %3, %6 : vector<1x32xi32>
    %8 = arith.andi %5, %7 : vector<1x32xi1>
    %9 = arith.extui %8 : vector<1x32xi1> to vector<1x32xi32>
    %10 = arith.sitofp %9 : vector<1x32xi32> to vector<1x32xf32>
    %c8_i32_5 = arith.constant 8 : i32
    %11 = vector.broadcast %c8_i32_5 : i32 to vector<1x32xi32>
    %12 = arith.cmpi sge, %3, %11 : vector<1x32xi32>
    %c16_i32 = arith.constant 16 : i32
    %13 = vector.broadcast %c16_i32 : i32 to vector<1x32xi32>
    %14 = arith.cmpi slt, %3, %13 : vector<1x32xi32>
    %15 = arith.andi %12, %14 : vector<1x32xi1>
    %16 = arith.extui %15 : vector<1x32xi1> to vector<1x32xi32>
    %17 = arith.sitofp %16 : vector<1x32xi32> to vector<1x32xf32>
    %c16_i32_6 = arith.constant 16 : i32
    %18 = vector.broadcast %c16_i32_6 : i32 to vector<1x32xi32>
    %19 = arith.cmpi sge, %3, %18 : vector<1x32xi32>
    %c24_i32 = arith.constant 24 : i32
    %20 = vector.broadcast %c24_i32 : i32 to vector<1x32xi32>
    %21 = arith.cmpi slt, %3, %20 : vector<1x32xi32>
    %22 = arith.andi %19, %21 : vector<1x32xi1>
    %23 = arith.extui %22 : vector<1x32xi1> to vector<1x32xi32>
    %24 = arith.sitofp %23 : vector<1x32xi32> to vector<1x32xf32>
    %c24_i32_7 = arith.constant 24 : i32
    %25 = vector.broadcast %c24_i32_7 : i32 to vector<1x32xi32>
    %26 = arith.cmpi sge, %3, %25 : vector<1x32xi32>
    %c32_i32 = arith.constant 32 : i32
    %27 = vector.broadcast %c32_i32 : i32 to vector<1x32xi32>
    %28 = arith.cmpi slt, %3, %27 : vector<1x32xi32>
    %29 = arith.andi %26, %28 : vector<1x32xi1>
    %30 = arith.extui %29 : vector<1x32xi1> to vector<1x32xi32>
    %31 = arith.sitofp %30 : vector<1x32xi32> to vector<1x32xf32>
    %32 = vector.extract_strided_slice %2 {offsets = [10, 0], sizes = [1, 32], strides = [1, 1]} : vector<16x128xf32> to vector<1x32xf32>
    %33 = vector.extract_strided_slice %2 {offsets = [13, 0], sizes = [1, 32], strides = [1, 1]} : vector<16x128xf32> to vector<1x32xf32>
    %cst = arith.constant dense<0.000000e+00> : vector<16xf32>
    %34 = vector.multi_reduction <add>, %0, %cst [1] : vector<16x32xf32> to vector<16xf32>
    %35 = vector.shape_cast %34 : vector<16xf32> to vector<16x1xf32>
    %cst_8 = arith.constant 3.200000e+01 : f32
    %36 = vector.broadcast %cst_8 : f32 to vector<16x1xf32>
    %37 = arith.divf %35, %36 : vector<16x1xf32>
    %38 = vector.broadcast %37 : vector<16x1xf32> to vector<16x32xf32>
    %39 = arith.subf %0, %38 : vector<16x32xf32>
    %40 = arith.mulf %39, %39 : vector<16x32xf32>
    %cst_9 = arith.constant dense<0.000000e+00> : vector<16xf32>
    %41 = vector.multi_reduction <add>, %40, %cst_9 [1] : vector<16x32xf32> to vector<16xf32>
    %42 = vector.shape_cast %41 : vector<16xf32> to vector<16x1xf32>
    %cst_10 = arith.constant 3.100000e+01 : f32
    %43 = vector.broadcast %cst_10 : f32 to vector<16x1xf32>
    %44 = arith.divf %42, %43 : vector<16x1xf32>
    %45 = math.sqrt %44 : vector<16x1xf32>
    %cst_11 = arith.constant 9.99999997E-7 : f32
    %46 = vector.broadcast %cst_11 : f32 to vector<16x1xf32>
    %47 = arith.addf %45, %46 : vector<16x1xf32>
    %cst_12 = arith.constant 1.000000e+00 : f32
    %48 = vector.broadcast %cst_12 : f32 to vector<16x1xf32>
    %49 = arith.divf %48, %47 : vector<16x1xf32>
    %50 = vector.broadcast %37 : vector<16x1xf32> to vector<16x32xf32>
    %51 = arith.subf %0, %50 : vector<16x32xf32>
    %52 = vector.broadcast %32 : vector<1x32xf32> to vector<16x32xf32>
    %53 = arith.mulf %52, %51 : vector<16x32xf32>
    %54 = vector.broadcast %49 : vector<16x1xf32> to vector<16x32xf32>
    %55 = arith.mulf %53, %54 : vector<16x32xf32>
    %56 = vector.broadcast %33 : vector<1x32xf32> to vector<16x32xf32>
    %57 = arith.addf %55, %56 : vector<16x32xf32>
    %c0_13 = arith.constant 0 : index
    %c0_14 = arith.constant 0 : index
    %58 = vector.load %arg3[%c0_13, %c0_14] : memref<16x16xf32, #tpu.memory_space<vmem>>, vector<16x16xf32>
    %c0_15 = arith.constant 0 : index
    %c0_16 = arith.constant 0 : index
    %c0_17 = arith.constant 0 : index
    %c0_18 = arith.constant 0 : index
    %59 = vector.load %arg5[%c0_15, %c0_16, %c0_17, %c0_18] : memref<2x4x32x32xf32, #tpu.memory_space<vmem>>, vector<1x1x32x32xf32>
    %60 = vector.shape_cast %59 : vector<1x1x32x32xf32> to vector<32x32xf32>
    %c0_19 = arith.constant 0 : index
    %c1 = arith.constant 1 : index
    %c0_20 = arith.constant 0 : index
    %c0_21 = arith.constant 0 : index
    %61 = vector.load %arg5[%c0_19, %c1, %c0_20, %c0_21] : memref<2x4x32x32xf32, #tpu.memory_space<vmem>>, vector<1x1x32x32xf32>
    %62 = vector.shape_cast %61 : vector<1x1x32x32xf32> to vector<32x32xf32>
    %c0_22 = arith.constant 0 : index
    %c2 = arith.constant 2 : index
    %c0_23 = arith.constant 0 : index
    %c0_24 = arith.constant 0 : index
    %63 = vector.load %arg5[%c0_22, %c2, %c0_23, %c0_24] : memref<2x4x32x32xf32, #tpu.memory_space<vmem>>, vector<1x1x32x32xf32>
    %64 = vector.shape_cast %63 : vector<1x1x32x32xf32> to vector<32x32xf32>
    %c0_25 = arith.constant 0 : index
    %c3 = arith.constant 3 : index
    %c0_26 = arith.constant 0 : index
    %c0_27 = arith.constant 0 : index
    %65 = vector.load %arg5[%c0_25, %c3, %c0_26, %c0_27] : memref<2x4x32x32xf32, #tpu.memory_space<vmem>>, vector<1x1x32x32xf32>
    %66 = vector.shape_cast %65 : vector<1x1x32x32xf32> to vector<32x32xf32>
    %67 = vector.extract_strided_slice %2 {offsets = [0, 0], sizes = [1, 32], strides = [1, 1]} : vector<16x128xf32> to vector<1x32xf32>
    %68 = vector.extract_strided_slice %2 {offsets = [1, 0], sizes = [1, 32], strides = [1, 1]} : vector<16x128xf32> to vector<1x32xf32>
    %69 = vector.extract_strided_slice %2 {offsets = [2, 0], sizes = [1, 32], strides = [1, 1]} : vector<16x128xf32> to vector<1x32xf32>
    %70 = vector.extract_strided_slice %2 {offsets = [3, 0], sizes = [1, 32], strides = [1, 1]} : vector<16x128xf32> to vector<1x32xf32>
    %cst_28 = arith.constant dense<0.000000e+00> : vector<16x32xf32>
    %71 = tpu.matmul %57, %60, %cst_28 {dimension_numbers = #tpu.dot_dimension_numbers<[1], [0], [0], [1], [0, 0, 1, 1], [], []>} : vector<16x32xf32>, vector<32x32xf32>, vector<16x32xf32> -> vector<16x32xf32>
    %72 = vector.broadcast %67 : vector<1x32xf32> to vector<16x32xf32>
    %73 = arith.addf %71, %72 : vector<16x32xf32>
    %cst_29 = arith.constant dense<0.000000e+00> : vector<16x32xf32>
    %74 = tpu.matmul %57, %62, %cst_29 {dimension_numbers = #tpu.dot_dimension_numbers<[1], [0], [0], [1], [0, 0, 1, 1], [], []>} : vector<16x32xf32>, vector<32x32xf32>, vector<16x32xf32> -> vector<16x32xf32>
    %75 = vector.broadcast %68 : vector<1x32xf32> to vector<16x32xf32>
    %76 = arith.addf %74, %75 : vector<16x32xf32>
    %cst_30 = arith.constant dense<0.000000e+00> : vector<16x32xf32>
    %77 = tpu.matmul %57, %64, %cst_30 {dimension_numbers = #tpu.dot_dimension_numbers<[1], [0], [0], [1], [0, 0, 1, 1], [], []>} : vector<16x32xf32>, vector<32x32xf32>, vector<16x32xf32> -> vector<16x32xf32>
    %78 = vector.broadcast %69 : vector<1x32xf32> to vector<16x32xf32>
    %79 = arith.addf %77, %78 : vector<16x32xf32>
    %80 = vector.broadcast %10 : vector<1x32xf32> to vector<16x32xf32>
    %81 = arith.mulf %73, %80 : vector<16x32xf32>
    %cst_31 = arith.constant dense<0.000000e+00> : vector<16x16xf32>
    %82 = tpu.matmul %81, %76, %cst_31 {dimension_numbers = #tpu.dot_dimension_numbers<[1], [1], [0], [0], [0, 0, 1, 0], [], []>} : vector<16x32xf32>, vector<16x32xf32>, vector<16x16xf32> -> vector<16x16xf32>
    %cst_32 = arith.constant 0.353553385 : f32
    %83 = vector.broadcast %cst_32 : f32 to vector<16x16xf32>
    %84 = arith.mulf %82, %83 : vector<16x16xf32>
    %85 = arith.addf %84, %58 : vector<16x16xf32>
    %cst_33 = arith.constant dense<0xFF800000> : vector<16xf32>
    %86 = vector.multi_reduction <maximumf>, %85, %cst_33 [1] : vector<16x16xf32> to vector<16xf32>
    %87 = vector.shape_cast %86 : vector<16xf32> to vector<16x1xf32>
    %88 = vector.broadcast %87 : vector<16x1xf32> to vector<16x16xf32>
    %89 = arith.subf %85, %88 : vector<16x16xf32>
    %90 = math.exp %89 : vector<16x16xf32>
    %cst_34 = arith.constant dense<0.000000e+00> : vector<16xf32>
    %91 = vector.multi_reduction <add>, %90, %cst_34 [1] : vector<16x16xf32> to vector<16xf32>
    %92 = vector.shape_cast %91 : vector<16xf32> to vector<16x1xf32>
    %cst_35 = arith.constant 1.000000e+00 : f32
    %93 = vector.broadcast %cst_35 : f32 to vector<16x1xf32>
    %94 = arith.divf %93, %92 : vector<16x1xf32>
    %95 = vector.broadcast %94 : vector<16x1xf32> to vector<16x16xf32>
    %96 = arith.mulf %90, %95 : vector<16x16xf32>
    %97 = vector.broadcast %10 : vector<1x32xf32> to vector<16x32xf32>
    %98 = arith.mulf %79, %97 : vector<16x32xf32>
    %cst_36 = arith.constant dense<0.000000e+00> : vector<16x32xf32>
    %99 = tpu.matmul %96, %98, %cst_36 {dimension_numbers = #tpu.dot_dimension_numbers<[1], [0], [0], [1], [0, 0, 1, 1], [], []>} : vector<16x16xf32>, vector<16x32xf32>, vector<16x32xf32> -> vector<16x32xf32>
    %100 = vector.broadcast %17 : vector<1x32xf32> to vector<16x32xf32>
    %101 = arith.mulf %73, %100 : vector<16x32xf32>
    %cst_37 = arith.constant dense<0.000000e+00> : vector<16x16xf32>
    %102 = tpu.matmul %101, %76, %cst_37 {dimension_numbers = #tpu.dot_dimension_numbers<[1], [1], [0], [0], [0, 0, 1, 0], [], []>} : vector<16x32xf32>, vector<16x32xf32>, vector<16x16xf32> -> vector<16x16xf32>
    %cst_38 = arith.constant 0.353553385 : f32
    %103 = vector.broadcast %cst_38 : f32 to vector<16x16xf32>
    %104 = arith.mulf %102, %103 : vector<16x16xf32>
    %105 = arith.addf %104, %58 : vector<16x16xf32>
    %cst_39 = arith.constant dense<0xFF800000> : vector<16xf32>
    %106 = vector.multi_reduction <maximumf>, %105, %cst_39 [1] : vector<16x16xf32> to vector<16xf32>
    %107 = vector.shape_cast %106 : vector<16xf32> to vector<16x1xf32>
    %108 = vector.broadcast %107 : vector<16x1xf32> to vector<16x16xf32>
    %109 = arith.subf %105, %108 : vector<16x16xf32>
    %110 = math.exp %109 : vector<16x16xf32>
    %cst_40 = arith.constant dense<0.000000e+00> : vector<16xf32>
    %111 = vector.multi_reduction <add>, %110, %cst_40 [1] : vector<16x16xf32> to vector<16xf32>
    %112 = vector.shape_cast %111 : vector<16xf32> to vector<16x1xf32>
    %cst_41 = arith.constant 1.000000e+00 : f32
    %113 = vector.broadcast %cst_41 : f32 to vector<16x1xf32>
    %114 = arith.divf %113, %112 : vector<16x1xf32>
    %115 = vector.broadcast %114 : vector<16x1xf32> to vector<16x16xf32>
    %116 = arith.mulf %110, %115 : vector<16x16xf32>
    %117 = vector.broadcast %17 : vector<1x32xf32> to vector<16x32xf32>
    %118 = arith.mulf %79, %117 : vector<16x32xf32>
    %cst_42 = arith.constant dense<0.000000e+00> : vector<16x32xf32>
    %119 = tpu.matmul %116, %118, %cst_42 {dimension_numbers = #tpu.dot_dimension_numbers<[1], [0], [0], [1], [0, 0, 1, 1], [], []>} : vector<16x16xf32>, vector<16x32xf32>, vector<16x32xf32> -> vector<16x32xf32>
    %120 = arith.addf %99, %119 : vector<16x32xf32>
    %121 = vector.broadcast %24 : vector<1x32xf32> to vector<16x32xf32>
    %122 = arith.mulf %73, %121 : vector<16x32xf32>
    %cst_43 = arith.constant dense<0.000000e+00> : vector<16x16xf32>
    %123 = tpu.matmul %122, %76, %cst_43 {dimension_numbers = #tpu.dot_dimension_numbers<[1], [1], [0], [0], [0, 0, 1, 0], [], []>} : vector<16x32xf32>, vector<16x32xf32>, vector<16x16xf32> -> vector<16x16xf32>
    %cst_44 = arith.constant 0.353553385 : f32
    %124 = vector.broadcast %cst_44 : f32 to vector<16x16xf32>
    %125 = arith.mulf %123, %124 : vector<16x16xf32>
    %126 = arith.addf %125, %58 : vector<16x16xf32>
    %cst_45 = arith.constant dense<0xFF800000> : vector<16xf32>
    %127 = vector.multi_reduction <maximumf>, %126, %cst_45 [1] : vector<16x16xf32> to vector<16xf32>
    %128 = vector.shape_cast %127 : vector<16xf32> to vector<16x1xf32>
    %129 = vector.broadcast %128 : vector<16x1xf32> to vector<16x16xf32>
    %130 = arith.subf %126, %129 : vector<16x16xf32>
    %131 = math.exp %130 : vector<16x16xf32>
    %cst_46 = arith.constant dense<0.000000e+00> : vector<16xf32>
    %132 = vector.multi_reduction <add>, %131, %cst_46 [1] : vector<16x16xf32> to vector<16xf32>
    %133 = vector.shape_cast %132 : vector<16xf32> to vector<16x1xf32>
    %cst_47 = arith.constant 1.000000e+00 : f32
    %134 = vector.broadcast %cst_47 : f32 to vector<16x1xf32>
    %135 = arith.divf %134, %133 : vector<16x1xf32>
    %136 = vector.broadcast %135 : vector<16x1xf32> to vector<16x16xf32>
    %137 = arith.mulf %131, %136 : vector<16x16xf32>
    %138 = vector.broadcast %24 : vector<1x32xf32> to vector<16x32xf32>
    %139 = arith.mulf %79, %138 : vector<16x32xf32>
    %cst_48 = arith.constant dense<0.000000e+00> : vector<16x32xf32>
    %140 = tpu.matmul %137, %139, %cst_48 {dimension_numbers = #tpu.dot_dimension_numbers<[1], [0], [0], [1], [0, 0, 1, 1], [], []>} : vector<16x16xf32>, vector<16x32xf32>, vector<16x32xf32> -> vector<16x32xf32>
    %141 = arith.addf %120, %140 : vector<16x32xf32>
    %142 = vector.broadcast %31 : vector<1x32xf32> to vector<16x32xf32>
    %143 = arith.mulf %73, %142 : vector<16x32xf32>
    %cst_49 = arith.constant dense<0.000000e+00> : vector<16x16xf32>
    %144 = tpu.matmul %143, %76, %cst_49 {dimension_numbers = #tpu.dot_dimension_numbers<[1], [1], [0], [0], [0, 0, 1, 0], [], []>} : vector<16x32xf32>, vector<16x32xf32>, vector<16x16xf32> -> vector<16x16xf32>
    %cst_50 = arith.constant 0.353553385 : f32
    %145 = vector.broadcast %cst_50 : f32 to vector<16x16xf32>
    %146 = arith.mulf %144, %145 : vector<16x16xf32>
    %147 = arith.addf %146, %58 : vector<16x16xf32>
    %cst_51 = arith.constant dense<0xFF800000> : vector<16xf32>
    %148 = vector.multi_reduction <maximumf>, %147, %cst_51 [1] : vector<16x16xf32> to vector<16xf32>
    %149 = vector.shape_cast %148 : vector<16xf32> to vector<16x1xf32>
    %150 = vector.broadcast %149 : vector<16x1xf32> to vector<16x16xf32>
    %151 = arith.subf %147, %150 : vector<16x16xf32>
    %152 = math.exp %151 : vector<16x16xf32>
    %cst_52 = arith.constant dense<0.000000e+00> : vector<16xf32>
    %153 = vector.multi_reduction <add>, %152, %cst_52 [1] : vector<16x16xf32> to vector<16xf32>
    %154 = vector.shape_cast %153 : vector<16xf32> to vector<16x1xf32>
    %cst_53 = arith.constant 1.000000e+00 : f32
    %155 = vector.broadcast %cst_53 : f32 to vector<16x1xf32>
    %156 = arith.divf %155, %154 : vector<16x1xf32>
    %157 = vector.broadcast %156 : vector<16x1xf32> to vector<16x16xf32>
    %158 = arith.mulf %152, %157 : vector<16x16xf32>
    %159 = vector.broadcast %31 : vector<1x32xf32> to vector<16x32xf32>
    %160 = arith.mulf %79, %159 : vector<16x32xf32>
    %cst_54 = arith.constant dense<0.000000e+00> : vector<16x32xf32>
    %161 = tpu.matmul %158, %160, %cst_54 {dimension_numbers = #tpu.dot_dimension_numbers<[1], [0], [0], [1], [0, 0, 1, 1], [], []>} : vector<16x16xf32>, vector<16x32xf32>, vector<16x32xf32> -> vector<16x32xf32>
    %162 = arith.addf %141, %161 : vector<16x32xf32>
    %cst_55 = arith.constant dense<0.000000e+00> : vector<16x32xf32>
    %163 = tpu.matmul %162, %66, %cst_55 {dimension_numbers = #tpu.dot_dimension_numbers<[1], [0], [0], [1], [0, 0, 1, 1], [], []>} : vector<16x32xf32>, vector<32x32xf32>, vector<16x32xf32> -> vector<16x32xf32>
    %164 = vector.broadcast %70 : vector<1x32xf32> to vector<16x32xf32>
    %165 = arith.addf %163, %164 : vector<16x32xf32>
    %166 = arith.addf %0, %165 : vector<16x32xf32>
    %167 = vector.extract_strided_slice %2 {offsets = [11, 0], sizes = [1, 32], strides = [1, 1]} : vector<16x128xf32> to vector<1x32xf32>
    %168 = vector.extract_strided_slice %2 {offsets = [14, 0], sizes = [1, 32], strides = [1, 1]} : vector<16x128xf32> to vector<1x32xf32>
    %cst_56 = arith.constant dense<0.000000e+00> : vector<16xf32>
    %169 = vector.multi_reduction <add>, %166, %cst_56 [1] : vector<16x32xf32> to vector<16xf32>
    %170 = vector.shape_cast %169 : vector<16xf32> to vector<16x1xf32>
    %cst_57 = arith.constant 3.200000e+01 : f32
    %171 = vector.broadcast %cst_57 : f32 to vector<16x1xf32>
    %172 = arith.divf %170, %171 : vector<16x1xf32>
    %173 = vector.broadcast %172 : vector<16x1xf32> to vector<16x32xf32>
    %174 = arith.subf %166, %173 : vector<16x32xf32>
    %175 = arith.mulf %174, %174 : vector<16x32xf32>
    %cst_58 = arith.constant dense<0.000000e+00> : vector<16xf32>
    %176 = vector.multi_reduction <add>, %175, %cst_58 [1] : vector<16x32xf32> to vector<16xf32>
    %177 = vector.shape_cast %176 : vector<16xf32> to vector<16x1xf32>
    %cst_59 = arith.constant 3.100000e+01 : f32
    %178 = vector.broadcast %cst_59 : f32 to vector<16x1xf32>
    %179 = arith.divf %177, %178 : vector<16x1xf32>
    %180 = math.sqrt %179 : vector<16x1xf32>
    %cst_60 = arith.constant 9.99999997E-7 : f32
    %181 = vector.broadcast %cst_60 : f32 to vector<16x1xf32>
    %182 = arith.addf %180, %181 : vector<16x1xf32>
    %cst_61 = arith.constant 1.000000e+00 : f32
    %183 = vector.broadcast %cst_61 : f32 to vector<16x1xf32>
    %184 = arith.divf %183, %182 : vector<16x1xf32>
    %185 = vector.broadcast %172 : vector<16x1xf32> to vector<16x32xf32>
    %186 = arith.subf %166, %185 : vector<16x32xf32>
    %187 = vector.broadcast %167 : vector<1x32xf32> to vector<16x32xf32>
    %188 = arith.mulf %187, %186 : vector<16x32xf32>
    %189 = vector.broadcast %184 : vector<16x1xf32> to vector<16x32xf32>
    %190 = arith.mulf %188, %189 : vector<16x32xf32>
    %191 = vector.broadcast %168 : vector<1x32xf32> to vector<16x32xf32>
    %192 = arith.addf %190, %191 : vector<16x32xf32>
    %c0_62 = arith.constant 0 : index
    %c0_63 = arith.constant 0 : index
    %193 = vector.load %arg4[%c0_62, %c0_63] : memref<16x16xf32, #tpu.memory_space<vmem>>, vector<16x16xf32>
    %c1_64 = arith.constant 1 : index
    %c0_65 = arith.constant 0 : index
    %c0_66 = arith.constant 0 : index
    %c0_67 = arith.constant 0 : index
    %194 = vector.load %arg5[%c1_64, %c0_65, %c0_66, %c0_67] : memref<2x4x32x32xf32, #tpu.memory_space<vmem>>, vector<1x1x32x32xf32>
    %195 = vector.shape_cast %194 : vector<1x1x32x32xf32> to vector<32x32xf32>
    %c1_68 = arith.constant 1 : index
    %c1_69 = arith.constant 1 : index
    %c0_70 = arith.constant 0 : index
    %c0_71 = arith.constant 0 : index
    %196 = vector.load %arg5[%c1_68, %c1_69, %c0_70, %c0_71] : memref<2x4x32x32xf32, #tpu.memory_space<vmem>>, vector<1x1x32x32xf32>
    %197 = vector.shape_cast %196 : vector<1x1x32x32xf32> to vector<32x32xf32>
    %c1_72 = arith.constant 1 : index
    %c2_73 = arith.constant 2 : index
    %c0_74 = arith.constant 0 : index
    %c0_75 = arith.constant 0 : index
    %198 = vector.load %arg5[%c1_72, %c2_73, %c0_74, %c0_75] : memref<2x4x32x32xf32, #tpu.memory_space<vmem>>, vector<1x1x32x32xf32>
    %199 = vector.shape_cast %198 : vector<1x1x32x32xf32> to vector<32x32xf32>
    %c1_76 = arith.constant 1 : index
    %c3_77 = arith.constant 3 : index
    %c0_78 = arith.constant 0 : index
    %c0_79 = arith.constant 0 : index
    %200 = vector.load %arg5[%c1_76, %c3_77, %c0_78, %c0_79] : memref<2x4x32x32xf32, #tpu.memory_space<vmem>>, vector<1x1x32x32xf32>
    %201 = vector.shape_cast %200 : vector<1x1x32x32xf32> to vector<32x32xf32>
    %202 = vector.extract_strided_slice %2 {offsets = [4, 0], sizes = [1, 32], strides = [1, 1]} : vector<16x128xf32> to vector<1x32xf32>
    %203 = vector.extract_strided_slice %2 {offsets = [5, 0], sizes = [1, 32], strides = [1, 1]} : vector<16x128xf32> to vector<1x32xf32>
    %204 = vector.extract_strided_slice %2 {offsets = [6, 0], sizes = [1, 32], strides = [1, 1]} : vector<16x128xf32> to vector<1x32xf32>
    %205 = vector.extract_strided_slice %2 {offsets = [7, 0], sizes = [1, 32], strides = [1, 1]} : vector<16x128xf32> to vector<1x32xf32>
    %cst_80 = arith.constant dense<0.000000e+00> : vector<16x32xf32>
    %206 = tpu.matmul %192, %195, %cst_80 {dimension_numbers = #tpu.dot_dimension_numbers<[1], [0], [0], [1], [0, 0, 1, 1], [], []>} : vector<16x32xf32>, vector<32x32xf32>, vector<16x32xf32> -> vector<16x32xf32>
    %207 = vector.broadcast %202 : vector<1x32xf32> to vector<16x32xf32>
    %208 = arith.addf %206, %207 : vector<16x32xf32>
    %cst_81 = arith.constant dense<0.000000e+00> : vector<16x32xf32>
    %209 = tpu.matmul %1, %197, %cst_81 {dimension_numbers = #tpu.dot_dimension_numbers<[1], [0], [0], [1], [0, 0, 1, 1], [], []>} : vector<16x32xf32>, vector<32x32xf32>, vector<16x32xf32> -> vector<16x32xf32>
    %210 = vector.broadcast %203 : vector<1x32xf32> to vector<16x32xf32>
    %211 = arith.addf %209, %210 : vector<16x32xf32>
    %cst_82 = arith.constant dense<0.000000e+00> : vector<16x32xf32>
    %212 = tpu.matmul %1, %199, %cst_82 {dimension_numbers = #tpu.dot_dimension_numbers<[1], [0], [0], [1], [0, 0, 1, 1], [], []>} : vector<16x32xf32>, vector<32x32xf32>, vector<16x32xf32> -> vector<16x32xf32>
    %213 = vector.broadcast %204 : vector<1x32xf32> to vector<16x32xf32>
    %214 = arith.addf %212, %213 : vector<16x32xf32>
    %215 = vector.broadcast %10 : vector<1x32xf32> to vector<16x32xf32>
    %216 = arith.mulf %208, %215 : vector<16x32xf32>
    %cst_83 = arith.constant dense<0.000000e+00> : vector<16x16xf32>
    %217 = tpu.matmul %216, %211, %cst_83 {dimension_numbers = #tpu.dot_dimension_numbers<[1], [1], [0], [0], [0, 0, 1, 0], [], []>} : vector<16x32xf32>, vector<16x32xf32>, vector<16x16xf32> -> vector<16x16xf32>
    %cst_84 = arith.constant 0.353553385 : f32
    %218 = vector.broadcast %cst_84 : f32 to vector<16x16xf32>
    %219 = arith.mulf %217, %218 : vector<16x16xf32>
    %220 = arith.addf %219, %193 : vector<16x16xf32>
    %cst_85 = arith.constant dense<0xFF800000> : vector<16xf32>
    %221 = vector.multi_reduction <maximumf>, %220, %cst_85 [1] : vector<16x16xf32> to vector<16xf32>
    %222 = vector.shape_cast %221 : vector<16xf32> to vector<16x1xf32>
    %223 = vector.broadcast %222 : vector<16x1xf32> to vector<16x16xf32>
    %224 = arith.subf %220, %223 : vector<16x16xf32>
    %225 = math.exp %224 : vector<16x16xf32>
    %cst_86 = arith.constant dense<0.000000e+00> : vector<16xf32>
    %226 = vector.multi_reduction <add>, %225, %cst_86 [1] : vector<16x16xf32> to vector<16xf32>
    %227 = vector.shape_cast %226 : vector<16xf32> to vector<16x1xf32>
    %cst_87 = arith.constant 1.000000e+00 : f32
    %228 = vector.broadcast %cst_87 : f32 to vector<16x1xf32>
    %229 = arith.divf %228, %227 : vector<16x1xf32>
    %230 = vector.broadcast %229 : vector<16x1xf32> to vector<16x16xf32>
    %231 = arith.mulf %225, %230 : vector<16x16xf32>
    %232 = vector.broadcast %10 : vector<1x32xf32> to vector<16x32xf32>
    %233 = arith.mulf %214, %232 : vector<16x32xf32>
    %cst_88 = arith.constant dense<0.000000e+00> : vector<16x32xf32>
    %234 = tpu.matmul %231, %233, %cst_88 {dimension_numbers = #tpu.dot_dimension_numbers<[1], [0], [0], [1], [0, 0, 1, 1], [], []>} : vector<16x16xf32>, vector<16x32xf32>, vector<16x32xf32> -> vector<16x32xf32>
    %235 = vector.broadcast %17 : vector<1x32xf32> to vector<16x32xf32>
    %236 = arith.mulf %208, %235 : vector<16x32xf32>
    %cst_89 = arith.constant dense<0.000000e+00> : vector<16x16xf32>
    %237 = tpu.matmul %236, %211, %cst_89 {dimension_numbers = #tpu.dot_dimension_numbers<[1], [1], [0], [0], [0, 0, 1, 0], [], []>} : vector<16x32xf32>, vector<16x32xf32>, vector<16x16xf32> -> vector<16x16xf32>
    %cst_90 = arith.constant 0.353553385 : f32
    %238 = vector.broadcast %cst_90 : f32 to vector<16x16xf32>
    %239 = arith.mulf %237, %238 : vector<16x16xf32>
    %240 = arith.addf %239, %193 : vector<16x16xf32>
    %cst_91 = arith.constant dense<0xFF800000> : vector<16xf32>
    %241 = vector.multi_reduction <maximumf>, %240, %cst_91 [1] : vector<16x16xf32> to vector<16xf32>
    %242 = vector.shape_cast %241 : vector<16xf32> to vector<16x1xf32>
    %243 = vector.broadcast %242 : vector<16x1xf32> to vector<16x16xf32>
    %244 = arith.subf %240, %243 : vector<16x16xf32>
    %245 = math.exp %244 : vector<16x16xf32>
    %cst_92 = arith.constant dense<0.000000e+00> : vector<16xf32>
    %246 = vector.multi_reduction <add>, %245, %cst_92 [1] : vector<16x16xf32> to vector<16xf32>
    %247 = vector.shape_cast %246 : vector<16xf32> to vector<16x1xf32>
    %cst_93 = arith.constant 1.000000e+00 : f32
    %248 = vector.broadcast %cst_93 : f32 to vector<16x1xf32>
    %249 = arith.divf %248, %247 : vector<16x1xf32>
    %250 = vector.broadcast %249 : vector<16x1xf32> to vector<16x16xf32>
    %251 = arith.mulf %245, %250 : vector<16x16xf32>
    %252 = vector.broadcast %17 : vector<1x32xf32> to vector<16x32xf32>
    %253 = arith.mulf %214, %252 : vector<16x32xf32>
    %cst_94 = arith.constant dense<0.000000e+00> : vector<16x32xf32>
    %254 = tpu.matmul %251, %253, %cst_94 {dimension_numbers = #tpu.dot_dimension_numbers<[1], [0], [0], [1], [0, 0, 1, 1], [], []>} : vector<16x16xf32>, vector<16x32xf32>, vector<16x32xf32> -> vector<16x32xf32>
    %255 = arith.addf %234, %254 : vector<16x32xf32>
    %256 = vector.broadcast %24 : vector<1x32xf32> to vector<16x32xf32>
    %257 = arith.mulf %208, %256 : vector<16x32xf32>
    %cst_95 = arith.constant dense<0.000000e+00> : vector<16x16xf32>
    %258 = tpu.matmul %257, %211, %cst_95 {dimension_numbers = #tpu.dot_dimension_numbers<[1], [1], [0], [0], [0, 0, 1, 0], [], []>} : vector<16x32xf32>, vector<16x32xf32>, vector<16x16xf32> -> vector<16x16xf32>
    %cst_96 = arith.constant 0.353553385 : f32
    %259 = vector.broadcast %cst_96 : f32 to vector<16x16xf32>
    %260 = arith.mulf %258, %259 : vector<16x16xf32>
    %261 = arith.addf %260, %193 : vector<16x16xf32>
    %cst_97 = arith.constant dense<0xFF800000> : vector<16xf32>
    %262 = vector.multi_reduction <maximumf>, %261, %cst_97 [1] : vector<16x16xf32> to vector<16xf32>
    %263 = vector.shape_cast %262 : vector<16xf32> to vector<16x1xf32>
    %264 = vector.broadcast %263 : vector<16x1xf32> to vector<16x16xf32>
    %265 = arith.subf %261, %264 : vector<16x16xf32>
    %266 = math.exp %265 : vector<16x16xf32>
    %cst_98 = arith.constant dense<0.000000e+00> : vector<16xf32>
    %267 = vector.multi_reduction <add>, %266, %cst_98 [1] : vector<16x16xf32> to vector<16xf32>
    %268 = vector.shape_cast %267 : vector<16xf32> to vector<16x1xf32>
    %cst_99 = arith.constant 1.000000e+00 : f32
    %269 = vector.broadcast %cst_99 : f32 to vector<16x1xf32>
    %270 = arith.divf %269, %268 : vector<16x1xf32>
    %271 = vector.broadcast %270 : vector<16x1xf32> to vector<16x16xf32>
    %272 = arith.mulf %266, %271 : vector<16x16xf32>
    %273 = vector.broadcast %24 : vector<1x32xf32> to vector<16x32xf32>
    %274 = arith.mulf %214, %273 : vector<16x32xf32>
    %cst_100 = arith.constant dense<0.000000e+00> : vector<16x32xf32>
    %275 = tpu.matmul %272, %274, %cst_100 {dimension_numbers = #tpu.dot_dimension_numbers<[1], [0], [0], [1], [0, 0, 1, 1], [], []>} : vector<16x16xf32>, vector<16x32xf32>, vector<16x32xf32> -> vector<16x32xf32>
    %276 = arith.addf %255, %275 : vector<16x32xf32>
    %277 = vector.broadcast %31 : vector<1x32xf32> to vector<16x32xf32>
    %278 = arith.mulf %208, %277 : vector<16x32xf32>
    %cst_101 = arith.constant dense<0.000000e+00> : vector<16x16xf32>
    %279 = tpu.matmul %278, %211, %cst_101 {dimension_numbers = #tpu.dot_dimension_numbers<[1], [1], [0], [0], [0, 0, 1, 0], [], []>} : vector<16x32xf32>, vector<16x32xf32>, vector<16x16xf32> -> vector<16x16xf32>
    %cst_102 = arith.constant 0.353553385 : f32
    %280 = vector.broadcast %cst_102 : f32 to vector<16x16xf32>
    %281 = arith.mulf %279, %280 : vector<16x16xf32>
    %282 = arith.addf %281, %193 : vector<16x16xf32>
    %cst_103 = arith.constant dense<0xFF800000> : vector<16xf32>
    %283 = vector.multi_reduction <maximumf>, %282, %cst_103 [1] : vector<16x16xf32> to vector<16xf32>
    %284 = vector.shape_cast %283 : vector<16xf32> to vector<16x1xf32>
    %285 = vector.broadcast %284 : vector<16x1xf32> to vector<16x16xf32>
    %286 = arith.subf %282, %285 : vector<16x16xf32>
    %287 = math.exp %286 : vector<16x16xf32>
    %cst_104 = arith.constant dense<0.000000e+00> : vector<16xf32>
    %288 = vector.multi_reduction <add>, %287, %cst_104 [1] : vector<16x16xf32> to vector<16xf32>
    %289 = vector.shape_cast %288 : vector<16xf32> to vector<16x1xf32>
    %cst_105 = arith.constant 1.000000e+00 : f32
    %290 = vector.broadcast %cst_105 : f32 to vector<16x1xf32>
    %291 = arith.divf %290, %289 : vector<16x1xf32>
    %292 = vector.broadcast %291 : vector<16x1xf32> to vector<16x16xf32>
    %293 = arith.mulf %287, %292 : vector<16x16xf32>
    %294 = vector.broadcast %31 : vector<1x32xf32> to vector<16x32xf32>
    %295 = arith.mulf %214, %294 : vector<16x32xf32>
    %cst_106 = arith.constant dense<0.000000e+00> : vector<16x32xf32>
    %296 = tpu.matmul %293, %295, %cst_106 {dimension_numbers = #tpu.dot_dimension_numbers<[1], [0], [0], [1], [0, 0, 1, 1], [], []>} : vector<16x16xf32>, vector<16x32xf32>, vector<16x32xf32> -> vector<16x32xf32>
    %297 = arith.addf %276, %296 : vector<16x32xf32>
    %cst_107 = arith.constant dense<0.000000e+00> : vector<16x32xf32>
    %298 = tpu.matmul %297, %201, %cst_107 {dimension_numbers = #tpu.dot_dimension_numbers<[1], [0], [0], [1], [0, 0, 1, 1], [], []>} : vector<16x32xf32>, vector<32x32xf32>, vector<16x32xf32> -> vector<16x32xf32>
    %299 = vector.broadcast %205 : vector<1x32xf32> to vector<16x32xf32>
    %300 = arith.addf %298, %299 : vector<16x32xf32>
    %301 = arith.addf %166, %300 : vector<16x32xf32>
    %302 = vector.extract_strided_slice %2 {offsets = [12, 0], sizes = [1, 32], strides = [1, 1]} : vector<16x128xf32> to vector<1x32xf32>
    %303 = vector.extract_strided_slice %2 {offsets = [15, 0], sizes = [1, 32], strides = [1, 1]} : vector<16x128xf32> to vector<1x32xf32>
    %cst_108 = arith.constant dense<0.000000e+00> : vector<16xf32>
    %304 = vector.multi_reduction <add>, %301, %cst_108 [1] : vector<16x32xf32> to vector<16xf32>
    %305 = vector.shape_cast %304 : vector<16xf32> to vector<16x1xf32>
    %cst_109 = arith.constant 3.200000e+01 : f32
    %306 = vector.broadcast %cst_109 : f32 to vector<16x1xf32>
    %307 = arith.divf %305, %306 : vector<16x1xf32>
    %308 = vector.broadcast %307 : vector<16x1xf32> to vector<16x32xf32>
    %309 = arith.subf %301, %308 : vector<16x32xf32>
    %310 = arith.mulf %309, %309 : vector<16x32xf32>
    %cst_110 = arith.constant dense<0.000000e+00> : vector<16xf32>
    %311 = vector.multi_reduction <add>, %310, %cst_110 [1] : vector<16x32xf32> to vector<16xf32>
    %312 = vector.shape_cast %311 : vector<16xf32> to vector<16x1xf32>
    %cst_111 = arith.constant 3.100000e+01 : f32
    %313 = vector.broadcast %cst_111 : f32 to vector<16x1xf32>
    %314 = arith.divf %312, %313 : vector<16x1xf32>
    %315 = math.sqrt %314 : vector<16x1xf32>
    %cst_112 = arith.constant 9.99999997E-7 : f32
    %316 = vector.broadcast %cst_112 : f32 to vector<16x1xf32>
    %317 = arith.addf %315, %316 : vector<16x1xf32>
    %cst_113 = arith.constant 1.000000e+00 : f32
    %318 = vector.broadcast %cst_113 : f32 to vector<16x1xf32>
    %319 = arith.divf %318, %317 : vector<16x1xf32>
    %320 = vector.broadcast %307 : vector<16x1xf32> to vector<16x32xf32>
    %321 = arith.subf %301, %320 : vector<16x32xf32>
    %322 = vector.broadcast %302 : vector<1x32xf32> to vector<16x32xf32>
    %323 = arith.mulf %322, %321 : vector<16x32xf32>
    %324 = vector.broadcast %319 : vector<16x1xf32> to vector<16x32xf32>
    %325 = arith.mulf %323, %324 : vector<16x32xf32>
    %326 = vector.broadcast %303 : vector<1x32xf32> to vector<16x32xf32>
    %327 = arith.addf %325, %326 : vector<16x32xf32>
    %c0_114 = arith.constant 0 : index
    %c0_115 = arith.constant 0 : index
    %328 = vector.load %arg6[%c0_114, %c0_115] : memref<32x64xf32, #tpu.memory_space<vmem>>, vector<32x64xf32>
    %cst_116 = arith.constant dense<0.000000e+00> : vector<16x64xf32>
    %329 = tpu.matmul %327, %328, %cst_116 {dimension_numbers = #tpu.dot_dimension_numbers<[1], [0], [0], [1], [0, 0, 1, 1], [], []>} : vector<16x32xf32>, vector<32x64xf32>, vector<16x64xf32> -> vector<16x64xf32>
    %330 = vector.extract_strided_slice %2 {offsets = [8, 0], sizes = [1, 64], strides = [1, 1]} : vector<16x128xf32> to vector<1x64xf32>
    %331 = vector.broadcast %330 : vector<1x64xf32> to vector<16x64xf32>
    %332 = arith.addf %329, %331 : vector<16x64xf32>
    %cst_117 = arith.constant 0.000000e+00 : f32
    %333 = vector.broadcast %cst_117 : f32 to vector<16x64xf32>
    %334 = arith.maximumf %332, %333 : vector<16x64xf32>
    %c0_118 = arith.constant 0 : index
    %c0_119 = arith.constant 0 : index
    %335 = vector.load %arg7[%c0_118, %c0_119] : memref<64x32xf32, #tpu.memory_space<vmem>>, vector<64x32xf32>
    %cst_120 = arith.constant dense<0.000000e+00> : vector<16x32xf32>
    %336 = tpu.matmul %334, %335, %cst_120 {dimension_numbers = #tpu.dot_dimension_numbers<[1], [0], [0], [1], [0, 0, 1, 1], [], []>} : vector<16x64xf32>, vector<64x32xf32>, vector<16x32xf32> -> vector<16x32xf32>
    %337 = arith.addf %301, %336 : vector<16x32xf32>
    %338 = vector.extract_strided_slice %2 {offsets = [9, 0], sizes = [1, 32], strides = [1, 1]} : vector<16x128xf32> to vector<1x32xf32>
    %339 = vector.broadcast %338 : vector<1x32xf32> to vector<16x32xf32>
    %340 = arith.addf %337, %339 : vector<16x32xf32>
    %c0_121 = arith.constant 0 : index
    %c0_122 = arith.constant 0 : index
    %341 = vector.load %arg9[%c0_121, %c0_122] : memref<16x32xf32, #tpu.memory_space<vmem>>, vector<16x32xf32>
    tpu.vector_store %arg9[%c0_121, %c0_122], %340 {strides = array<i32>} : memref<16x32xf32, #tpu.memory_space<vmem>>, vector<16x32xf32>,
    return
  }
  func.func @transform_0(%arg0: i32) -> (i32, i32) {
    %c0_i32 = arith.constant 0 : i32
    %c0_i32_0 = arith.constant 0 : i32
    %c0_i32_1 = arith.constant 0 : i32
    return %c0_i32, %c0_i32_0 : i32, i32
  }
  func.func @transform_1(%arg0: i32) -> (i32, i32) {
    %c0_i32 = arith.constant 0 : i32
    %c0_i32_0 = arith.constant 0 : i32
    %c0_i32_1 = arith.constant 0 : i32
    return %c0_i32, %c0_i32_0 : i32, i32
  }
  func.func @transform_2(%arg0: i32) -> (i32, i32) {
    %c0_i32 = arith.constant 0 : i32
    %c0_i32_0 = arith.constant 0 : i32
    %c0_i32_1 = arith.constant 0 : i32
    return %c0_i32, %c0_i32_0 : i32, i32
  }
  func.func @transform_3(%arg0: i32) -> (i32, i32) {
    %c0_i32 = arith.constant 0 : i32
    %c0_i32_0 = arith.constant 0 : i32
    %c0_i32_1 = arith.constant 0 : i32
    return %c0_i32, %c0_i32_0 : i32, i32
  }
  func.func @transform_4(%arg0: i32) -> (i32, i32, i32, i32) {
    %c0_i32 = arith.constant 0 : i32
    %c0_i32_0 = arith.constant 0 : i32
    %c0_i32_1 = arith.constant 0 : i32
    %c0_i32_2 = arith.constant 0 : i32
    %c0_i32_3 = arith.constant 0 : i32
    return %c0_i32, %c0_i32_0, %c0_i32_1, %c0_i32_2 : i32, i32, i32, i32
  }
  func.func @transform_5(%arg0: i32) -> (i32, i32) {
    %c0_i32 = arith.constant 0 : i32
    %c0_i32_0 = arith.constant 0 : i32
    %c0_i32_1 = arith.constant 0 : i32
    return %c0_i32, %c0_i32_0 : i32, i32
  }
  func.func @transform_6(%arg0: i32) -> (i32, i32) {
    %c0_i32 = arith.constant 0 : i32
    %c0_i32_0 = arith.constant 0 : i32
    %c0_i32_1 = arith.constant 0 : i32
    return %c0_i32, %c0_i32_0 : i32, i32
  }
  func.func @transform_7(%arg0: i32) -> (i32, i32) {
    %c0_i32 = arith.constant 0 : i32
    %c0_i32_0 = arith.constant 0 : i32
    %c0_i32_1 = arith.constant 0 : i32
    return %c0_i32, %c0_i32_0 : i32, i32
  }
  func.func @transform_8(%arg0: i32) -> (i32, i32) {
    %c0_i32 = arith.constant 0 : i32
    %c0_i32_0 = arith.constant 0 : i32
    %c0_i32_1 = arith.constant 0 : i32
    return %c0_i32, %c0_i32_0 : i32, i32
  }
}

</mosaic_0001>

<llo_original>
// kernel: tpu_custom_call.1
$region0: #{tpu_custom_call.1}
  #allocation0 [shape = 'u32[]', space=smem, size = 0x4, offset = 0x4, fixed_abs, tag = 'smem constant byte address 0x4 - core index']
  #allocation1 [shape = 'u32[144,128]{1,0:T(1,128)}', space=vmem, size = 0x12000, scoped, tag = 'internal scratch']
  %s0 = inlined_call_operand.vmem [shape: f32[16,32], index: 0, kind: input, shape index: {}]
  %s1 = inlined_call_operand.vmem [shape: f32[16,32], index: 1, kind: input, shape index: {}]
  %s2 = inlined_call_operand.vmem [shape: f32[16,16], index: 2, kind: input, shape index: {}]
  %s3 = inlined_call_operand.vmem [shape: f32[16,16], index: 3, kind: input, shape index: {}]
  %s4 = inlined_call_operand.hbm [shape: f32[2,4,32,32], index: 4, kind: input, shape index: {}]
  %s5 = inlined_call_operand.vmem [shape: f32[32,64], index: 5, kind: input, shape index: {}]
  %s6 = inlined_call_operand.vmem [shape: f32[64,32], index: 6, kind: input, shape index: {}]
  %s7 = inlined_call_operand.hbm [shape: f32[16,128], index: 7, kind: input, shape index: {}]
  %s8 = inlined_call_operand.hbm [shape: f32[16,32], index: 8, kind: output, shape index: {}]
  %s9 = sld [smem:[#allocation0]]
  $region50: #{tpu_custom_call.1} parent=0
    _
  %s11 = ssub.s32 1, %s9
  %s12 = scalar_select 0, %s11, %s9
  $region1: #{tpu_custom_call.1} parent=0
    #allocation2 [shape = 'u8[131072]{0}', space=vmem, size = 0x20000, scoped, tag = 'input window, operand 4, single buffered']
    #allocation3 [shape = 's32[1]{0}', space=sflag, size = 0x4, scoped, tag = 'scoped memory for tpu_custom_call.1']
    #allocation4 [shape = 's32[1]{0}', space=sflag, size = 0x4, scoped, tag = 'scoped memory for tpu_custom_call.1']
    #allocation5 [shape = 'u8[8192]{0}', space=vmem, size = 0x2000, scoped, tag = 'input window, operand 7, single buffered']
    #allocation6 [shape = 's32[1]{0}', space=sflag, size = 0x4, scoped, tag = 'scoped memory for tpu_custom_call.1']
    #allocation7 [shape = 'u8[8192]{0}', space=vmem, size = 0x2000, scoped, tag = 'output window, operand 0, single buffered']
    %13 = vsyncpa [#allocation3], 0
    %14 = vsyncpa [#allocation6], 0
    %15 = vsyncpa [#allocation4], 0
    // Predicated region
    $region2: #{tpu_custom_call.1} parent=1 // pred_check
      _
    $region3: #{tpu_custom_call.1} parent=1 // pred_check_branch
      %17 = sbr.rel (0) target = $region5
    $region4: #{tpu_custom_call.1} parent=1 // pred_region
      _
    $region5: #{tpu_custom_call.1} parent=1 // pred_fallthru
      _
    // Predicated region
    $region6: #{tpu_custom_call.1} parent=1 // pred_check
      _
    $region7: #{tpu_custom_call.1} parent=1 // pred_check_branch
      %19 = sbr.rel (0) target = $region9
    $region8: #{tpu_custom_call.1} parent=1 // pred_region
      _
    $region9: #{tpu_custom_call.1} parent=1 // pred_fallthru
      _
    // Predicated region
    $region10: #{tpu_custom_call.1} parent=1 // pred_check
      _
    $region11: #{tpu_custom_call.1} parent=1 // pred_check_branch
      %21 = sbr.rel (0) target = $region13
    $region12: #{tpu_custom_call.1} parent=1 // pred_region
      _
    $region13: #{tpu_custom_call.1} parent=1 // pred_fallthru
      _
    // Predicated region
    $region14: #{tpu_custom_call.1} parent=1 // pred_check
      _
    $region15: #{tpu_custom_call.1} parent=1 // pred_check_branch
      %23 = sbr.rel (0) target = $region17
    $region16: #{tpu_custom_call.1} parent=1 // pred_region
      _
    $region17: #{tpu_custom_call.1} parent=1 // pred_fallthru
      _
    // Predicated region
    $region18: #{tpu_custom_call.1} parent=1 // pred_check
      _
    $region19: #{tpu_custom_call.1} parent=1 // pred_check_branch
      %25 = sbr.rel (0) target = $region21
    $region20: #{tpu_custom_call.1} parent=1 // pred_region
      %s27 = ssub.s32 4096, 4096
      %28 = vsyncadd [#allocation3], %s27
      %s29 = sshll.u32 [#allocation2], 4
      %s30 = int_to_ptr.vmem [resolvable:$true] %s29
      %35 = dma.hbm_to_vmem [thread:$0]  %s4, 4096, %s30, [#allocation3], 128, 128, 8
    $region21: #{tpu_custom_call.1} parent=1 // pred_fallthru
      _
    // Predicated region
    $region22: #{tpu_custom_call.1} parent=1 // pred_check
      _
    $region23: #{tpu_custom_call.1} parent=1 // pred_check_branch
      %37 = sbr.rel (0) target = $region25
    $region24: #{tpu_custom_call.1} parent=1 // pred_region
      _
    $region25: #{tpu_custom_call.1} parent=1 // pred_fallthru
      _
    // Predicated region
    $region26: #{tpu_custom_call.1} parent=1 // pred_check
      _
    $region27: #{tpu_custom_call.1} parent=1 // pred_check_branch
      %39 = sbr.rel (0) target = $region29
    $region28: #{tpu_custom_call.1} parent=1 // pred_region
      _
    $region29: #{tpu_custom_call.1} parent=1 // pred_fallthru
      _
    // Predicated region
    $region30: #{tpu_custom_call.1} parent=1 // pred_check
      _
    $region31: #{tpu_custom_call.1} parent=1 // pred_check_branch
      %41 = sbr.rel (0) target = $region33
    $region32: #{tpu_custom_call.1} parent=1 // pred_region
      %s43 = ssub.s32 256, 256
      %44 = vsyncadd [#allocation6], %s43
      %s45 = sshll.u32 [#allocation5], 4
      %s46 = int_to_ptr.vmem [resolvable:$true] %s45
      %51 = dma.hbm_to_vmem [thread:$0]  %s7, 256, %s46, [#allocation6], 128, 128, 8
    $region33: #{tpu_custom_call.1} parent=1 // pred_fallthru
      _
    // Predicated region
    $region34: #{tpu_custom_call.1} parent=1 // pred_check
      _
    $region35: #{tpu_custom_call.1} parent=1 // pred_check_branch
      %53 = sbr.rel (0) target = $region37
    $region36: #{tpu_custom_call.1} parent=1 // pred_region
      %54 = dma.done [#allocation3], 4096
    $region37: #{tpu_custom_call.1} parent=1 // pred_fallthru
      _
    // Predicated region
    $region38: #{tpu_custom_call.1} parent=1 // pred_check
      _
    $region39: #{tpu_custom_call.1} parent=1 // pred_check_branch
      %56 = sbr.rel (0) target = $region41
    $region40: #{tpu_custom_call.1} parent=1 // pred_region
      %57 = dma.done [#allocation6], 256
    $region41: #{tpu_custom_call.1} parent=1 // pred_fallthru
      _
    %v58 = vld [vmem:[%s0] sm:$0xff]
    %v59 = vld [vmem:[%s0 + $0x8] sm:$0xff]
    %v60 = vld [vmem:[%s1] sm:$0xff]
    %v61 = vld [vmem:[%s1 + $0x8] sm:$0xff]
    %v62 = vld [vmem:[#allocation5] sm:$0xff]
    %v63 = vld [vmem:[#allocation5 + $0x8] sm:$0xff]
    %v64 = vlaneseq
    %v65 = vand.u32 %v64, 127
    %vm66 = vcmp.ge.s32.totalorder %v65, 0
    %vm67 = vcmp.lt.s32.totalorder %v65, 8
    %vm68 = vmand %vm66, %vm67
    %v69 = vsel %vm68, 1, 0
    %v70 = vcvt.s32.f32 %v69
    %vm71 = vcmp.ge.s32.totalorder %v65, 8
    %vm72 = vcmp.lt.s32.totalorder %v65, 16
    %vm73 = vmand %vm71, %vm72
    %v74 = vsel %vm73, 1, 0
    %v75 = vcvt.s32.f32 %v74
    %vm76 = vcmp.ge.s32.totalorder %v65, 16
    %vm77 = vcmp.lt.s32.totalorder %v65, 24
    %vm78 = vmand %vm76, %vm77
    %v79 = vsel %vm78, 1, 0
    %v80 = vcvt.s32.f32 %v79
    %vm81 = vcmp.ge.s32.totalorder %v65, 24
    %vm82 = vcmp.lt.s32.totalorder %v65, 32
    %vm83 = vmand %vm81, %vm82
    %v84 = vsel %vm83, 1, 0
    %v85 = vcvt.s32.f32 %v84
    %vm86 = vcmask 261120
    %v87 = vsel %vm86, %v58, 0.0
    %88 = vadd.xlane.f32.xlu0 %v87
    %v89 = vpop.xlane.xlu0 %88
    %v90 = vsel %vm86, %v59, 0.0
    %91 = vadd.xlane.f32.xlu0 %v90
    %v92 = vpop.xlane.xlu0 %91
    %v93 = vrcp.pop 32.0
    %v94 = vmul.f32 %v89, %v93
    %v95 = vmul.f32 %v92, %v93
    %v96 = vsub.f32 %v58, %v94
    %v97 = vsub.f32 %v59, %v95
    %v98 = vmul.f32 %v96, %v96
    %v99 = vmul.f32 %v97, %v97
    %v100 = vsel %vm86, %v98, 0.0
    %101 = vadd.xlane.f32.xlu0 %v100
    %v102 = vpop.xlane.xlu0 %101
    %v103 = vsel %vm86, %v99, 0.0
    %104 = vadd.xlane.f32.xlu0 %v103
    %v105 = vpop.xlane.xlu0 %104
    %v106 = vrcp.pop 31.0
    %v107 = vmul.f32 %v102, %v106
    %v108 = vmul.f32 %v105, %v106
    %v109 = vrsqrt.pop %v107
    %v110 = vmul.f32 %v107, %v109
    %vm111 = vcmp.eq.f32.partialorder %v107, inf
    %v112 = vsel %vm111, %v107, %v110
    %vm113 = vcmp.eq.f32.partialorder %v107, 0.0
    %v114 = vand.u32 %v107, 2147483648
    %v115 = vsel %vm113, %v114, %v112
    %v116 = vrsqrt.pop %v108
    %v117 = vmul.f32 %v108, %v116
    %vm118 = vcmp.eq.f32.partialorder %v108, inf
    %v119 = vsel %vm118, %v108, %v117
    %vm120 = vcmp.eq.f32.partialorder %v108, 0.0
    %v121 = vand.u32 %v108, 2147483648
    %v122 = vsel %vm120, %v121, %v119
    %v123 = vadd.f32 %v115, 1e-06
    %v124 = vadd.f32 %v122, 1e-06
    %v125 = vrcp.pop %v123
    %v126 = vmul.f32 1.0, %v125
    %v127 = vrcp.pop %v124
    %v128 = vmul.f32 1.0, %v127
    %v129 = vlaneseq
    %v130 = vshrl.u32 %v129, 7
    %v131 = vsub.s32 2, %v130
    %v132 = vrot.slane %v63, %v131
    %v133 = vmul.f32 %v132, %v96
    %v134 = vmul.f32 %v132, %v97
    %v135 = vmul.f32 %v133, %v126
    %v136 = vmul.f32 %v134, %v128
    %v137 = vlaneseq
    %v138 = vshrl.u32 %v137, 7
    %v139 = vsub.s32 5, %v138
    %v140 = vrot.slane %v63, %v139
    %v141 = vadd.f32 %v135, %v140
    %v142 = vadd.f32 %v136, %v140
    %v143 = vld [vmem:[%s2] sm:$0xff]
    %v144 = vld [vmem:[%s2 + $0x8] sm:$0xff]
    %v145 = vld [vmem:[#allocation2] sm:$0xff]
    %v146 = vld [vmem:[#allocation2 + $0x8] sm:$0xff]
    %v147 = vld [vmem:[#allocation2 + $0x10] sm:$0xff]
    %v148 = vld [vmem:[#allocation2 + $0x18] sm:$0xff]
    %s149 = scalar_lea.vmem [#allocation2], 32
    %v150 = vld [vmem:[%s149] sm:$0xff]
    %v151 = vld [vmem:[%s149 + $0x8] sm:$0xff]
    %v152 = vld [vmem:[%s149 + $0x10] sm:$0xff]
    %v153 = vld [vmem:[%s149 + $0x18] sm:$0xff]
    %s154 = scalar_lea.vmem [#allocation2], 64
    %v155 = vld [vmem:[%s154] sm:$0xff]
    %v156 = vld [vmem:[%s154 + $0x8] sm:$0xff]
    %v157 = vld [vmem:[%s154 + $0x10] sm:$0xff]
    %v158 = vld [vmem:[%s154 + $0x18] sm:$0xff]
    %s159 = scalar_lea.vmem [#allocation2], 96
    %v160 = vld [vmem:[%s159] sm:$0xff]
    %v161 = vld [vmem:[%s159 + $0x8] sm:$0xff]
    %v162 = vld [vmem:[%s159 + $0x10] sm:$0xff]
    %v163 = vld [vmem:[%s159 + $0x18] sm:$0xff]
    %v164 = vlaneseq
    %v165 = vshrl.u32 %v164, 7
    %v166 = vsub.s32 0, %v165
    %v167 = vrot.slane %v62, %v166
    %v169 = vsel %vm86, %v141, 0
    %v172 = vsel %vm86, %v142, 0
    %174 = vmatprep.subr.mxu0 0.0
    %175 = vmatpush1.msra.mxu0 0.0
    %176 = vmatprep.subr.mxu0 0.0
    %177 = vmatpush1.msra.mxu0 0.0
    %178 = vmatprep.subr.mxu0 0.0
    %179 = vmatpush1.msra.mxu0 0.0
    %180 = vmatprep.subr.mxu0 0.0
    %181 = vmatpush1.msra.mxu0 0.0
    %182 = vmatprep.subr.mxu0 0.0
    %183 = vmatpush1.msra.mxu0 0.0
    %184 = vmatprep.subr.mxu0 0.0
    %185 = vmatpush1.msra.mxu0 0.0
    %186 = vmatprep.subr.mxu0 0.0
    %187 = vmatpush1.msra.mxu0 0.0
    %188 = vmatprep.subr.mxu0 0.0
    %189 = vmatpush1.msra.mxu0 0.0
    %190 = vmatprep.subr.mxu0 0.0
    %191 = vmatpush1.msra.mxu0 0.0
    %192 = vmatprep.subr.mxu0 0.0
    %193 = vmatpush1.msra.mxu0 0.0
    %194 = vmatprep.subr.mxu0 0.0
    %195 = vmatpush1.msra.mxu0 0.0
    %196 = vmatprep.subr.mxu0 0.0
    %197 = vmatpush1.msra.mxu0 0.0
    %198 = vmatprep.subr.mxu0 0.0
    %199 = vmatpush1.msra.mxu0 %v148
    %200 = vmatprep.subr.mxu0 0.0
    %201 = vmatpush1.msra.mxu0 %v147
    %202 = vmatprep.subr.mxu0 0.0
    %203 = vmatpush1.msra.mxu0 %v146
    %204 = vmatprep.subr.mxu0 0.0
    %205 = vmatpush1.msra.mxu0 %v145
    %206 = vmatprep.subr.mxu0 0.0
    %207 = vmatpush2.msra.mxu0 0.0
    %208 = vmatprep.subr.mxu0 0.0
    %209 = vmatpush2.msra.mxu0 0.0
    %210 = vmatprep.subr.mxu0 0.0
    %211 = vmatpush2.msra.mxu0 0.0
    %212 = vmatprep.subr.mxu0 0.0
    %213 = vmatpush2.msra.mxu0 0.0
    %214 = vmatprep.subr.mxu0 0.0
    %215 = vmatpush2.msra.mxu0 0.0
    %216 = vmatprep.subr.mxu0 0.0
    %217 = vmatpush2.msra.mxu0 0.0
    %218 = vmatprep.subr.mxu0 0.0
    %219 = vmatpush2.msra.mxu0 0.0
    %220 = vmatprep.subr.mxu0 0.0
    %221 = vmatpush2.msra.mxu0 0.0
    %222 = vmatprep.subr.mxu0 0.0
    %223 = vmatpush2.msra.mxu0 0.0
    %224 = vmatprep.subr.mxu0 0.0
    %225 = vmatpush2.msra.mxu0 0.0
    %226 = vmatprep.subr.mxu0 0.0
    %227 = vmatpush2.msra.mxu0 0.0
    %228 = vmatprep.subr.mxu0 0.0
    %229 = vmatpush2.msra.mxu0 0.0
    %230 = vmatprep.subr.mxu0 0.0
    %231 = vmatpush2.msra.mxu0 0.0
    %232 = vmatprep.subr.mxu0 0.0
    %233 = vmatpush2.msra.mxu0 0.0
    %234 = vmatprep.subr.mxu0 0.0
    %235 = vmatpush2.msra.mxu0 0.0
    %236 = vmatprep.subr.mxu0 0.0
    %237 = vmatpush2.msra.mxu0 0.0
    %238 = vmatprep.mubr.f32.mxu0 0.0
    %239 = vmatmul.mubr.f32.gmra.mxu0 %v169
    %v240 = vpop.f32.mrf.mxu0
    %v241 = vadd.f32 %v167, %v240
    %v242 = vpop.f32.mrf.mxu0
    %243 = vmatprep.mubr.f32.mxu0 0.0
    %244 = vmatmul.mubr.f32.gmra.mxu0 %v172
    %v245 = vpop.f32.mrf.mxu0
    %v246 = vadd.f32 %v167, %v245
    %v247 = vpop.f32.mrf.mxu0
    %248 = vdwg.mxu0
    %v249 = vlaneseq
    %v250 = vshrl.u32 %v249, 7
    %v251 = vsub.s32 1, %v250
    %v252 = vrot.slane %v62, %v251
    %253 = vmatprep.subr.mxu0 0.0
    %254 = vmatpush1.msra.mxu0 0.0
    %255 = vmatprep.subr.mxu0 0.0
    %256 = vmatpush1.msra.mxu0 0.0
    %257 = vmatprep.subr.mxu0 0.0
    %258 = vmatpush1.msra.mxu0 0.0
    %259 = vmatprep.subr.mxu0 0.0
    %260 = vmatpush1.msra.mxu0 0.0
    %261 = vmatprep.subr.mxu0 0.0
    %262 = vmatpush1.msra.mxu0 0.0
    %263 = vmatprep.subr.mxu0 0.0
    %264 = vmatpush1.msra.mxu0 0.0
    %265 = vmatprep.subr.mxu0 0.0
    %266 = vmatpush1.msra.mxu0 0.0
    %267 = vmatprep.subr.mxu0 0.0
    %268 = vmatpush1.msra.mxu0 0.0
    %269 = vmatprep.subr.mxu0 0.0
    %270 = vmatpush1.msra.mxu0 0.0
    %271 = vmatprep.subr.mxu0 0.0
    %272 = vmatpush1.msra.mxu0 0.0
    %273 = vmatprep.subr.mxu0 0.0
    %274 = vmatpush1.msra.mxu0 0.0
    %275 = vmatprep.subr.mxu0 0.0
    %276 = vmatpush1.msra.mxu0 0.0
    %277 = vmatprep.subr.mxu0 0.0
    %278 = vmatpush1.msra.mxu0 %v153
    %279 = vmatprep.subr.mxu0 0.0
    %280 = vmatpush1.msra.mxu0 %v152
    %281 = vmatprep.subr.mxu0 0.0
    %282 = vmatpush1.msra.mxu0 %v151
    %283 = vmatprep.subr.mxu0 0.0
    %284 = vmatpush1.msra.mxu0 %v150
    %285 = vmatprep.subr.mxu0 0.0
    %286 = vmatpush2.msra.mxu0 0.0
    %287 = vmatprep.subr.mxu0 0.0
    %288 = vmatpush2.msra.mxu0 0.0
    %289 = vmatprep.subr.mxu0 0.0
    %290 = vmatpush2.msra.mxu0 0.0
    %291 = vmatprep.subr.mxu0 0.0
    %292 = vmatpush2.msra.mxu0 0.0
    %293 = vmatprep.subr.mxu0 0.0
    %294 = vmatpush2.msra.mxu0 0.0
    %295 = vmatprep.subr.mxu0 0.0
    %296 = vmatpush2.msra.mxu0 0.0
    %297 = vmatprep.subr.mxu0 0.0
    %298 = vmatpush2.msra.mxu0 0.0
    %299 = vmatprep.subr.mxu0 0.0
    %300 = vmatpush2.msra.mxu0 0.0
    %301 = vmatprep.subr.mxu0 0.0
    %302 = vmatpush2.msra.mxu0 0.0
    %303 = vmatprep.subr.mxu0 0.0
    %304 = vmatpush2.msra.mxu0 0.0
    %305 = vmatprep.subr.mxu0 0.0
    %306 = vmatpush2.msra.mxu0 0.0
    %307 = vmatprep.subr.mxu0 0.0
    %308 = vmatpush2.msra.mxu0 0.0
    %309 = vmatprep.subr.mxu0 0.0
    %310 = vmatpush2.msra.mxu0 0.0
    %311 = vmatprep.subr.mxu0 0.0
    %312 = vmatpush2.msra.mxu0 0.0
    %313 = vmatprep.subr.mxu0 0.0
    %314 = vmatpush2.msra.mxu0 0.0
    %315 = vmatprep.subr.mxu0 0.0
    %316 = vmatpush2.msra.mxu0 0.0
    %317 = vmatprep.mubr.f32.mxu0 0.0
    %318 = vmatmul.mubr.f32.gmra.mxu0 %v169
    %v319 = vpop.f32.mrf.mxu0
    %v320 = vadd.f32 %v252, %v319
    %v321 = vpop.f32.mrf.mxu0
    %322 = vmatprep.mubr.f32.mxu0 0.0
    %323 = vmatmul.mubr.f32.gmra.mxu0 %v172
    %v324 = vpop.f32.mrf.mxu0
    %v325 = vadd.f32 %v252, %v324
    %v326 = vpop.f32.mrf.mxu0
    %327 = vdwg.mxu0
    %v328 = vlaneseq
    %v329 = vshrl.u32 %v328, 7
    %v330 = vsub.s32 2, %v329
    %v331 = vrot.slane %v62, %v330
    %332 = vmatprep.subr.mxu0 0.0
    %333 = vmatpush1.msra.mxu0 0.0
    %334 = vmatprep.subr.mxu0 0.0
    %335 = vmatpush1.msra.mxu0 0.0
    %336 = vmatprep.subr.mxu0 0.0
    %337 = vmatpush1.msra.mxu0 0.0
    %338 = vmatprep.subr.mxu0 0.0
    %339 = vmatpush1.msra.mxu0 0.0
    %340 = vmatprep.subr.mxu0 0.0
    %341 = vmatpush1.msra.mxu0 0.0
    %342 = vmatprep.subr.mxu0 0.0
    %343 = vmatpush1.msra.mxu0 0.0
    %344 = vmatprep.subr.mxu0 0.0
    %345 = vmatpush1.msra.mxu0 0.0
    %346 = vmatprep.subr.mxu0 0.0
    %347 = vmatpush1.msra.mxu0 0.0
    %348 = vmatprep.subr.mxu0 0.0
    %349 = vmatpush1.msra.mxu0 0.0
    %350 = vmatprep.subr.mxu0 0.0
    %351 = vmatpush1.msra.mxu0 0.0
    %352 = vmatprep.subr.mxu0 0.0
    %353 = vmatpush1.msra.mxu0 0.0
    %354 = vmatprep.subr.mxu0 0.0
    %355 = vmatpush1.msra.mxu0 0.0
    %356 = vmatprep.subr.mxu0 0.0
    %357 = vmatpush1.msra.mxu0 %v158
    %358 = vmatprep.subr.mxu0 0.0
    %359 = vmatpush1.msra.mxu0 %v157
    %360 = vmatprep.subr.mxu0 0.0
    %361 = vmatpush1.msra.mxu0 %v156
    %362 = vmatprep.subr.mxu0 0.0
    %363 = vmatpush1.msra.mxu0 %v155
    %364 = vmatprep.subr.mxu0 0.0
    %365 = vmatpush2.msra.mxu0 0.0
    %366 = vmatprep.subr.mxu0 0.0
    %367 = vmatpush2.msra.mxu0 0.0
    %368 = vmatprep.subr.mxu0 0.0
    %369 = vmatpush2.msra.mxu0 0.0
    %370 = vmatprep.subr.mxu0 0.0
    %371 = vmatpush2.msra.mxu0 0.0
    %372 = vmatprep.subr.mxu0 0.0
    %373 = vmatpush2.msra.mxu0 0.0
    %374 = vmatprep.subr.mxu0 0.0
    %375 = vmatpush2.msra.mxu0 0.0
    %376 = vmatprep.subr.mxu0 0.0
    %377 = vmatpush2.msra.mxu0 0.0
    %378 = vmatprep.subr.mxu0 0.0
    %379 = vmatpush2.msra.mxu0 0.0
    %380 = vmatprep.subr.mxu0 0.0
    %381 = vmatpush2.msra.mxu0 0.0
    %382 = vmatprep.subr.mxu0 0.0
    %383 = vmatpush2.msra.mxu0 0.0
    %384 = vmatprep.subr.mxu0 0.0
    %385 = vmatpush2.msra.mxu0 0.0
    %386 = vmatprep.subr.mxu0 0.0
    %387 = vmatpush2.msra.mxu0 0.0
    %388 = vmatprep.subr.mxu0 0.0
    %389 = vmatpush2.msra.mxu0 0.0
    %390 = vmatprep.subr.mxu0 0.0
    %391 = vmatpush2.msra.mxu0 0.0
    %392 = vmatprep.subr.mxu0 0.0
    %393 = vmatpush2.msra.mxu0 0.0
    %394 = vmatprep.subr.mxu0 0.0
    %395 = vmatpush2.msra.mxu0 0.0
    %396 = vmatprep.mubr.f32.mxu0 0.0
    %397 = vmatmul.mubr.f32.gmra.mxu0 %v169
    %v398 = vpop.f32.mrf.mxu0
    %v399 = vadd.f32 %v331, %v398
    %v400 = vpop.f32.mrf.mxu0
    %401 = vmatprep.mubr.f32.mxu0 0.0
    %402 = vmatmul.mubr.f32.gmra.mxu0 %v172
    %v403 = vpop.f32.mrf.mxu0
    %v404 = vadd.f32 %v331, %v403
    %v405 = vpop.f32.mrf.mxu0
    %406 = vdwg.mxu0
    %v407 = vmul.f32 %v241, %v70
    %v408 = vmul.f32 %v246, %v70
    %v410 = vsel %vm86, %v407, 0
    %v413 = vsel %vm86, %v408, 0
    %v416 = vsel %vm86, %v320, 0
    %v419 = vsel %vm86, %v325, 0
    %421 = vmatprep.subr.mxu0 0.0
    %422 = vmatpush1.xpose.msra.mxu0 0.0
    %423 = vmatprep.subr.mxu0 0.0
    %424 = vmatpush1.xpose.msra.mxu0 0.0
    %425 = vmatprep.subr.mxu0 0.0
    %426 = vmatpush1.xpose.msra.mxu0 0.0
    %427 = vmatprep.subr.mxu0 0.0
    %428 = vmatpush1.xpose.msra.mxu0 0.0
    %429 = vmatprep.subr.mxu0 0.0
    %430 = vmatpush1.xpose.msra.mxu0 0.0
    %431 = vmatprep.subr.mxu0 0.0
    %432 = vmatpush1.xpose.msra.mxu0 0.0
    %433 = vmatprep.subr.mxu0 0.0
    %434 = vmatpush1.xpose.msra.mxu0 0.0
    %435 = vmatprep.subr.mxu0 0.0
    %436 = vmatpush1.xpose.msra.mxu0 0.0
    %437 = vmatprep.subr.mxu0 0.0
    %438 = vmatpush1.xpose.msra.mxu0 0.0
    %439 = vmatprep.subr.mxu0 0.0
    %440 = vmatpush1.xpose.msra.mxu0 0.0
    %441 = vmatprep.subr.mxu0 0.0
    %442 = vmatpush1.xpose.msra.mxu0 0.0
    %443 = vmatprep.subr.mxu0 0.0
    %444 = vmatpush1.xpose.msra.mxu0 0.0
    %445 = vmatprep.subr.mxu0 0.0
    %446 = vmatpush1.xpose.msra.mxu0 0.0
    %447 = vmatprep.subr.mxu0 0.0
    %448 = vmatpush1.xpose.msra.mxu0 0.0
    %449 = vmatprep.subr.mxu0 0.0
    %450 = vmatpush1.xpose.msra.mxu0 %v419
    %451 = vmatprep.subr.mxu0 0.0
    %452 = vmatpush1.xpose.msra.mxu0 %v416
    %453 = vmatprep.subr.mxu0 0.0
    %454 = vmatpush2.xpose.msra.mxu0 0.0
    %455 = vmatprep.subr.mxu0 0.0
    %456 = vmatpush2.xpose.msra.mxu0 0.0
    %457 = vmatprep.subr.mxu0 0.0
    %458 = vmatpush2.xpose.msra.mxu0 0.0
    %459 = vmatprep.subr.mxu0 0.0
    %460 = vmatpush2.xpose.msra.mxu0 0.0
    %461 = vmatprep.subr.mxu0 0.0
    %462 = vmatpush2.xpose.msra.mxu0 0.0
    %463 = vmatprep.subr.mxu0 0.0
    %464 = vmatpush2.xpose.msra.mxu0 0.0
    %465 = vmatprep.subr.mxu0 0.0
    %466 = vmatpush2.xpose.msra.mxu0 0.0
    %467 = vmatprep.subr.mxu0 0.0
    %468 = vmatpush2.xpose.msra.mxu0 0.0
    %469 = vmatprep.subr.mxu0 0.0
    %470 = vmatpush2.xpose.msra.mxu0 0.0
    %471 = vmatprep.subr.mxu0 0.0
    %472 = vmatpush2.xpose.msra.mxu0 0.0
    %473 = vmatprep.subr.mxu0 0.0
    %474 = vmatpush2.xpose.msra.mxu0 0.0
    %475 = vmatprep.subr.mxu0 0.0
    %476 = vmatpush2.xpose.msra.mxu0 0.0
    %477 = vmatprep.subr.mxu0 0.0
    %478 = vmatpush2.xpose.msra.mxu0 0.0
    %479 = vmatprep.subr.mxu0 0.0
    %480 = vmatpush2.xpose.msra.mxu0 0.0
    %481 = vmatprep.subr.mxu0 0.0
    %482 = vmatpush2.xpose.msra.mxu0 0.0
    %483 = vmatprep.subr.mxu0 0.0
    %484 = vmatpush2.xpose.msra.mxu0 0.0
    %485 = vmatprep.mubr.f32.mxu0 0.0
    %486 = vmatmul.mubr.f32.gmra.mxu0 %v410
    %v487 = vpop.f32.mrf.mxu0
    %v488 = vadd.f32 0.0, %v487
    %v489 = vpop.f32.mrf.mxu0
    %490 = vmatprep.mubr.f32.mxu0 0.0
    %491 = vmatmul.mubr.f32.gmra.mxu0 %v413
    %v492 = vpop.f32.mrf.mxu0
    %v493 = vadd.f32 0.0, %v492
    %v494 = vpop.f32.mrf.mxu0
    %495 = vdwg.mxu0
    %v496 = vmul.f32 %v488, 0.35355338
    %v497 = vmul.f32 %v493, 0.35355338
    %v498 = vadd.f32 %v496, %v143
    %v499 = vadd.f32 %v497, %v144
    %vm500 = vcmask 130048
    %v501 = vsel %vm500, %v498, -inf
    %502 = vmax.xlane.f32.xlu0 %v501
    %v503 = vpop.xlane.xlu0 %502
    %v504 = vsel %vm500, %v499, -inf
    %505 = vmax.xlane.f32.xlu0 %v504
    %v506 = vpop.xlane.xlu0 %505
    %v507 = vsub.f32 %v498, %v503
    %v508 = vsub.f32 %v499, %v506
    %v509 = vmul.f32 %v507, 1.442695
    %v510 = vpow.pop %v509
    %v511 = vmul.f32 %v508, 1.442695
    %v512 = vpow.pop %v511
    %v513 = vsel %vm500, %v510, 0.0
    %514 = vadd.xlane.f32.xlu0 %v513
    %v515 = vpop.xlane.xlu0 %514
    %v516 = vsel %vm500, %v512, 0.0
    %517 = vadd.xlane.f32.xlu0 %v516
    %v518 = vpop.xlane.xlu0 %517
    %v519 = vrcp.pop %v515
    %v520 = vmul.f32 1.0, %v519
    %v521 = vrcp.pop %v518
    %v522 = vmul.f32 1.0, %v521
    %v523 = vmul.f32 %v510, %v520
    %v524 = vmul.f32 %v512, %v522
    %v525 = vmul.f32 %v399, %v70
    %v526 = vmul.f32 %v404, %v70
    %v527 = vmul.f32 %v241, %v75
    %v528 = vmul.f32 %v246, %v75
    %v530 = vsel %vm86, %v527, 0
    %v533 = vsel %vm86, %v528, 0
    %535 = vmatprep.subr.mxu0 0.0
    %536 = vmatpush1.xpose.msra.mxu0 0.0
    %537 = vmatprep.subr.mxu0 0.0
    %538 = vmatpush1.xpose.msra.mxu0 0.0
    %539 = vmatprep.subr.mxu0 0.0
    %540 = vmatpush1.xpose.msra.mxu0 0.0
    %541 = vmatprep.subr.mxu0 0.0
    %542 = vmatpush1.xpose.msra.mxu0 0.0
    %543 = vmatprep.subr.mxu0 0.0
    %544 = vmatpush1.xpose.msra.mxu0 0.0
    %545 = vmatprep.subr.mxu0 0.0
    %546 = vmatpush1.xpose.msra.mxu0 0.0
    %547 = vmatprep.subr.mxu0 0.0
    %548 = vmatpush1.xpose.msra.mxu0 0.0
    %549 = vmatprep.subr.mxu0 0.0
    %550 = vmatpush1.xpose.msra.mxu0 0.0
    %551 = vmatprep.subr.mxu0 0.0
    %552 = vmatpush1.xpose.msra.mxu0 0.0
    %553 = vmatprep.subr.mxu0 0.0
    %554 = vmatpush1.xpose.msra.mxu0 0.0
    %555 = vmatprep.subr.mxu0 0.0
    %556 = vmatpush1.xpose.msra.mxu0 0.0
    %557 = vmatprep.subr.mxu0 0.0
    %558 = vmatpush1.xpose.msra.mxu0 0.0
    %559 = vmatprep.subr.mxu0 0.0
    %560 = vmatpush1.xpose.msra.mxu0 0.0
    %561 = vmatprep.subr.mxu0 0.0
    %562 = vmatpush1.xpose.msra.mxu0 0.0
    %563 = vmatprep.subr.mxu0 0.0
    %564 = vmatpush1.xpose.msra.mxu0 %v419
    %565 = vmatprep.subr.mxu0 0.0
    %566 = vmatpush1.xpose.msra.mxu0 %v416
    %567 = vmatprep.subr.mxu0 0.0
    %568 = vmatpush2.xpose.msra.mxu0 0.0
    %569 = vmatprep.subr.mxu0 0.0
    %570 = vmatpush2.xpose.msra.mxu0 0.0
    %571 = vmatprep.subr.mxu0 0.0
    %572 = vmatpush2.xpose.msra.mxu0 0.0
    %573 = vmatprep.subr.mxu0 0.0
    %574 = vmatpush2.xpose.msra.mxu0 0.0
    %575 = vmatprep.subr.mxu0 0.0
    %576 = vmatpush2.xpose.msra.mxu0 0.0
    %577 = vmatprep.subr.mxu0 0.0
    %578 = vmatpush2.xpose.msra.mxu0 0.0
    %579 = vmatprep.subr.mxu0 0.0
    %580 = vmatpush2.xpose.msra.mxu0 0.0
    %581 = vmatprep.subr.mxu0 0.0
    %582 = vmatpush2.xpose.msra.mxu0 0.0
    %583 = vmatprep.subr.mxu0 0.0
    %584 = vmatpush2.xpose.msra.mxu0 0.0
    %585 = vmatprep.subr.mxu0 0.0
    %586 = vmatpush2.xpose.msra.mxu0 0.0
    %587 = vmatprep.subr.mxu0 0.0
    %588 = vmatpush2.xpose.msra.mxu0 0.0
    %589 = vmatprep.subr.mxu0 0.0
    %590 = vmatpush2.xpose.msra.mxu0 0.0
    %591 = vmatprep.subr.mxu0 0.0
    %592 = vmatpush2.xpose.msra.mxu0 0.0
    %593 = vmatprep.subr.mxu0 0.0
    %594 = vmatpush2.xpose.msra.mxu0 0.0
    %595 = vmatprep.subr.mxu0 0.0
    %596 = vmatpush2.xpose.msra.mxu0 0.0
    %597 = vmatprep.subr.mxu0 0.0
    %598 = vmatpush2.xpose.msra.mxu0 0.0
    %599 = vmatprep.mubr.f32.mxu0 0.0
    %600 = vmatmul.mubr.f32.gmra.mxu0 %v530
    %v601 = vpop.f32.mrf.mxu0
    %v602 = vadd.f32 0.0, %v601
    %v603 = vpop.f32.mrf.mxu0
    %604 = vmatprep.mubr.f32.mxu0 0.0
    %605 = vmatmul.mubr.f32.gmra.mxu0 %v533
    %v606 = vpop.f32.mrf.mxu0
    %v607 = vadd.f32 0.0, %v606
    %v608 = vpop.f32.mrf.mxu0
    %609 = vdwg.mxu0
    %v610 = vmul.f32 %v602, 0.35355338
    %v611 = vmul.f32 %v607, 0.35355338
    %v612 = vadd.f32 %v610, %v143
    %v613 = vadd.f32 %v611, %v144
    %v614 = vsel %vm500, %v612, -inf
    %615 = vmax.xlane.f32.xlu0 %v614
    %v616 = vpop.xlane.xlu0 %615
    %v617 = vsel %vm500, %v613, -inf
    %618 = vmax.xlane.f32.xlu0 %v617
    %v619 = vpop.xlane.xlu0 %618
    %v620 = vsub.f32 %v612, %v616
    %v621 = vsub.f32 %v613, %v619
    %v622 = vmul.f32 %v620, 1.442695
    %v623 = vpow.pop %v622
    %v624 = vmul.f32 %v621, 1.442695
    %v625 = vpow.pop %v624
    %v626 = vsel %vm500, %v623, 0.0
    %627 = vadd.xlane.f32.xlu0 %v626
    %v628 = vpop.xlane.xlu0 %627
    %v629 = vsel %vm500, %v625, 0.0
    %630 = vadd.xlane.f32.xlu0 %v629
    %v631 = vpop.xlane.xlu0 %630
    %v632 = vrcp.pop %v628
    %v633 = vmul.f32 1.0, %v632
    %v634 = vrcp.pop %v631
    %v635 = vmul.f32 1.0, %v634
    %v636 = vmul.f32 %v623, %v633
    %v637 = vmul.f32 %v625, %v635
    %v638 = vmul.f32 %v399, %v75
    %v639 = vmul.f32 %v404, %v75
    %v641 = vsel %vm500, %v636, 0
    %v644 = vsel %vm500, %v637, 0
    %646 = vmatprep.subr.mxu0 0.0
    %647 = vmatpush1.msra.mxu0 0.0
    %648 = vmatprep.subr.mxu0 0.0
    %649 = vmatpush1.msra.mxu0 0.0
    %650 = vmatprep.subr.mxu0 0.0
    %651 = vmatpush1.msra.mxu0 0.0
    %652 = vmatprep.subr.mxu0 0.0
    %653 = vmatpush1.msra.mxu0 0.0
    %654 = vmatprep.subr.mxu0 0.0
    %655 = vmatpush1.msra.mxu0 0.0
    %656 = vmatprep.subr.mxu0 0.0
    %657 = vmatpush1.msra.mxu0 0.0
    %658 = vmatprep.subr.mxu0 0.0
    %659 = vmatpush1.msra.mxu0 0.0
    %660 = vmatprep.subr.mxu0 0.0
    %661 = vmatpush1.msra.mxu0 0.0
    %662 = vmatprep.subr.mxu0 0.0
    %663 = vmatpush1.msra.mxu0 0.0
    %664 = vmatprep.subr.mxu0 0.0
    %665 = vmatpush1.msra.mxu0 0.0
    %666 = vmatprep.subr.mxu0 0.0
    %667 = vmatpush1.msra.mxu0 0.0
    %668 = vmatprep.subr.mxu0 0.0
    %669 = vmatpush1.msra.mxu0 0.0
    %670 = vmatprep.subr.mxu0 0.0
    %671 = vmatpush1.msra.mxu0 0.0
    %672 = vmatprep.subr.mxu0 0.0
    %673 = vmatpush1.msra.mxu0 0.0
    %674 = vmatprep.subr.mxu0 0.0
    %675 = vmatpush1.msra.mxu0 %v639
    %676 = vmatprep.subr.mxu0 0.0
    %677 = vmatpush1.msra.mxu0 %v638
    %678 = vmatprep.subr.mxu0 0.0
    %679 = vmatpush2.msra.mxu0 0.0
    %680 = vmatprep.subr.mxu0 0.0
    %681 = vmatpush2.msra.mxu0 0.0
    %682 = vmatprep.subr.mxu0 0.0
    %683 = vmatpush2.msra.mxu0 0.0
    %684 = vmatprep.subr.mxu0 0.0
    %685 = vmatpush2.msra.mxu0 0.0
    %686 = vmatprep.subr.mxu0 0.0
    %687 = vmatpush2.msra.mxu0 0.0
    %688 = vmatprep.subr.mxu0 0.0
    %689 = vmatpush2.msra.mxu0 0.0
    %690 = vmatprep.subr.mxu0 0.0
    %691 = vmatpush2.msra.mxu0 0.0
    %692 = vmatprep.subr.mxu0 0.0
    %693 = vmatpush2.msra.mxu0 0.0
    %694 = vmatprep.subr.mxu0 0.0
    %695 = vmatpush2.msra.mxu0 0.0
    %696 = vmatprep.subr.mxu0 0.0
    %697 = vmatpush2.msra.mxu0 0.0
    %698 = vmatprep.subr.mxu0 0.0
    %699 = vmatpush2.msra.mxu0 0.0
    %700 = vmatprep.subr.mxu0 0.0
    %701 = vmatpush2.msra.mxu0 0.0
    %702 = vmatprep.subr.mxu0 0.0
    %703 = vmatpush2.msra.mxu0 0.0
    %704 = vmatprep.subr.mxu0 0.0
    %705 = vmatpush2.msra.mxu0 0.0
    %706 = vmatprep.subr.mxu0 0.0
    %707 = vmatpush2.msra.mxu0 0.0
    %708 = vmatprep.subr.mxu0 0.0
    %709 = vmatpush2.msra.mxu0 0.0
    %710 = vmatprep.mubr.f32.mxu0 0.0
    %711 = vmatmul.mubr.f32.gmra.mxu0 %v641
    %v712 = vpop.f32.mrf.mxu0
    %v713 = vadd.f32 0.0, %v712
    %v714 = vpop.f32.mrf.mxu0
    %715 = vmatprep.mubr.f32.mxu0 0.0
    %716 = vmatmul.mubr.f32.gmra.mxu0 %v644
    %v717 = vpop.f32.mrf.mxu0
    %v718 = vadd.f32 0.0, %v717
    %v719 = vpop.f32.mrf.mxu0
    %720 = vdwg.mxu0
    %v722 = vsel %vm500, %v523, 0
    %v725 = vsel %vm500, %v524, 0
    %727 = vmatprep.subr.mxu0 0.0
    %728 = vmatpush1.msra.mxu0 0.0
    %729 = vmatprep.subr.mxu0 0.0
    %730 = vmatpush1.msra.mxu0 0.0
    %731 = vmatprep.subr.mxu0 0.0
    %732 = vmatpush1.msra.mxu0 0.0
    %733 = vmatprep.subr.mxu0 0.0
    %734 = vmatpush1.msra.mxu0 0.0
    %735 = vmatprep.subr.mxu0 0.0
    %736 = vmatpush1.msra.mxu0 0.0
    %737 = vmatprep.subr.mxu0 0.0
    %738 = vmatpush1.msra.mxu0 0.0
    %739 = vmatprep.subr.mxu0 0.0
    %740 = vmatpush1.msra.mxu0 0.0
    %741 = vmatprep.subr.mxu0 0.0
    %742 = vmatpush1.msra.mxu0 0.0
    %743 = vmatprep.subr.mxu0 0.0
    %744 = vmatpush1.msra.mxu0 0.0
    %745 = vmatprep.subr.mxu0 0.0
    %746 = vmatpush1.msra.mxu0 0.0
    %747 = vmatprep.subr.mxu0 0.0
    %748 = vmatpush1.msra.mxu0 0.0
    %749 = vmatprep.subr.mxu0 0.0
    %750 = vmatpush1.msra.mxu0 0.0
    %751 = vmatprep.subr.mxu0 0.0
    %752 = vmatpush1.msra.mxu0 0.0
    %753 = vmatprep.subr.mxu0 0.0
    %754 = vmatpush1.msra.mxu0 0.0
    %755 = vmatprep.subr.mxu0 0.0
    %756 = vmatpush1.msra.mxu0 %v526
    %757 = vmatprep.subr.mxu0 0.0
    %758 = vmatpush1.msra.mxu0 %v525
    %759 = vmatprep.subr.mxu0 0.0
    %760 = vmatpush2.msra.mxu0 0.0
    %761 = vmatprep.subr.mxu0 0.0
    %762 = vmatpush2.msra.mxu0 0.0
    %763 = vmatprep.subr.mxu0 0.0
    %764 = vmatpush2.msra.mxu0 0.0
    %765 = vmatprep.subr.mxu0 0.0
    %766 = vmatpush2.msra.mxu0 0.0
    %767 = vmatprep.subr.mxu0 0.0
    %768 = vmatpush2.msra.mxu0 0.0
    %769 = vmatprep.subr.mxu0 0.0
    %770 = vmatpush2.msra.mxu0 0.0
    %771 = vmatprep.subr.mxu0 0.0
    %772 = vmatpush2.msra.mxu0 0.0
    %773 = vmatprep.subr.mxu0 0.0
    %774 = vmatpush2.msra.mxu0 0.0
    %775 = vmatprep.subr.mxu0 0.0
    %776 = vmatpush2.msra.mxu0 0.0
    %777 = vmatprep.subr.mxu0 0.0
    %778 = vmatpush2.msra.mxu0 0.0
    %779 = vmatprep.subr.mxu0 0.0
    %780 = vmatpush2.msra.mxu0 0.0
    %781 = vmatprep.subr.mxu0 0.0
    %782 = vmatpush2.msra.mxu0 0.0
    %783 = vmatprep.subr.mxu0 0.0
    %784 = vmatpush2.msra.mxu0 0.0
    %785 = vmatprep.subr.mxu0 0.0
    %786 = vmatpush2.msra.mxu0 0.0
    %787 = vmatprep.subr.mxu0 0.0
    %788 = vmatpush2.msra.mxu0 0.0
    %789 = vmatprep.subr.mxu0 0.0
    %790 = vmatpush2.msra.mxu0 0.0
    %791 = vmatprep.mubr.f32.mxu0 0.0
    %792 = vmatmul.mubr.f32.gmra.mxu0 %v722
    %v793 = vpop.f32.mrf.mxu0
    %v794 = vadd.f32 %v713, %v793
    %v795 = vpop.f32.mrf.mxu0
    %796 = vmatprep.mubr.f32.mxu0 0.0
    %797 = vmatmul.mubr.f32.gmra.mxu0 %v725
    %v798 = vpop.f32.mrf.mxu0
    %v799 = vadd.f32 %v718, %v798
    %v800 = vpop.f32.mrf.mxu0
    %801 = vdwg.mxu0
    %v802 = vmul.f32 %v241, %v80
    %v803 = vmul.f32 %v246, %v80
    %v805 = vsel %vm86, %v802, 0
    %v808 = vsel %vm86, %v803, 0
    %810 = vmatprep.subr.mxu0 0.0
    %811 = vmatpush1.xpose.msra.mxu0 0.0
    %812 = vmatprep.subr.mxu0 0.0
    %813 = vmatpush1.xpose.msra.mxu0 0.0
    %814 = vmatprep.subr.mxu0 0.0
    %815 = vmatpush1.xpose.msra.mxu0 0.0
    %816 = vmatprep.subr.mxu0 0.0
    %817 = vmatpush1.xpose.msra.mxu0 0.0
    %818 = vmatprep.subr.mxu0 0.0
    %819 = vmatpush1.xpose.msra.mxu0 0.0
    %820 = vmatprep.subr.mxu0 0.0
    %821 = vmatpush1.xpose.msra.mxu0 0.0
    %822 = vmatprep.subr.mxu0 0.0
    %823 = vmatpush1.xpose.msra.mxu0 0.0
    %824 = vmatprep.subr.mxu0 0.0
    %825 = vmatpush1.xpose.msra.mxu0 0.0
    %826 = vmatprep.subr.mxu0 0.0
    %827 = vmatpush1.xpose.msra.mxu0 0.0
    %828 = vmatprep.subr.mxu0 0.0
    %829 = vmatpush1.xpose.msra.mxu0 0.0
    %830 = vmatprep.subr.mxu0 0.0
    %831 = vmatpush1.xpose.msra.mxu0 0.0
    %832 = vmatprep.subr.mxu0 0.0
    %833 = vmatpush1.xpose.msra.mxu0 0.0
    %834 = vmatprep.subr.mxu0 0.0
    %835 = vmatpush1.xpose.msra.mxu0 0.0
    %836 = vmatprep.subr.mxu0 0.0
    %837 = vmatpush1.xpose.msra.mxu0 0.0
    %838 = vmatprep.subr.mxu0 0.0
    %839 = vmatpush1.xpose.msra.mxu0 %v419
    %840 = vmatprep.subr.mxu0 0.0
    %841 = vmatpush1.xpose.msra.mxu0 %v416
    %842 = vmatprep.subr.mxu0 0.0
    %843 = vmatpush2.xpose.msra.mxu0 0.0
    %844 = vmatprep.subr.mxu0 0.0
    %845 = vmatpush2.xpose.msra.mxu0 0.0
    %846 = vmatprep.subr.mxu0 0.0
    %847 = vmatpush2.xpose.msra.mxu0 0.0
    %848 = vmatprep.subr.mxu0 0.0
    %849 = vmatpush2.xpose.msra.mxu0 0.0
    %850 = vmatprep.subr.mxu0 0.0
    %851 = vmatpush2.xpose.msra.mxu0 0.0
    %852 = vmatprep.subr.mxu0 0.0
    %853 = vmatpush2.xpose.msra.mxu0 0.0
    %854 = vmatprep.subr.mxu0 0.0
    %855 = vmatpush2.xpose.msra.mxu0 0.0
    %856 = vmatprep.subr.mxu0 0.0
    %857 = vmatpush2.xpose.msra.mxu0 0.0
    %858 = vmatprep.subr.mxu0 0.0
    %859 = vmatpush2.xpose.msra.mxu0 0.0
    %860 = vmatprep.subr.mxu0 0.0
    %861 = vmatpush2.xpose.msra.mxu0 0.0
    %862 = vmatprep.subr.mxu0 0.0
    %863 = vmatpush2.xpose.msra.mxu0 0.0
    %864 = vmatprep.subr.mxu0 0.0
    %865 = vmatpush2.xpose.msra.mxu0 0.0
    %866 = vmatprep.subr.mxu0 0.0
    %867 = vmatpush2.xpose.msra.mxu0 0.0
    %868 = vmatprep.subr.mxu0 0.0
    %869 = vmatpush2.xpose.msra.mxu0 0.0
    %870 = vmatprep.subr.mxu0 0.0
    %871 = vmatpush2.xpose.msra.mxu0 0.0
    %872 = vmatprep.subr.mxu0 0.0
    %873 = vmatpush2.xpose.msra.mxu0 0.0
    %874 = vmatprep.mubr.f32.mxu0 0.0
    %875 = vmatmul.mubr.f32.gmra.mxu0 %v805
    %v876 = vpop.f32.mrf.mxu0
    %v877 = vadd.f32 0.0, %v876
    %v878 = vpop.f32.mrf.mxu0
    %879 = vmatprep.mubr.f32.mxu0 0.0
    %880 = vmatmul.mubr.f32.gmra.mxu0 %v808
    %v881 = vpop.f32.mrf.mxu0
    %v882 = vadd.f32 0.0, %v881
    %v883 = vpop.f32.mrf.mxu0
    %884 = vdwg.mxu0
    %v885 = vmul.f32 %v877, 0.35355338
    %v886 = vmul.f32 %v882, 0.35355338
    %v887 = vadd.f32 %v885, %v143
    %v888 = vadd.f32 %v886, %v144
    %v889 = vsel %vm500, %v887, -inf
    %890 = vmax.xlane.f32.xlu0 %v889
    %v891 = vpop.xlane.xlu0 %890
    %v892 = vsel %vm500, %v888, -inf
    %893 = vmax.xlane.f32.xlu0 %v892
    %v894 = vpop.xlane.xlu0 %893
    %v895 = vsub.f32 %v887, %v891
    %v896 = vsub.f32 %v888, %v894
    %v897 = vmul.f32 %v895, 1.442695
    %v898 = vpow.pop %v897
    %v899 = vmul.f32 %v896, 1.442695
    %v900 = vpow.pop %v899
    %v901 = vsel %vm500, %v898, 0.0
    %902 = vadd.xlane.f32.xlu0 %v901
    %v903 = vpop.xlane.xlu0 %902
    %v904 = vsel %vm500, %v900, 0.0
    %905 = vadd.xlane.f32.xlu0 %v904
    %v906 = vpop.xlane.xlu0 %905
    %v907 = vrcp.pop %v903
    %v908 = vmul.f32 1.0, %v907
    %v909 = vrcp.pop %v906
    %v910 = vmul.f32 1.0, %v909
    %v911 = vmul.f32 %v898, %v908
    %v912 = vmul.f32 %v900, %v910
    %v913 = vmul.f32 %v399, %v80
    %v914 = vmul.f32 %v404, %v80
    %v916 = vsel %vm500, %v911, 0
    %v919 = vsel %vm500, %v912, 0
    %921 = vmatprep.subr.mxu0 0.0
    %922 = vmatpush1.msra.mxu0 0.0
    %923 = vmatprep.subr.mxu0 0.0
    %924 = vmatpush1.msra.mxu0 0.0
    %925 = vmatprep.subr.mxu0 0.0
    %926 = vmatpush1.msra.mxu0 0.0
    %927 = vmatprep.subr.mxu0 0.0
    %928 = vmatpush1.msra.mxu0 0.0
    %929 = vmatprep.subr.mxu0 0.0
    %930 = vmatpush1.msra.mxu0 0.0
    %931 = vmatprep.subr.mxu0 0.0
    %932 = vmatpush1.msra.mxu0 0.0
    %933 = vmatprep.subr.mxu0 0.0
    %934 = vmatpush1.msra.mxu0 0.0
    %935 = vmatprep.subr.mxu0 0.0
    %936 = vmatpush1.msra.mxu0 0.0
    %937 = vmatprep.subr.mxu0 0.0
    %938 = vmatpush1.msra.mxu0 0.0
    %939 = vmatprep.subr.mxu0 0.0
    %940 = vmatpush1.msra.mxu0 0.0
    %941 = vmatprep.subr.mxu0 0.0
    %942 = vmatpush1.msra.mxu0 0.0
    %943 = vmatprep.subr.mxu0 0.0
    %944 = vmatpush1.msra.mxu0 0.0
    %945 = vmatprep.subr.mxu0 0.0
    %946 = vmatpush1.msra.mxu0 0.0
    %947 = vmatprep.subr.mxu0 0.0
    %948 = vmatpush1.msra.mxu0 0.0
    %949 = vmatprep.subr.mxu0 0.0
    %950 = vmatpush1.msra.mxu0 %v914
    %951 = vmatprep.subr.mxu0 0.0
    %952 = vmatpush1.msra.mxu0 %v913
    %953 = vmatprep.subr.mxu0 0.0
    %954 = vmatpush2.msra.mxu0 0.0
    %955 = vmatprep.subr.mxu0 0.0
    %956 = vmatpush2.msra.mxu0 0.0
    %957 = vmatprep.subr.mxu0 0.0
    %958 = vmatpush2.msra.mxu0 0.0
    %959 = vmatprep.subr.mxu0 0.0
    %960 = vmatpush2.msra.mxu0 0.0
    %961 = vmatprep.subr.mxu0 0.0
    %962 = vmatpush2.msra.mxu0 0.0
    %963 = vmatprep.subr.mxu0 0.0
    %964 = vmatpush2.msra.mxu0 0.0
    %965 = vmatprep.subr.mxu0 0.0
    %966 = vmatpush2.msra.mxu0 0.0
    %967 = vmatprep.subr.mxu0 0.0
    %968 = vmatpush2.msra.mxu0 0.0
    %969 = vmatprep.subr.mxu0 0.0
    %970 = vmatpush2.msra.mxu0 0.0
    %971 = vmatprep.subr.mxu0 0.0
    %972 = vmatpush2.msra.mxu0 0.0
    %973 = vmatprep.subr.mxu0 0.0
    %974 = vmatpush2.msra.mxu0 0.0
    %975 = vmatprep.subr.mxu0 0.0
    %976 = vmatpush2.msra.mxu0 0.0
    %977 = vmatprep.subr.mxu0 0.0
    %978 = vmatpush2.msra.mxu0 0.0
    %979 = vmatprep.subr.mxu0 0.0
    %980 = vmatpush2.msra.mxu0 0.0
    %981 = vmatprep.subr.mxu0 0.0
    %982 = vmatpush2.msra.mxu0 0.0
    %983 = vmatprep.subr.mxu0 0.0
    %984 = vmatpush2.msra.mxu0 0.0
    %985 = vmatprep.mubr.f32.mxu0 0.0
    %986 = vmatmul.mubr.f32.gmra.mxu0 %v916
    %v987 = vpop.f32.mrf.mxu0
    %v988 = vadd.f32 0.0, %v987
    %v989 = vpop.f32.mrf.mxu0
    %990 = vmatprep.mubr.f32.mxu0 0.0
    %991 = vmatmul.mubr.f32.gmra.mxu0 %v919
    %v992 = vpop.f32.mrf.mxu0
    %v993 = vadd.f32 0.0, %v992
    %v994 = vpop.f32.mrf.mxu0
    %995 = vdwg.mxu0
    %v996 = vadd.f32 %v794, %v988
    %v997 = vadd.f32 %v799, %v993
    %v998 = vmul.f32 %v241, %v85
    %v999 = vmul.f32 %v246, %v85
    %v1001 = vsel %vm86, %v998, 0
    %v1004 = vsel %vm86, %v999, 0
    %1006 = vmatprep.subr.mxu0 0.0
    %1007 = vmatpush1.xpose.msra.mxu0 0.0
    %1008 = vmatprep.subr.mxu0 0.0
    %1009 = vmatpush1.xpose.msra.mxu0 0.0
    %1010 = vmatprep.subr.mxu0 0.0
    %1011 = vmatpush1.xpose.msra.mxu0 0.0
    %1012 = vmatprep.subr.mxu0 0.0
    %1013 = vmatpush1.xpose.msra.mxu0 0.0
    %1014 = vmatprep.subr.mxu0 0.0
    %1015 = vmatpush1.xpose.msra.mxu0 0.0
    %1016 = vmatprep.subr.mxu0 0.0
    %1017 = vmatpush1.xpose.msra.mxu0 0.0
    %1018 = vmatprep.subr.mxu0 0.0
    %1019 = vmatpush1.xpose.msra.mxu0 0.0
    %1020 = vmatprep.subr.mxu0 0.0
    %1021 = vmatpush1.xpose.msra.mxu0 0.0
    %1022 = vmatprep.subr.mxu0 0.0
    %1023 = vmatpush1.xpose.msra.mxu0 0.0
    %1024 = vmatprep.subr.mxu0 0.0
    %1025 = vmatpush1.xpose.msra.mxu0 0.0
    %1026 = vmatprep.subr.mxu0 0.0
    %1027 = vmatpush1.xpose.msra.mxu0 0.0
    %1028 = vmatprep.subr.mxu0 0.0
    %1029 = vmatpush1.xpose.msra.mxu0 0.0
    %1030 = vmatprep.subr.mxu0 0.0
    %1031 = vmatpush1.xpose.msra.mxu0 0.0
    %1032 = vmatprep.subr.mxu0 0.0
    %1033 = vmatpush1.xpose.msra.mxu0 0.0
    %1034 = vmatprep.subr.mxu0 0.0
    %1035 = vmatpush1.xpose.msra.mxu0 %v419
    %1036 = vmatprep.subr.mxu0 0.0
    %1037 = vmatpush1.xpose.msra.mxu0 %v416
    %1038 = vmatprep.subr.mxu0 0.0
    %1039 = vmatpush2.xpose.msra.mxu0 0.0
    %1040 = vmatprep.subr.mxu0 0.0
    %1041 = vmatpush2.xpose.msra.mxu0 0.0
    %1042 = vmatprep.subr.mxu0 0.0
    %1043 = vmatpush2.xpose.msra.mxu0 0.0
    %1044 = vmatprep.subr.mxu0 0.0
    %1045 = vmatpush2.xpose.msra.mxu0 0.0
    %1046 = vmatprep.subr.mxu0 0.0
    %1047 = vmatpush2.xpose.msra.mxu0 0.0
    %1048 = vmatprep.subr.mxu0 0.0
    %1049 = vmatpush2.xpose.msra.mxu0 0.0
    %1050 = vmatprep.subr.mxu0 0.0
    %1051 = vmatpush2.xpose.msra.mxu0 0.0
    %1052 = vmatprep.subr.mxu0 0.0
    %1053 = vmatpush2.xpose.msra.mxu0 0.0
    %1054 = vmatprep.subr.mxu0 0.0
    %1055 = vmatpush2.xpose.msra.mxu0 0.0
    %1056 = vmatprep.subr.mxu0 0.0
    %1057 = vmatpush2.xpose.msra.mxu0 0.0
    %1058 = vmatprep.subr.mxu0 0.0
    %1059 = vmatpush2.xpose.msra.mxu0 0.0
    %1060 = vmatprep.subr.mxu0 0.0
    %1061 = vmatpush2.xpose.msra.mxu0 0.0
    %1062 = vmatprep.subr.mxu0 0.0
    %1063 = vmatpush2.xpose.msra.mxu0 0.0
    %1064 = vmatprep.subr.mxu0 0.0
    %1065 = vmatpush2.xpose.msra.mxu0 0.0
    %1066 = vmatprep.subr.mxu0 0.0
    %1067 = vmatpush2.xpose.msra.mxu0 0.0
    %1068 = vmatprep.subr.mxu0 0.0
    %1069 = vmatpush2.xpose.msra.mxu0 0.0
    %1070 = vmatprep.mubr.f32.mxu0 0.0
    %1071 = vmatmul.mubr.f32.gmra.mxu0 %v1001
    %v1072 = vpop.f32.mrf.mxu0
    %v1073 = vadd.f32 0.0, %v1072
    %v1074 = vpop.f32.mrf.mxu0
    %1075 = vmatprep.mubr.f32.mxu0 0.0
    %1076 = vmatmul.mubr.f32.gmra.mxu0 %v1004
    %v1077 = vpop.f32.mrf.mxu0
    %v1078 = vadd.f32 0.0, %v1077
    %v1079 = vpop.f32.mrf.mxu0
    %1080 = vdwg.mxu0
    %v1081 = vmul.f32 %v1073, 0.35355338
    %v1082 = vmul.f32 %v1078, 0.35355338
    %v1083 = vadd.f32 %v1081, %v143
    %v1084 = vadd.f32 %v1082, %v144
    %v1085 = vsel %vm500, %v1083, -inf
    %1086 = vmax.xlane.f32.xlu0 %v1085
    %v1087 = vpop.xlane.xlu0 %1086
    %v1088 = vsel %vm500, %v1084, -inf
    %1089 = vmax.xlane.f32.xlu0 %v1088
    %v1090 = vpop.xlane.xlu0 %1089
    %v1091 = vsub.f32 %v1083, %v1087
    %v1092 = vsub.f32 %v1084, %v1090
    %v1093 = vmul.f32 %v1091, 1.442695
    %v1094 = vpow.pop %v1093
    %v1095 = vmul.f32 %v1092, 1.442695
    %v1096 = vpow.pop %v1095
    %v1097 = vsel %vm500, %v1094, 0.0
    %1098 = vadd.xlane.f32.xlu0 %v1097
    %v1099 = vpop.xlane.xlu0 %1098
    %v1100 = vsel %vm500, %v1096, 0.0
    %1101 = vadd.xlane.f32.xlu0 %v1100
    %v1102 = vpop.xlane.xlu0 %1101
    %v1103 = vrcp.pop %v1099
    %v1104 = vmul.f32 1.0, %v1103
    %v1105 = vrcp.pop %v1102
    %v1106 = vmul.f32 1.0, %v1105
    %v1107 = vmul.f32 %v1094, %v1104
    %v1108 = vmul.f32 %v1096, %v1106
    %v1109 = vmul.f32 %v399, %v85
    %v1110 = vmul.f32 %v404, %v85
    %v1112 = vsel %vm500, %v1107, 0
    %v1115 = vsel %vm500, %v1108, 0
    %1117 = vmatprep.subr.mxu0 0.0
    %1118 = vmatpush1.msra.mxu0 0.0
    %1119 = vmatprep.subr.mxu0 0.0
    %1120 = vmatpush1.msra.mxu0 0.0
    %1121 = vmatprep.subr.mxu0 0.0
    %1122 = vmatpush1.msra.mxu0 0.0
    %1123 = vmatprep.subr.mxu0 0.0
    %1124 = vmatpush1.msra.mxu0 0.0
    %1125 = vmatprep.subr.mxu0 0.0
    %1126 = vmatpush1.msra.mxu0 0.0
    %1127 = vmatprep.subr.mxu0 0.0
    %1128 = vmatpush1.msra.mxu0 0.0
    %1129 = vmatprep.subr.mxu0 0.0
    %1130 = vmatpush1.msra.mxu0 0.0
    %1131 = vmatprep.subr.mxu0 0.0
    %1132 = vmatpush1.msra.mxu0 0.0
    %1133 = vmatprep.subr.mxu0 0.0
    %1134 = vmatpush1.msra.mxu0 0.0
    %1135 = vmatprep.subr.mxu0 0.0
    %1136 = vmatpush1.msra.mxu0 0.0
    %1137 = vmatprep.subr.mxu0 0.0
    %1138 = vmatpush1.msra.mxu0 0.0
    %1139 = vmatprep.subr.mxu0 0.0
    %1140 = vmatpush1.msra.mxu0 0.0
    %1141 = vmatprep.subr.mxu0 0.0
    %1142 = vmatpush1.msra.mxu0 0.0
    %1143 = vmatprep.subr.mxu0 0.0
    %1144 = vmatpush1.msra.mxu0 0.0
    %1145 = vmatprep.subr.mxu0 0.0
    %1146 = vmatpush1.msra.mxu0 %v1110
    %1147 = vmatprep.subr.mxu0 0.0
    %1148 = vmatpush1.msra.mxu0 %v1109
    %1149 = vmatprep.subr.mxu0 0.0
    %1150 = vmatpush2.msra.mxu0 0.0
    %1151 = vmatprep.subr.mxu0 0.0
    %1152 = vmatpush2.msra.mxu0 0.0
    %1153 = vmatprep.subr.mxu0 0.0
    %1154 = vmatpush2.msra.mxu0 0.0
    %1155 = vmatprep.subr.mxu0 0.0
    %1156 = vmatpush2.msra.mxu0 0.0
    %1157 = vmatprep.subr.mxu0 0.0
    %1158 = vmatpush2.msra.mxu0 0.0
    %1159 = vmatprep.subr.mxu0 0.0
    %1160 = vmatpush2.msra.mxu0 0.0
    %1161 = vmatprep.subr.mxu0 0.0
    %1162 = vmatpush2.msra.mxu0 0.0
    %1163 = vmatprep.subr.mxu0 0.0
    %1164 = vmatpush2.msra.mxu0 0.0
    %1165 = vmatprep.subr.mxu0 0.0
    %1166 = vmatpush2.msra.mxu0 0.0
    %1167 = vmatprep.subr.mxu0 0.0
    %1168 = vmatpush2.msra.mxu0 0.0
    %1169 = vmatprep.subr.mxu0 0.0
    %1170 = vmatpush2.msra.mxu0 0.0
    %1171 = vmatprep.subr.mxu0 0.0
    %1172 = vmatpush2.msra.mxu0 0.0
    %1173 = vmatprep.subr.mxu0 0.0
    %1174 = vmatpush2.msra.mxu0 0.0
    %1175 = vmatprep.subr.mxu0 0.0
    %1176 = vmatpush2.msra.mxu0 0.0
    %1177 = vmatprep.subr.mxu0 0.0
    %1178 = vmatpush2.msra.mxu0 0.0
    %1179 = vmatprep.subr.mxu0 0.0
    %1180 = vmatpush2.msra.mxu0 0.0
    %1181 = vmatprep.mubr.f32.mxu0 0.0
    %1182 = vmatmul.mubr.f32.gmra.mxu0 %v1112
    %v1183 = vpop.f32.mrf.mxu0
    %v1184 = vadd.f32 0.0, %v1183
    %v1185 = vpop.f32.mrf.mxu0
    %1186 = vmatprep.mubr.f32.mxu0 0.0
    %1187 = vmatmul.mubr.f32.gmra.mxu0 %v1115
    %v1188 = vpop.f32.mrf.mxu0
    %v1189 = vadd.f32 0.0, %v1188
    %v1190 = vpop.f32.mrf.mxu0
    %1191 = vdwg.mxu0
    %v1192 = vadd.f32 %v996, %v1184
    %v1193 = vadd.f32 %v997, %v1189
    %v1194 = vlaneseq
    %v1195 = vshrl.u32 %v1194, 7
    %v1196 = vsub.s32 3, %v1195
    %v1197 = vrot.slane %v62, %v1196
    %v1199 = vsel %vm86, %v1192, 0
    %v1202 = vsel %vm86, %v1193, 0
    %1204 = vmatprep.subr.mxu0 0.0
    %1205 = vmatpush1.msra.mxu0 0.0
    %1206 = vmatprep.subr.mxu0 0.0
    %1207 = vmatpush1.msra.mxu0 0.0
    %1208 = vmatprep.subr.mxu0 0.0
    %1209 = vmatpush1.msra.mxu0 0.0
    %1210 = vmatprep.subr.mxu0 0.0
    %1211 = vmatpush1.msra.mxu0 0.0
    %1212 = vmatprep.subr.mxu0 0.0
    %1213 = vmatpush1.msra.mxu0 0.0
    %1214 = vmatprep.subr.mxu0 0.0
    %1215 = vmatpush1.msra.mxu0 0.0
    %1216 = vmatprep.subr.mxu0 0.0
    %1217 = vmatpush1.msra.mxu0 0.0
    %1218 = vmatprep.subr.mxu0 0.0
    %1219 = vmatpush1.msra.mxu0 0.0
    %1220 = vmatprep.subr.mxu0 0.0
    %1221 = vmatpush1.msra.mxu0 0.0
    %1222 = vmatprep.subr.mxu0 0.0
    %1223 = vmatpush1.msra.mxu0 0.0
    %1224 = vmatprep.subr.mxu0 0.0
    %1225 = vmatpush1.msra.mxu0 0.0
    %1226 = vmatprep.subr.mxu0 0.0
    %1227 = vmatpush1.msra.mxu0 0.0
    %1228 = vmatprep.subr.mxu0 0.0
    %1229 = vmatpush1.msra.mxu0 %v163
    %1230 = vmatprep.subr.mxu0 0.0
    %1231 = vmatpush1.msra.mxu0 %v162
    %1232 = vmatprep.subr.mxu0 0.0
    %1233 = vmatpush1.msra.mxu0 %v161
    %1234 = vmatprep.subr.mxu0 0.0
    %1235 = vmatpush1.msra.mxu0 %v160
    %1236 = vmatprep.subr.mxu0 0.0
    %1237 = vmatpush2.msra.mxu0 0.0
    %1238 = vmatprep.subr.mxu0 0.0
    %1239 = vmatpush2.msra.mxu0 0.0
    %1240 = vmatprep.subr.mxu0 0.0
    %1241 = vmatpush2.msra.mxu0 0.0
    %1242 = vmatprep.subr.mxu0 0.0
    %1243 = vmatpush2.msra.mxu0 0.0
    %1244 = vmatprep.subr.mxu0 0.0
    %1245 = vmatpush2.msra.mxu0 0.0
    %1246 = vmatprep.subr.mxu0 0.0
    %1247 = vmatpush2.msra.mxu0 0.0
    %1248 = vmatprep.subr.mxu0 0.0
    %1249 = vmatpush2.msra.mxu0 0.0
    %1250 = vmatprep.subr.mxu0 0.0
    %1251 = vmatpush2.msra.mxu0 0.0
    %1252 = vmatprep.subr.mxu0 0.0
    %1253 = vmatpush2.msra.mxu0 0.0
    %1254 = vmatprep.subr.mxu0 0.0
    %1255 = vmatpush2.msra.mxu0 0.0
    %1256 = vmatprep.subr.mxu0 0.0
    %1257 = vmatpush2.msra.mxu0 0.0
    %1258 = vmatprep.subr.mxu0 0.0
    %1259 = vmatpush2.msra.mxu0 0.0
    %1260 = vmatprep.subr.mxu0 0.0
    %1261 = vmatpush2.msra.mxu0 0.0
    %1262 = vmatprep.subr.mxu0 0.0
    %1263 = vmatpush2.msra.mxu0 0.0
    %1264 = vmatprep.subr.mxu0 0.0
    %1265 = vmatpush2.msra.mxu0 0.0
    %1266 = vmatprep.subr.mxu0 0.0
    %1267 = vmatpush2.msra.mxu0 0.0
    %1268 = vmatprep.mubr.f32.mxu0 0.0
    %1269 = vmatmul.mubr.f32.gmra.mxu0 %v1199
    %v1270 = vpop.f32.mrf.mxu0
    %v1271 = vadd.f32 %v1197, %v1270
    %v1272 = vpop.f32.mrf.mxu0
    %1273 = vmatprep.mubr.f32.mxu0 0.0
    %1274 = vmatmul.mubr.f32.gmra.mxu0 %v1202
    %v1275 = vpop.f32.mrf.mxu0
    %v1276 = vadd.f32 %v1197, %v1275
    %v1277 = vpop.f32.mrf.mxu0
    %1278 = vdwg.mxu0
    %v1279 = vadd.f32 %v58, %v1271
    %v1280 = vadd.f32 %v59, %v1276
    %v1281 = vsel %vm86, %v1279, 0.0
    %1282 = vadd.xlane.f32.xlu0 %v1281
    %v1283 = vpop.xlane.xlu0 %1282
    %v1284 = vsel %vm86, %v1280, 0.0
    %1285 = vadd.xlane.f32.xlu0 %v1284
    %v1286 = vpop.xlane.xlu0 %1285
    %v1287 = vmul.f32 %v1283, %v93
    %v1288 = vmul.f32 %v1286, %v93
    %v1289 = vsub.f32 %v1279, %v1287
    %v1290 = vsub.f32 %v1280, %v1288
    %v1291 = vmul.f32 %v1289, %v1289
    %v1292 = vmul.f32 %v1290, %v1290
    %v1293 = vsel %vm86, %v1291, 0.0
    %1294 = vadd.xlane.f32.xlu0 %v1293
    %v1295 = vpop.xlane.xlu0 %1294
    %v1296 = vsel %vm86, %v1292, 0.0
    %1297 = vadd.xlane.f32.xlu0 %v1296
    %v1298 = vpop.xlane.xlu0 %1297
    %v1299 = vmul.f32 %v1295, %v106
    %v1300 = vmul.f32 %v1298, %v106
    %v1301 = vrsqrt.pop %v1299
    %v1302 = vmul.f32 %v1299, %v1301
    %vm1303 = vcmp.eq.f32.partialorder %v1299, inf
    %v1304 = vsel %vm1303, %v1299, %v1302
    %vm1305 = vcmp.eq.f32.partialorder %v1299, 0.0
    %v1306 = vand.u32 %v1299, 2147483648
    %v1307 = vsel %vm1305, %v1306, %v1304
    %v1308 = vrsqrt.pop %v1300
    %v1309 = vmul.f32 %v1300, %v1308
    %vm1310 = vcmp.eq.f32.partialorder %v1300, inf
    %v1311 = vsel %vm1310, %v1300, %v1309
    %vm1312 = vcmp.eq.f32.partialorder %v1300, 0.0
    %v1313 = vand.u32 %v1300, 2147483648
    %v1314 = vsel %vm1312, %v1313, %v1311
    %v1315 = vadd.f32 %v1307, 1e-06
    %v1316 = vadd.f32 %v1314, 1e-06
    %v1317 = vrcp.pop %v1315
    %v1318 = vmul.f32 1.0, %v1317
    %v1319 = vrcp.pop %v1316
    %v1320 = vmul.f32 1.0, %v1319
    %v1321 = vlaneseq
    %v1322 = vshrl.u32 %v1321, 7
    %v1323 = vsub.s32 3, %v1322
    %v1324 = vrot.slane %v63, %v1323
    %v1325 = vmul.f32 %v1324, %v1289
    %v1326 = vmul.f32 %v1324, %v1290
    %v1327 = vmul.f32 %v1325, %v1318
    %v1328 = vmul.f32 %v1326, %v1320
    %v1329 = vlaneseq
    %v1330 = vshrl.u32 %v1329, 7
    %v1331 = vsub.s32 6, %v1330
    %v1332 = vrot.slane %v63, %v1331
    %v1333 = vadd.f32 %v1327, %v1332
    %v1334 = vadd.f32 %v1328, %v1332
    %v1335 = vld [vmem:[%s3] sm:$0xff]
    %v1336 = vld [vmem:[%s3 + $0x8] sm:$0xff]
    %s1337 = scalar_lea.vmem [#allocation2], 128
    %v1338 = vld [vmem:[%s1337] sm:$0xff]
    %v1339 = vld [vmem:[%s1337 + $0x8] sm:$0xff]
    %v1340 = vld [vmem:[%s1337 + $0x10] sm:$0xff]
    %v1341 = vld [vmem:[%s1337 + $0x18] sm:$0xff]
    %s1342 = scalar_lea.vmem [#allocation2], 160
    %v1343 = vld [vmem:[%s1342] sm:$0xff]
    %v1344 = vld [vmem:[%s1342 + $0x8] sm:$0xff]
    %v1345 = vld [vmem:[%s1342 + $0x10] sm:$0xff]
    %v1346 = vld [vmem:[%s1342 + $0x18] sm:$0xff]
    %s1347 = scalar_lea.vmem [#allocation2], 192
    %v1348 = vld [vmem:[%s1347] sm:$0xff]
    %v1349 = vld [vmem:[%s1347 + $0x8] sm:$0xff]
    %v1350 = vld [vmem:[%s1347 + $0x10] sm:$0xff]
    %v1351 = vld [vmem:[%s1347 + $0x18] sm:$0xff]
    %s1352 = scalar_lea.vmem [#allocation2], 224
    %v1353 = vld [vmem:[%s1352] sm:$0xff]
    %v1354 = vld [vmem:[%s1352 + $0x8] sm:$0xff]
    %v1355 = vld [vmem:[%s1352 + $0x10] sm:$0xff]
    %v1356 = vld [vmem:[%s1352 + $0x18] sm:$0xff]
    %v1357 = vlaneseq
    %v1358 = vshrl.u32 %v1357, 7
    %v1359 = vsub.s32 4, %v1358
    %v1360 = vrot.slane %v62, %v1359
    %v1362 = vsel %vm86, %v1333, 0
    %v1365 = vsel %vm86, %v1334, 0
    %1367 = vmatprep.subr.mxu0 0.0
    %1368 = vmatpush1.msra.mxu0 0.0
    %1369 = vmatprep.subr.mxu0 0.0
    %1370 = vmatpush1.msra.mxu0 0.0
    %1371 = vmatprep.subr.mxu0 0.0
    %1372 = vmatpush1.msra.mxu0 0.0
    %1373 = vmatprep.subr.mxu0 0.0
    %1374 = vmatpush1.msra.mxu0 0.0
    %1375 = vmatprep.subr.mxu0 0.0
    %1376 = vmatpush1.msra.mxu0 0.0
    %1377 = vmatprep.subr.mxu0 0.0
    %1378 = vmatpush1.msra.mxu0 0.0
    %1379 = vmatprep.subr.mxu0 0.0
    %1380 = vmatpush1.msra.mxu0 0.0
    %1381 = vmatprep.subr.mxu0 0.0
    %1382 = vmatpush1.msra.mxu0 0.0
    %1383 = vmatprep.subr.mxu0 0.0
    %1384 = vmatpush1.msra.mxu0 0.0
    %1385 = vmatprep.subr.mxu0 0.0
    %1386 = vmatpush1.msra.mxu0 0.0
    %1387 = vmatprep.subr.mxu0 0.0
    %1388 = vmatpush1.msra.mxu0 0.0
    %1389 = vmatprep.subr.mxu0 0.0
    %1390 = vmatpush1.msra.mxu0 0.0
    %1391 = vmatprep.subr.mxu0 0.0
    %1392 = vmatpush1.msra.mxu0 %v1341
    %1393 = vmatprep.subr.mxu0 0.0
    %1394 = vmatpush1.msra.mxu0 %v1340
    %1395 = vmatprep.subr.mxu0 0.0
    %1396 = vmatpush1.msra.mxu0 %v1339
    %1397 = vmatprep.subr.mxu0 0.0
    %1398 = vmatpush1.msra.mxu0 %v1338
    %1399 = vmatprep.subr.mxu0 0.0
    %1400 = vmatpush2.msra.mxu0 0.0
    %1401 = vmatprep.subr.mxu0 0.0
    %1402 = vmatpush2.msra.mxu0 0.0
    %1403 = vmatprep.subr.mxu0 0.0
    %1404 = vmatpush2.msra.mxu0 0.0
    %1405 = vmatprep.subr.mxu0 0.0
    %1406 = vmatpush2.msra.mxu0 0.0
    %1407 = vmatprep.subr.mxu0 0.0
    %1408 = vmatpush2.msra.mxu0 0.0
    %1409 = vmatprep.subr.mxu0 0.0
    %1410 = vmatpush2.msra.mxu0 0.0
    %1411 = vmatprep.subr.mxu0 0.0
    %1412 = vmatpush2.msra.mxu0 0.0
    %1413 = vmatprep.subr.mxu0 0.0
    %1414 = vmatpush2.msra.mxu0 0.0
    %1415 = vmatprep.subr.mxu0 0.0
    %1416 = vmatpush2.msra.mxu0 0.0
    %1417 = vmatprep.subr.mxu0 0.0
    %1418 = vmatpush2.msra.mxu0 0.0
    %1419 = vmatprep.subr.mxu0 0.0
    %1420 = vmatpush2.msra.mxu0 0.0
    %1421 = vmatprep.subr.mxu0 0.0
    %1422 = vmatpush2.msra.mxu0 0.0
    %1423 = vmatprep.subr.mxu0 0.0
    %1424 = vmatpush2.msra.mxu0 0.0
    %1425 = vmatprep.subr.mxu0 0.0
    %1426 = vmatpush2.msra.mxu0 0.0
    %1427 = vmatprep.subr.mxu0 0.0
    %1428 = vmatpush2.msra.mxu0 0.0
    %1429 = vmatprep.subr.mxu0 0.0
    %1430 = vmatpush2.msra.mxu0 0.0
    %1431 = vmatprep.mubr.f32.mxu0 0.0
    %1432 = vmatmul.mubr.f32.gmra.mxu0 %v1362
    %v1433 = vpop.f32.mrf.mxu0
    %v1434 = vadd.f32 %v1360, %v1433
    %v1435 = vpop.f32.mrf.mxu0
    %1436 = vmatprep.mubr.f32.mxu0 0.0
    %1437 = vmatmul.mubr.f32.gmra.mxu0 %v1365
    %v1438 = vpop.f32.mrf.mxu0
    %v1439 = vadd.f32 %v1360, %v1438
    %v1440 = vpop.f32.mrf.mxu0
    %1441 = vdwg.mxu0
    %v1442 = vlaneseq
    %v1443 = vshrl.u32 %v1442, 7
    %v1444 = vsub.s32 5, %v1443
    %v1445 = vrot.slane %v62, %v1444
    %v1447 = vsel %vm86, %v60, 0
    %v1450 = vsel %vm86, %v61, 0
    %1452 = vmatprep.subr.mxu0 0.0
    %1453 = vmatpush1.msra.mxu0 0.0
    %1454 = vmatprep.subr.mxu0 0.0
    %1455 = vmatpush1.msra.mxu0 0.0
    %1456 = vmatprep.subr.mxu0 0.0
    %1457 = vmatpush1.msra.mxu0 0.0
    %1458 = vmatprep.subr.mxu0 0.0
    %1459 = vmatpush1.msra.mxu0 0.0
    %1460 = vmatprep.subr.mxu0 0.0
    %1461 = vmatpush1.msra.mxu0 0.0
    %1462 = vmatprep.subr.mxu0 0.0
    %1463 = vmatpush1.msra.mxu0 0.0
    %1464 = vmatprep.subr.mxu0 0.0
    %1465 = vmatpush1.msra.mxu0 0.0
    %1466 = vmatprep.subr.mxu0 0.0
    %1467 = vmatpush1.msra.mxu0 0.0
    %1468 = vmatprep.subr.mxu0 0.0
    %1469 = vmatpush1.msra.mxu0 0.0
    %1470 = vmatprep.subr.mxu0 0.0
    %1471 = vmatpush1.msra.mxu0 0.0
    %1472 = vmatprep.subr.mxu0 0.0
    %1473 = vmatpush1.msra.mxu0 0.0
    %1474 = vmatprep.subr.mxu0 0.0
    %1475 = vmatpush1.msra.mxu0 0.0
    %1476 = vmatprep.subr.mxu0 0.0
    %1477 = vmatpush1.msra.mxu0 %v1346
    %1478 = vmatprep.subr.mxu0 0.0
    %1479 = vmatpush1.msra.mxu0 %v1345
    %1480 = vmatprep.subr.mxu0 0.0
    %1481 = vmatpush1.msra.mxu0 %v1344
    %1482 = vmatprep.subr.mxu0 0.0
    %1483 = vmatpush1.msra.mxu0 %v1343
    %1484 = vmatprep.subr.mxu0 0.0
    %1485 = vmatpush2.msra.mxu0 0.0
    %1486 = vmatprep.subr.mxu0 0.0
    %1487 = vmatpush2.msra.mxu0 0.0
    %1488 = vmatprep.subr.mxu0 0.0
    %1489 = vmatpush2.msra.mxu0 0.0
    %1490 = vmatprep.subr.mxu0 0.0
    %1491 = vmatpush2.msra.mxu0 0.0
    %1492 = vmatprep.subr.mxu0 0.0
    %1493 = vmatpush2.msra.mxu0 0.0
    %1494 = vmatprep.subr.mxu0 0.0
    %1495 = vmatpush2.msra.mxu0 0.0
    %1496 = vmatprep.subr.mxu0 0.0
    %1497 = vmatpush2.msra.mxu0 0.0
    %1498 = vmatprep.subr.mxu0 0.0
    %1499 = vmatpush2.msra.mxu0 0.0
    %1500 = vmatprep.subr.mxu0 0.0
    %1501 = vmatpush2.msra.mxu0 0.0
    %1502 = vmatprep.subr.mxu0 0.0
    %1503 = vmatpush2.msra.mxu0 0.0
    %1504 = vmatprep.subr.mxu0 0.0
    %1505 = vmatpush2.msra.mxu0 0.0
    %1506 = vmatprep.subr.mxu0 0.0
    %1507 = vmatpush2.msra.mxu0 0.0
    %1508 = vmatprep.subr.mxu0 0.0
    %1509 = vmatpush2.msra.mxu0 0.0
    %1510 = vmatprep.subr.mxu0 0.0
    %1511 = vmatpush2.msra.mxu0 0.0
    %1512 = vmatprep.subr.mxu0 0.0
    %1513 = vmatpush2.msra.mxu0 0.0
    %1514 = vmatprep.subr.mxu0 0.0
    %1515 = vmatpush2.msra.mxu0 0.0
    %1516 = vmatprep.mubr.f32.mxu0 0.0
    %1517 = vmatmul.mubr.f32.gmra.mxu0 %v1447
    %v1518 = vpop.f32.mrf.mxu0
    %v1519 = vadd.f32 %v1445, %v1518
    %v1520 = vpop.f32.mrf.mxu0
    %1521 = vmatprep.mubr.f32.mxu0 0.0
    %1522 = vmatmul.mubr.f32.gmra.mxu0 %v1450
    %v1523 = vpop.f32.mrf.mxu0
    %v1524 = vadd.f32 %v1445, %v1523
    %v1525 = vpop.f32.mrf.mxu0
    %1526 = vdwg.mxu0
    %v1527 = vlaneseq
    %v1528 = vshrl.u32 %v1527, 7
    %v1529 = vsub.s32 6, %v1528
    %v1530 = vrot.slane %v62, %v1529
    %1531 = vmatprep.subr.mxu0 0.0
    %1532 = vmatpush1.msra.mxu0 0.0
    %1533 = vmatprep.subr.mxu0 0.0
    %1534 = vmatpush1.msra.mxu0 0.0
    %1535 = vmatprep.subr.mxu0 0.0
    %1536 = vmatpush1.msra.mxu0 0.0
    %1537 = vmatprep.subr.mxu0 0.0
    %1538 = vmatpush1.msra.mxu0 0.0
    %1539 = vmatprep.subr.mxu0 0.0
    %1540 = vmatpush1.msra.mxu0 0.0
    %1541 = vmatprep.subr.mxu0 0.0
    %1542 = vmatpush1.msra.mxu0 0.0
    %1543 = vmatprep.subr.mxu0 0.0
    %1544 = vmatpush1.msra.mxu0 0.0
    %1545 = vmatprep.subr.mxu0 0.0
    %1546 = vmatpush1.msra.mxu0 0.0
    %1547 = vmatprep.subr.mxu0 0.0
    %1548 = vmatpush1.msra.mxu0 0.0
    %1549 = vmatprep.subr.mxu0 0.0
    %1550 = vmatpush1.msra.mxu0 0.0
    %1551 = vmatprep.subr.mxu0 0.0
    %1552 = vmatpush1.msra.mxu0 0.0
    %1553 = vmatprep.subr.mxu0 0.0
    %1554 = vmatpush1.msra.mxu0 0.0
    %1555 = vmatprep.subr.mxu0 0.0
    %1556 = vmatpush1.msra.mxu0 %v1351
    %1557 = vmatprep.subr.mxu0 0.0
    %1558 = vmatpush1.msra.mxu0 %v1350
    %1559 = vmatprep.subr.mxu0 0.0
    %1560 = vmatpush1.msra.mxu0 %v1349
    %1561 = vmatprep.subr.mxu0 0.0
    %1562 = vmatpush1.msra.mxu0 %v1348
    %1563 = vmatprep.subr.mxu0 0.0
    %1564 = vmatpush2.msra.mxu0 0.0
    %1565 = vmatprep.subr.mxu0 0.0
    %1566 = vmatpush2.msra.mxu0 0.0
    %1567 = vmatprep.subr.mxu0 0.0
    %1568 = vmatpush2.msra.mxu0 0.0
    %1569 = vmatprep.subr.mxu0 0.0
    %1570 = vmatpush2.msra.mxu0 0.0
    %1571 = vmatprep.subr.mxu0 0.0
    %1572 = vmatpush2.msra.mxu0 0.0
    %1573 = vmatprep.subr.mxu0 0.0
    %1574 = vmatpush2.msra.mxu0 0.0
    %1575 = vmatprep.subr.mxu0 0.0
    %1576 = vmatpush2.msra.mxu0 0.0
    %1577 = vmatprep.subr.mxu0 0.0
    %1578 = vmatpush2.msra.mxu0 0.0
    %1579 = vmatprep.subr.mxu0 0.0
    %1580 = vmatpush2.msra.mxu0 0.0
    %1581 = vmatprep.subr.mxu0 0.0
    %1582 = vmatpush2.msra.mxu0 0.0
    %1583 = vmatprep.subr.mxu0 0.0
    %1584 = vmatpush2.msra.mxu0 0.0
    %1585 = vmatprep.subr.mxu0 0.0
    %1586 = vmatpush2.msra.mxu0 0.0
    %1587 = vmatprep.subr.mxu0 0.0
    %1588 = vmatpush2.msra.mxu0 0.0
    %1589 = vmatprep.subr.mxu0 0.0
    %1590 = vmatpush2.msra.mxu0 0.0
    %1591 = vmatprep.subr.mxu0 0.0
    %1592 = vmatpush2.msra.mxu0 0.0
    %1593 = vmatprep.subr.mxu0 0.0
    %1594 = vmatpush2.msra.mxu0 0.0
    %1595 = vmatprep.mubr.f32.mxu0 0.0
    %1596 = vmatmul.mubr.f32.gmra.mxu0 %v1447
    %v1597 = vpop.f32.mrf.mxu0
    %v1598 = vadd.f32 %v1530, %v1597
    %v1599 = vpop.f32.mrf.mxu0
    %1600 = vmatprep.mubr.f32.mxu0 0.0
    %1601 = vmatmul.mubr.f32.gmra.mxu0 %v1450
    %v1602 = vpop.f32.mrf.mxu0
    %v1603 = vadd.f32 %v1530, %v1602
    %v1604 = vpop.f32.mrf.mxu0
    %1605 = vdwg.mxu0
    %v1606 = vmul.f32 %v1434, %v70
    %v1607 = vmul.f32 %v1439, %v70
    %v1609 = vsel %vm86, %v1606, 0
    %v1612 = vsel %vm86, %v1607, 0
    %v1615 = vsel %vm86, %v1519, 0
    %v1618 = vsel %vm86, %v1524, 0
    %1620 = vmatprep.subr.mxu0 0.0
    %1621 = vmatpush1.xpose.msra.mxu0 0.0
    %1622 = vmatprep.subr.mxu0 0.0
    %1623 = vmatpush1.xpose.msra.mxu0 0.0
    %1624 = vmatprep.subr.mxu0 0.0
    %1625 = vmatpush1.xpose.msra.mxu0 0.0
    %1626 = vmatprep.subr.mxu0 0.0
    %1627 = vmatpush1.xpose.msra.mxu0 0.0
    %1628 = vmatprep.subr.mxu0 0.0
    %1629 = vmatpush1.xpose.msra.mxu0 0.0
    %1630 = vmatprep.subr.mxu0 0.0
    %1631 = vmatpush1.xpose.msra.mxu0 0.0
    %1632 = vmatprep.subr.mxu0 0.0
    %1633 = vmatpush1.xpose.msra.mxu0 0.0
    %1634 = vmatprep.subr.mxu0 0.0
    %1635 = vmatpush1.xpose.msra.mxu0 0.0
    %1636 = vmatprep.subr.mxu0 0.0
    %1637 = vmatpush1.xpose.msra.mxu0 0.0
    %1638 = vmatprep.subr.mxu0 0.0
    %1639 = vmatpush1.xpose.msra.mxu0 0.0
    %1640 = vmatprep.subr.mxu0 0.0
    %1641 = vmatpush1.xpose.msra.mxu0 0.0
    %1642 = vmatprep.subr.mxu0 0.0
    %1643 = vmatpush1.xpose.msra.mxu0 0.0
    %1644 = vmatprep.subr.mxu0 0.0
    %1645 = vmatpush1.xpose.msra.mxu0 0.0
    %1646 = vmatprep.subr.mxu0 0.0
    %1647 = vmatpush1.xpose.msra.mxu0 0.0
    %1648 = vmatprep.subr.mxu0 0.0
    %1649 = vmatpush1.xpose.msra.mxu0 %v1618
    %1650 = vmatprep.subr.mxu0 0.0
    %1651 = vmatpush1.xpose.msra.mxu0 %v1615
    %1652 = vmatprep.subr.mxu0 0.0
    %1653 = vmatpush2.xpose.msra.mxu0 0.0
    %1654 = vmatprep.subr.mxu0 0.0
    %1655 = vmatpush2.xpose.msra.mxu0 0.0
    %1656 = vmatprep.subr.mxu0 0.0
    %1657 = vmatpush2.xpose.msra.mxu0 0.0
    %1658 = vmatprep.subr.mxu0 0.0
    %1659 = vmatpush2.xpose.msra.mxu0 0.0
    %1660 = vmatprep.subr.mxu0 0.0
    %1661 = vmatpush2.xpose.msra.mxu0 0.0
    %1662 = vmatprep.subr.mxu0 0.0
    %1663 = vmatpush2.xpose.msra.mxu0 0.0
    %1664 = vmatprep.subr.mxu0 0.0
    %1665 = vmatpush2.xpose.msra.mxu0 0.0
    %1666 = vmatprep.subr.mxu0 0.0
    %1667 = vmatpush2.xpose.msra.mxu0 0.0
    %1668 = vmatprep.subr.mxu0 0.0
    %1669 = vmatpush2.xpose.msra.mxu0 0.0
    %1670 = vmatprep.subr.mxu0 0.0
    %1671 = vmatpush2.xpose.msra.mxu0 0.0
    %1672 = vmatprep.subr.mxu0 0.0
    %1673 = vmatpush2.xpose.msra.mxu0 0.0
    %1674 = vmatprep.subr.mxu0 0.0
    %1675 = vmatpush2.xpose.msra.mxu0 0.0
    %1676 = vmatprep.subr.mxu0 0.0
    %1677 = vmatpush2.xpose.msra.mxu0 0.0
    %1678 = vmatprep.subr.mxu0 0.0
    %1679 = vmatpush2.xpose.msra.mxu0 0.0
    %1680 = vmatprep.subr.mxu0 0.0
    %1681 = vmatpush2.xpose.msra.mxu0 0.0
    %1682 = vmatprep.subr.mxu0 0.0
    %1683 = vmatpush2.xpose.msra.mxu0 0.0
    %1684 = vmatprep.mubr.f32.mxu0 0.0
    %1685 = vmatmul.mubr.f32.gmra.mxu0 %v1609
    %v1686 = vpop.f32.mrf.mxu0
    %v1687 = vadd.f32 0.0, %v1686
    %v1688 = vpop.f32.mrf.mxu0
    %1689 = vmatprep.mubr.f32.mxu0 0.0
    %1690 = vmatmul.mubr.f32.gmra.mxu0 %v1612
    %v1691 = vpop.f32.mrf.mxu0
    %v1692 = vadd.f32 0.0, %v1691
    %v1693 = vpop.f32.mrf.mxu0
    %1694 = vdwg.mxu0
    %v1695 = vmul.f32 %v1687, 0.35355338
    %v1696 = vmul.f32 %v1692, 0.35355338
    %v1697 = vadd.f32 %v1695, %v1335
    %v1698 = vadd.f32 %v1696, %v1336
    %v1699 = vsel %vm500, %v1697, -inf
    %1700 = vmax.xlane.f32.xlu0 %v1699
    %v1701 = vpop.xlane.xlu0 %1700
    %v1702 = vsel %vm500, %v1698, -inf
    %1703 = vmax.xlane.f32.xlu0 %v1702
    %v1704 = vpop.xlane.xlu0 %1703
    %v1705 = vsub.f32 %v1697, %v1701
    %v1706 = vsub.f32 %v1698, %v1704
    %v1707 = vmul.f32 %v1705, 1.442695
    %v1708 = vpow.pop %v1707
    %v1709 = vmul.f32 %v1706, 1.442695
    %v1710 = vpow.pop %v1709
    %v1711 = vsel %vm500, %v1708, 0.0
    %1712 = vadd.xlane.f32.xlu0 %v1711
    %v1713 = vpop.xlane.xlu0 %1712
    %v1714 = vsel %vm500, %v1710, 0.0
    %1715 = vadd.xlane.f32.xlu0 %v1714
    %v1716 = vpop.xlane.xlu0 %1715
    %v1717 = vrcp.pop %v1713
    %v1718 = vmul.f32 1.0, %v1717
    %v1719 = vrcp.pop %v1716
    %v1720 = vmul.f32 1.0, %v1719
    %v1721 = vmul.f32 %v1708, %v1718
    %v1722 = vmul.f32 %v1710, %v1720
    %v1723 = vmul.f32 %v1598, %v70
    %v1724 = vmul.f32 %v1603, %v70
    %v1725 = vmul.f32 %v1434, %v75
    %v1726 = vmul.f32 %v1439, %v75
    %v1728 = vsel %vm86, %v1725, 0
    %v1731 = vsel %vm86, %v1726, 0
    %1733 = vmatprep.subr.mxu0 0.0
    %1734 = vmatpush1.xpose.msra.mxu0 0.0
    %1735 = vmatprep.subr.mxu0 0.0
    %1736 = vmatpush1.xpose.msra.mxu0 0.0
    %1737 = vmatprep.subr.mxu0 0.0
    %1738 = vmatpush1.xpose.msra.mxu0 0.0
    %1739 = vmatprep.subr.mxu0 0.0
    %1740 = vmatpush1.xpose.msra.mxu0 0.0
    %1741 = vmatprep.subr.mxu0 0.0
    %1742 = vmatpush1.xpose.msra.mxu0 0.0
    %1743 = vmatprep.subr.mxu0 0.0
    %1744 = vmatpush1.xpose.msra.mxu0 0.0
    %1745 = vmatprep.subr.mxu0 0.0
    %1746 = vmatpush1.xpose.msra.mxu0 0.0
    %1747 = vmatprep.subr.mxu0 0.0
    %1748 = vmatpush1.xpose.msra.mxu0 0.0
    %1749 = vmatprep.subr.mxu0 0.0
    %1750 = vmatpush1.xpose.msra.mxu0 0.0
    %1751 = vmatprep.subr.mxu0 0.0
    %1752 = vmatpush1.xpose.msra.mxu0 0.0
    %1753 = vmatprep.subr.mxu0 0.0
    %1754 = vmatpush1.xpose.msra.mxu0 0.0
    %1755 = vmatprep.subr.mxu0 0.0
    %1756 = vmatpush1.xpose.msra.mxu0 0.0
    %1757 = vmatprep.subr.mxu0 0.0
    %1758 = vmatpush1.xpose.msra.mxu0 0.0
    %1759 = vmatprep.subr.mxu0 0.0
    %1760 = vmatpush1.xpose.msra.mxu0 0.0
    %1761 = vmatprep.subr.mxu0 0.0
    %1762 = vmatpush1.xpose.msra.mxu0 %v1618
    %1763 = vmatprep.subr.mxu0 0.0
    %1764 = vmatpush1.xpose.msra.mxu0 %v1615
    %1765 = vmatprep.subr.mxu0 0.0
    %1766 = vmatpush2.xpose.msra.mxu0 0.0
    %1767 = vmatprep.subr.mxu0 0.0
    %1768 = vmatpush2.xpose.msra.mxu0 0.0
    %1769 = vmatprep.subr.mxu0 0.0
    %1770 = vmatpush2.xpose.msra.mxu0 0.0
    %1771 = vmatprep.subr.mxu0 0.0
    %1772 = vmatpush2.xpose.msra.mxu0 0.0
    %1773 = vmatprep.subr.mxu0 0.0
    %1774 = vmatpush2.xpose.msra.mxu0 0.0
    %1775 = vmatprep.subr.mxu0 0.0
    %1776 = vmatpush2.xpose.msra.mxu0 0.0
    %1777 = vmatprep.subr.mxu0 0.0
    %1778 = vmatpush2.xpose.msra.mxu0 0.0
    %1779 = vmatprep.subr.mxu0 0.0
    %1780 = vmatpush2.xpose.msra.mxu0 0.0
    %1781 = vmatprep.subr.mxu0 0.0
    %1782 = vmatpush2.xpose.msra.mxu0 0.0
    %1783 = vmatprep.subr.mxu0 0.0
    %1784 = vmatpush2.xpose.msra.mxu0 0.0
    %1785 = vmatprep.subr.mxu0 0.0
    %1786 = vmatpush2.xpose.msra.mxu0 0.0
    %1787 = vmatprep.subr.mxu0 0.0
    %1788 = vmatpush2.xpose.msra.mxu0 0.0
    %1789 = vmatprep.subr.mxu0 0.0
    %1790 = vmatpush2.xpose.msra.mxu0 0.0
    %1791 = vmatprep.subr.mxu0 0.0
    %1792 = vmatpush2.xpose.msra.mxu0 0.0
    %1793 = vmatprep.subr.mxu0 0.0
    %1794 = vmatpush2.xpose.msra.mxu0 0.0
    %1795 = vmatprep.subr.mxu0 0.0
    %1796 = vmatpush2.xpose.msra.mxu0 0.0
    %1797 = vmatprep.mubr.f32.mxu0 0.0
    %1798 = vmatmul.mubr.f32.gmra.mxu0 %v1728
    %v1799 = vpop.f32.mrf.mxu0
    %v1800 = vadd.f32 0.0, %v1799
    %v1801 = vpop.f32.mrf.mxu0
    %1802 = vmatprep.mubr.f32.mxu0 0.0
    %1803 = vmatmul.mubr.f32.gmra.mxu0 %v1731
    %v1804 = vpop.f32.mrf.mxu0
    %v1805 = vadd.f32 0.0, %v1804
    %v1806 = vpop.f32.mrf.mxu0
    %1807 = vdwg.mxu0
    %v1808 = vmul.f32 %v1800, 0.35355338
    %v1809 = vmul.f32 %v1805, 0.35355338
    %v1810 = vadd.f32 %v1808, %v1335
    %v1811 = vadd.f32 %v1809, %v1336
    %v1812 = vsel %vm500, %v1810, -inf
    %1813 = vmax.xlane.f32.xlu0 %v1812
    %v1814 = vpop.xlane.xlu0 %1813
    %v1815 = vsel %vm500, %v1811, -inf
    %1816 = vmax.xlane.f32.xlu0 %v1815
    %v1817 = vpop.xlane.xlu0 %1816
    %v1818 = vsub.f32 %v1810, %v1814
    %v1819 = vsub.f32 %v1811, %v1817
    %v1820 = vmul.f32 %v1818, 1.442695
    %v1821 = vpow.pop %v1820
    %v1822 = vmul.f32 %v1819, 1.442695
    %v1823 = vpow.pop %v1822
    %v1824 = vsel %vm500, %v1821, 0.0
    %1825 = vadd.xlane.f32.xlu0 %v1824
    %v1826 = vpop.xlane.xlu0 %1825
    %v1827 = vsel %vm500, %v1823, 0.0
    %1828 = vadd.xlane.f32.xlu0 %v1827
    %v1829 = vpop.xlane.xlu0 %1828
    %v1830 = vrcp.pop %v1826
    %v1831 = vmul.f32 1.0, %v1830
    %v1832 = vrcp.pop %v1829
    %v1833 = vmul.f32 1.0, %v1832
    %v1834 = vmul.f32 %v1821, %v1831
    %v1835 = vmul.f32 %v1823, %v1833
    %v1836 = vmul.f32 %v1598, %v75
    %v1837 = vmul.f32 %v1603, %v75
    %v1839 = vsel %vm500, %v1834, 0
    %v1842 = vsel %vm500, %v1835, 0
    %1844 = vmatprep.subr.mxu0 0.0
    %1845 = vmatpush1.msra.mxu0 0.0
    %1846 = vmatprep.subr.mxu0 0.0
    %1847 = vmatpush1.msra.mxu0 0.0
    %1848 = vmatprep.subr.mxu0 0.0
    %1849 = vmatpush1.msra.mxu0 0.0
    %1850 = vmatprep.subr.mxu0 0.0
    %1851 = vmatpush1.msra.mxu0 0.0
    %1852 = vmatprep.subr.mxu0 0.0
    %1853 = vmatpush1.msra.mxu0 0.0
    %1854 = vmatprep.subr.mxu0 0.0
    %1855 = vmatpush1.msra.mxu0 0.0
    %1856 = vmatprep.subr.mxu0 0.0
    %1857 = vmatpush1.msra.mxu0 0.0
    %1858 = vmatprep.subr.mxu0 0.0
    %1859 = vmatpush1.msra.mxu0 0.0
    %1860 = vmatprep.subr.mxu0 0.0
    %1861 = vmatpush1.msra.mxu0 0.0
    %1862 = vmatprep.subr.mxu0 0.0
    %1863 = vmatpush1.msra.mxu0 0.0
    %1864 = vmatprep.subr.mxu0 0.0
    %1865 = vmatpush1.msra.mxu0 0.0
    %1866 = vmatprep.subr.mxu0 0.0
    %1867 = vmatpush1.msra.mxu0 0.0
    %1868 = vmatprep.subr.mxu0 0.0
    %1869 = vmatpush1.msra.mxu0 0.0
    %1870 = vmatprep.subr.mxu0 0.0
    %1871 = vmatpush1.msra.mxu0 0.0
    %1872 = vmatprep.subr.mxu0 0.0
    %1873 = vmatpush1.msra.mxu0 %v1837
    %1874 = vmatprep.subr.mxu0 0.0
    %1875 = vmatpush1.msra.mxu0 %v1836
    %1876 = vmatprep.subr.mxu0 0.0
    %1877 = vmatpush2.msra.mxu0 0.0
    %1878 = vmatprep.subr.mxu0 0.0
    %1879 = vmatpush2.msra.mxu0 0.0
    %1880 = vmatprep.subr.mxu0 0.0
    %1881 = vmatpush2.msra.mxu0 0.0
    %1882 = vmatprep.subr.mxu0 0.0
    %1883 = vmatpush2.msra.mxu0 0.0
    %1884 = vmatprep.subr.mxu0 0.0
    %1885 = vmatpush2.msra.mxu0 0.0
    %1886 = vmatprep.subr.mxu0 0.0
    %1887 = vmatpush2.msra.mxu0 0.0
    %1888 = vmatprep.subr.mxu0 0.0
    %1889 = vmatpush2.msra.mxu0 0.0
    %1890 = vmatprep.subr.mxu0 0.0
    %1891 = vmatpush2.msra.mxu0 0.0
    %1892 = vmatprep.subr.mxu0 0.0
    %1893 = vmatpush2.msra.mxu0 0.0
    %1894 = vmatprep.subr.mxu0 0.0
    %1895 = vmatpush2.msra.mxu0 0.0
    %1896 = vmatprep.subr.mxu0 0.0
    %1897 = vmatpush2.msra.mxu0 0.0
    %1898 = vmatprep.subr.mxu0 0.0
    %1899 = vmatpush2.msra.mxu0 0.0
    %1900 = vmatprep.subr.mxu0 0.0
    %1901 = vmatpush2.msra.mxu0 0.0
    %1902 = vmatprep.subr.mxu0 0.0
    %1903 = vmatpush2.msra.mxu0 0.0
    %1904 = vmatprep.subr.mxu0 0.0
    %1905 = vmatpush2.msra.mxu0 0.0
    %1906 = vmatprep.subr.mxu0 0.0
    %1907 = vmatpush2.msra.mxu0 0.0
    %1908 = vmatprep.mubr.f32.mxu0 0.0
    %1909 = vmatmul.mubr.f32.gmra.mxu0 %v1839
    %v1910 = vpop.f32.mrf.mxu0
    %v1911 = vadd.f32 0.0, %v1910
    %v1912 = vpop.f32.mrf.mxu0
    %1913 = vmatprep.mubr.f32.mxu0 0.0
    %1914 = vmatmul.mubr.f32.gmra.mxu0 %v1842
    %v1915 = vpop.f32.mrf.mxu0
    %v1916 = vadd.f32 0.0, %v1915
    %v1917 = vpop.f32.mrf.mxu0
    %1918 = vdwg.mxu0
    %v1920 = vsel %vm500, %v1721, 0
    %v1923 = vsel %vm500, %v1722, 0
    %1925 = vmatprep.subr.mxu0 0.0
    %1926 = vmatpush1.msra.mxu0 0.0
    %1927 = vmatprep.subr.mxu0 0.0
    %1928 = vmatpush1.msra.mxu0 0.0
    %1929 = vmatprep.subr.mxu0 0.0
    %1930 = vmatpush1.msra.mxu0 0.0
    %1931 = vmatprep.subr.mxu0 0.0
    %1932 = vmatpush1.msra.mxu0 0.0
    %1933 = vmatprep.subr.mxu0 0.0
    %1934 = vmatpush1.msra.mxu0 0.0
    %1935 = vmatprep.subr.mxu0 0.0
    %1936 = vmatpush1.msra.mxu0 0.0
    %1937 = vmatprep.subr.mxu0 0.0
    %1938 = vmatpush1.msra.mxu0 0.0
    %1939 = vmatprep.subr.mxu0 0.0
    %1940 = vmatpush1.msra.mxu0 0.0
    %1941 = vmatprep.subr.mxu0 0.0
    %1942 = vmatpush1.msra.mxu0 0.0
    %1943 = vmatprep.subr.mxu0 0.0
    %1944 = vmatpush1.msra.mxu0 0.0
    %1945 = vmatprep.subr.mxu0 0.0
    %1946 = vmatpush1.msra.mxu0 0.0
    %1947 = vmatprep.subr.mxu0 0.0
    %1948 = vmatpush1.msra.mxu0 0.0
    %1949 = vmatprep.subr.mxu0 0.0
    %1950 = vmatpush1.msra.mxu0 0.0
    %1951 = vmatprep.subr.mxu0 0.0
    %1952 = vmatpush1.msra.mxu0 0.0
    %1953 = vmatprep.subr.mxu0 0.0
    %1954 = vmatpush1.msra.mxu0 %v1724
    %1955 = vmatprep.subr.mxu0 0.0
    %1956 = vmatpush1.msra.mxu0 %v1723
    %1957 = vmatprep.subr.mxu0 0.0
    %1958 = vmatpush2.msra.mxu0 0.0
    %1959 = vmatprep.subr.mxu0 0.0
    %1960 = vmatpush2.msra.mxu0 0.0
    %1961 = vmatprep.subr.mxu0 0.0
    %1962 = vmatpush2.msra.mxu0 0.0
    %1963 = vmatprep.subr.mxu0 0.0
    %1964 = vmatpush2.msra.mxu0 0.0
    %1965 = vmatprep.subr.mxu0 0.0
    %1966 = vmatpush2.msra.mxu0 0.0
    %1967 = vmatprep.subr.mxu0 0.0
    %1968 = vmatpush2.msra.mxu0 0.0
    %1969 = vmatprep.subr.mxu0 0.0
    %1970 = vmatpush2.msra.mxu0 0.0
    %1971 = vmatprep.subr.mxu0 0.0
    %1972 = vmatpush2.msra.mxu0 0.0
    %1973 = vmatprep.subr.mxu0 0.0
    %1974 = vmatpush2.msra.mxu0 0.0
    %1975 = vmatprep.subr.mxu0 0.0
    %1976 = vmatpush2.msra.mxu0 0.0
    %1977 = vmatprep.subr.mxu0 0.0
    %1978 = vmatpush2.msra.mxu0 0.0
    %1979 = vmatprep.subr.mxu0 0.0
    %1980 = vmatpush2.msra.mxu0 0.0
    %1981 = vmatprep.subr.mxu0 0.0
    %1982 = vmatpush2.msra.mxu0 0.0
    %1983 = vmatprep.subr.mxu0 0.0
    %1984 = vmatpush2.msra.mxu0 0.0
    %1985 = vmatprep.subr.mxu0 0.0
    %1986 = vmatpush2.msra.mxu0 0.0
    %1987 = vmatprep.subr.mxu0 0.0
    %1988 = vmatpush2.msra.mxu0 0.0
    %1989 = vmatprep.mubr.f32.mxu0 0.0
    %1990 = vmatmul.mubr.f32.gmra.mxu0 %v1920
    %v1991 = vpop.f32.mrf.mxu0
    %v1992 = vadd.f32 %v1911, %v1991
    %v1993 = vpop.f32.mrf.mxu0
    %1994 = vmatprep.mubr.f32.mxu0 0.0
    %1995 = vmatmul.mubr.f32.gmra.mxu0 %v1923
    %v1996 = vpop.f32.mrf.mxu0
    %v1997 = vadd.f32 %v1916, %v1996
    %v1998 = vpop.f32.mrf.mxu0
    %1999 = vdwg.mxu0
    %v2000 = vmul.f32 %v1434, %v80
    %v2001 = vmul.f32 %v1439, %v80
    %v2003 = vsel %vm86, %v2000, 0
    %v2006 = vsel %vm86, %v2001, 0
    %2008 = vmatprep.subr.mxu0 0.0
    %2009 = vmatpush1.xpose.msra.mxu0 0.0
    %2010 = vmatprep.subr.mxu0 0.0
    %2011 = vmatpush1.xpose.msra.mxu0 0.0
    %2012 = vmatprep.subr.mxu0 0.0
    %2013 = vmatpush1.xpose.msra.mxu0 0.0
    %2014 = vmatprep.subr.mxu0 0.0
    %2015 = vmatpush1.xpose.msra.mxu0 0.0
    %2016 = vmatprep.subr.mxu0 0.0
    %2017 = vmatpush1.xpose.msra.mxu0 0.0
    %2018 = vmatprep.subr.mxu0 0.0
    %2019 = vmatpush1.xpose.msra.mxu0 0.0
    %2020 = vmatprep.subr.mxu0 0.0
    %2021 = vmatpush1.xpose.msra.mxu0 0.0
    %2022 = vmatprep.subr.mxu0 0.0
    %2023 = vmatpush1.xpose.msra.mxu0 0.0
    %2024 = vmatprep.subr.mxu0 0.0
    %2025 = vmatpush1.xpose.msra.mxu0 0.0
    %2026 = vmatprep.subr.mxu0 0.0
    %2027 = vmatpush1.xpose.msra.mxu0 0.0
    %2028 = vmatprep.subr.mxu0 0.0
    %2029 = vmatpush1.xpose.msra.mxu0 0.0
    %2030 = vmatprep.subr.mxu0 0.0
    %2031 = vmatpush1.xpose.msra.mxu0 0.0
    %2032 = vmatprep.subr.mxu0 0.0
    %2033 = vmatpush1.xpose.msra.mxu0 0.0
    %2034 = vmatprep.subr.mxu0 0.0
    %2035 = vmatpush1.xpose.msra.mxu0 0.0
    %2036 = vmatprep.subr.mxu0 0.0
    %2037 = vmatpush1.xpose.msra.mxu0 %v1618
    %2038 = vmatprep.subr.mxu0 0.0
    %2039 = vmatpush1.xpose.msra.mxu0 %v1615
    %2040 = vmatprep.subr.mxu0 0.0
    %2041 = vmatpush2.xpose.msra.mxu0 0.0
    %2042 = vmatprep.subr.mxu0 0.0
    %2043 = vmatpush2.xpose.msra.mxu0 0.0
    %2044 = vmatprep.subr.mxu0 0.0
    %2045 = vmatpush2.xpose.msra.mxu0 0.0
    %2046 = vmatprep.subr.mxu0 0.0
    %2047 = vmatpush2.xpose.msra.mxu0 0.0
    %2048 = vmatprep.subr.mxu0 0.0
    %2049 = vmatpush2.xpose.msra.mxu0 0.0
    %2050 = vmatprep.subr.mxu0 0.0
    %2051 = vmatpush2.xpose.msra.mxu0 0.0
    %2052 = vmatprep.subr.mxu0 0.0
    %2053 = vmatpush2.xpose.msra.mxu0 0.0
    %2054 = vmatprep.subr.mxu0 0.0
    %2055 = vmatpush2.xpose.msra.mxu0 0.0
    %2056 = vmatprep.subr.mxu0 0.0
    %2057 = vmatpush2.xpose.msra.mxu0 0.0
    %2058 = vmatprep.subr.mxu0 0.0
    %2059 = vmatpush2.xpose.msra.mxu0 0.0
    %2060 = vmatprep.subr.mxu0 0.0
    %2061 = vmatpush2.xpose.msra.mxu0 0.0
    %2062 = vmatprep.subr.mxu0 0.0
    %2063 = vmatpush2.xpose.msra.mxu0 0.0
    %2064 = vmatprep.subr.mxu0 0.0
    %2065 = vmatpush2.xpose.msra.mxu0 0.0
    %2066 = vmatprep.subr.mxu0 0.0
    %2067 = vmatpush2.xpose.msra.mxu0 0.0
    %2068 = vmatprep.subr.mxu0 0.0
    %2069 = vmatpush2.xpose.msra.mxu0 0.0
    %2070 = vmatprep.subr.mxu0 0.0
    %2071 = vmatpush2.xpose.msra.mxu0 0.0
    %2072 = vmatprep.mubr.f32.mxu0 0.0
    %2073 = vmatmul.mubr.f32.gmra.mxu0 %v2003
    %v2074 = vpop.f32.mrf.mxu0
    %v2075 = vadd.f32 0.0, %v2074
    %v2076 = vpop.f32.mrf.mxu0
    %2077 = vmatprep.mubr.f32.mxu0 0.0
    %2078 = vmatmul.mubr.f32.gmra.mxu0 %v2006
    %v2079 = vpop.f32.mrf.mxu0
    %v2080 = vadd.f32 0.0, %v2079
    %v2081 = vpop.f32.mrf.mxu0
    %2082 = vdwg.mxu0
    %v2083 = vmul.f32 %v2075, 0.35355338
    %v2084 = vmul.f32 %v2080, 0.35355338
    %v2085 = vadd.f32 %v2083, %v1335
    %v2086 = vadd.f32 %v2084, %v1336
    %v2087 = vsel %vm500, %v2085, -inf
    %2088 = vmax.xlane.f32.xlu0 %v2087
    %v2089 = vpop.xlane.xlu0 %2088
    %v2090 = vsel %vm500, %v2086, -inf
    %2091 = vmax.xlane.f32.xlu0 %v2090
    %v2092 = vpop.xlane.xlu0 %2091
    %v2093 = vsub.f32 %v2085, %v2089
    %v2094 = vsub.f32 %v2086, %v2092
    %v2095 = vmul.f32 %v2093, 1.442695
    %v2096 = vpow.pop %v2095
    %v2097 = vmul.f32 %v2094, 1.442695
    %v2098 = vpow.pop %v2097
    %v2099 = vsel %vm500, %v2096, 0.0
    %2100 = vadd.xlane.f32.xlu0 %v2099
    %v2101 = vpop.xlane.xlu0 %2100
    %v2102 = vsel %vm500, %v2098, 0.0
    %2103 = vadd.xlane.f32.xlu0 %v2102
    %v2104 = vpop.xlane.xlu0 %2103
    %v2105 = vrcp.pop %v2101
    %v2106 = vmul.f32 1.0, %v2105
    %v2107 = vrcp.pop %v2104
    %v2108 = vmul.f32 1.0, %v2107
    %v2109 = vmul.f32 %v2096, %v2106
    %v2110 = vmul.f32 %v2098, %v2108
    %v2111 = vmul.f32 %v1598, %v80
    %v2112 = vmul.f32 %v1603, %v80
    %v2114 = vsel %vm500, %v2109, 0
    %v2117 = vsel %vm500, %v2110, 0
    %2119 = vmatprep.subr.mxu0 0.0
    %2120 = vmatpush1.msra.mxu0 0.0
    %2121 = vmatprep.subr.mxu0 0.0
    %2122 = vmatpush1.msra.mxu0 0.0
    %2123 = vmatprep.subr.mxu0 0.0
    %2124 = vmatpush1.msra.mxu0 0.0
    %2125 = vmatprep.subr.mxu0 0.0
    %2126 = vmatpush1.msra.mxu0 0.0
    %2127 = vmatprep.subr.mxu0 0.0
    %2128 = vmatpush1.msra.mxu0 0.0
    %2129 = vmatprep.subr.mxu0 0.0
    %2130 = vmatpush1.msra.mxu0 0.0
    %2131 = vmatprep.subr.mxu0 0.0
    %2132 = vmatpush1.msra.mxu0 0.0
    %2133 = vmatprep.subr.mxu0 0.0
    %2134 = vmatpush1.msra.mxu0 0.0
    %2135 = vmatprep.subr.mxu0 0.0
    %2136 = vmatpush1.msra.mxu0 0.0
    %2137 = vmatprep.subr.mxu0 0.0
    %2138 = vmatpush1.msra.mxu0 0.0
    %2139 = vmatprep.subr.mxu0 0.0
    %2140 = vmatpush1.msra.mxu0 0.0
    %2141 = vmatprep.subr.mxu0 0.0
    %2142 = vmatpush1.msra.mxu0 0.0
    %2143 = vmatprep.subr.mxu0 0.0
    %2144 = vmatpush1.msra.mxu0 0.0
    %2145 = vmatprep.subr.mxu0 0.0
    %2146 = vmatpush1.msra.mxu0 0.0
    %2147 = vmatprep.subr.mxu0 0.0
    %2148 = vmatpush1.msra.mxu0 %v2112
    %2149 = vmatprep.subr.mxu0 0.0
    %2150 = vmatpush1.msra.mxu0 %v2111
    %2151 = vmatprep.subr.mxu0 0.0
    %2152 = vmatpush2.msra.mxu0 0.0
    %2153 = vmatprep.subr.mxu0 0.0
    %2154 = vmatpush2.msra.mxu0 0.0
    %2155 = vmatprep.subr.mxu0 0.0
    %2156 = vmatpush2.msra.mxu0 0.0
    %2157 = vmatprep.subr.mxu0 0.0
    %2158 = vmatpush2.msra.mxu0 0.0
    %2159 = vmatprep.subr.mxu0 0.0
    %2160 = vmatpush2.msra.mxu0 0.0
    %2161 = vmatprep.subr.mxu0 0.0
    %2162 = vmatpush2.msra.mxu0 0.0
    %2163 = vmatprep.subr.mxu0 0.0
    %2164 = vmatpush2.msra.mxu0 0.0
    %2165 = vmatprep.subr.mxu0 0.0
    %2166 = vmatpush2.msra.mxu0 0.0
    %2167 = vmatprep.subr.mxu0 0.0
    %2168 = vmatpush2.msra.mxu0 0.0
    %2169 = vmatprep.subr.mxu0 0.0
    %2170 = vmatpush2.msra.mxu0 0.0
    %2171 = vmatprep.subr.mxu0 0.0
    %2172 = vmatpush2.msra.mxu0 0.0
    %2173 = vmatprep.subr.mxu0 0.0
    %2174 = vmatpush2.msra.mxu0 0.0
    %2175 = vmatprep.subr.mxu0 0.0
    %2176 = vmatpush2.msra.mxu0 0.0
    %2177 = vmatprep.subr.mxu0 0.0
    %2178 = vmatpush2.msra.mxu0 0.0
    %2179 = vmatprep.subr.mxu0 0.0
    %2180 = vmatpush2.msra.mxu0 0.0
    %2181 = vmatprep.subr.mxu0 0.0
    %2182 = vmatpush2.msra.mxu0 0.0
    %2183 = vmatprep.mubr.f32.mxu0 0.0
    %2184 = vmatmul.mubr.f32.gmra.mxu0 %v2114
    %v2185 = vpop.f32.mrf.mxu0
    %v2186 = vadd.f32 0.0, %v2185
    %v2187 = vpop.f32.mrf.mxu0
    %2188 = vmatprep.mubr.f32.mxu0 0.0
    %2189 = vmatmul.mubr.f32.gmra.mxu0 %v2117
    %v2190 = vpop.f32.mrf.mxu0
    %v2191 = vadd.f32 0.0, %v2190
    %v2192 = vpop.f32.mrf.mxu0
    %2193 = vdwg.mxu0
    %v2194 = vadd.f32 %v1992, %v2186
    %v2195 = vadd.f32 %v1997, %v2191
    %v2196 = vmul.f32 %v1434, %v85
    %v2197 = vmul.f32 %v1439, %v85
    %v2199 = vsel %vm86, %v2196, 0
    %v2202 = vsel %vm86, %v2197, 0
    %2204 = vmatprep.subr.mxu0 0.0
    %2205 = vmatpush1.xpose.msra.mxu0 0.0
    %2206 = vmatprep.subr.mxu0 0.0
    %2207 = vmatpush1.xpose.msra.mxu0 0.0
    %2208 = vmatprep.subr.mxu0 0.0
    %2209 = vmatpush1.xpose.msra.mxu0 0.0
    %2210 = vmatprep.subr.mxu0 0.0
    %2211 = vmatpush1.xpose.msra.mxu0 0.0
    %2212 = vmatprep.subr.mxu0 0.0
    %2213 = vmatpush1.xpose.msra.mxu0 0.0
    %2214 = vmatprep.subr.mxu0 0.0
    %2215 = vmatpush1.xpose.msra.mxu0 0.0
    %2216 = vmatprep.subr.mxu0 0.0
    %2217 = vmatpush1.xpose.msra.mxu0 0.0
    %2218 = vmatprep.subr.mxu0 0.0
    %2219 = vmatpush1.xpose.msra.mxu0 0.0
    %2220 = vmatprep.subr.mxu0 0.0
    %2221 = vmatpush1.xpose.msra.mxu0 0.0
    %2222 = vmatprep.subr.mxu0 0.0
    %2223 = vmatpush1.xpose.msra.mxu0 0.0
    %2224 = vmatprep.subr.mxu0 0.0
    %2225 = vmatpush1.xpose.msra.mxu0 0.0
    %2226 = vmatprep.subr.mxu0 0.0
    %2227 = vmatpush1.xpose.msra.mxu0 0.0
    %2228 = vmatprep.subr.mxu0 0.0
    %2229 = vmatpush1.xpose.msra.mxu0 0.0
    %2230 = vmatprep.subr.mxu0 0.0
    %2231 = vmatpush1.xpose.msra.mxu0 0.0
    %2232 = vmatprep.subr.mxu0 0.0
    %2233 = vmatpush1.xpose.msra.mxu0 %v1618
    %2234 = vmatprep.subr.mxu0 0.0
    %2235 = vmatpush1.xpose.msra.mxu0 %v1615
    %2236 = vmatprep.subr.mxu0 0.0
    %2237 = vmatpush2.xpose.msra.mxu0 0.0
    %2238 = vmatprep.subr.mxu0 0.0
    %2239 = vmatpush2.xpose.msra.mxu0 0.0
    %2240 = vmatprep.subr.mxu0 0.0
    %2241 = vmatpush2.xpose.msra.mxu0 0.0
    %2242 = vmatprep.subr.mxu0 0.0
    %2243 = vmatpush2.xpose.msra.mxu0 0.0
    %2244 = vmatprep.subr.mxu0 0.0
    %2245 = vmatpush2.xpose.msra.mxu0 0.0
    %2246 = vmatprep.subr.mxu0 0.0
    %2247 = vmatpush2.xpose.msra.mxu0 0.0
    %2248 = vmatprep.subr.mxu0 0.0
    %2249 = vmatpush2.xpose.msra.mxu0 0.0
    %2250 = vmatprep.subr.mxu0 0.0
    %2251 = vmatpush2.xpose.msra.mxu0 0.0
    %2252 = vmatprep.subr.mxu0 0.0
    %2253 = vmatpush2.xpose.msra.mxu0 0.0
    %2254 = vmatprep.subr.mxu0 0.0
    %2255 = vmatpush2.xpose.msra.mxu0 0.0
    %2256 = vmatprep.subr.mxu0 0.0
    %2257 = vmatpush2.xpose.msra.mxu0 0.0
    %2258 = vmatprep.subr.mxu0 0.0
    %2259 = vmatpush2.xpose.msra.mxu0 0.0
    %2260 = vmatprep.subr.mxu0 0.0
    %2261 = vmatpush2.xpose.msra.mxu0 0.0
    %2262 = vmatprep.subr.mxu0 0.0
    %2263 = vmatpush2.xpose.msra.mxu0 0.0
    %2264 = vmatprep.subr.mxu0 0.0
    %2265 = vmatpush2.xpose.msra.mxu0 0.0
    %2266 = vmatprep.subr.mxu0 0.0
    %2267 = vmatpush2.xpose.msra.mxu0 0.0
    %2268 = vmatprep.mubr.f32.mxu0 0.0
    %2269 = vmatmul.mubr.f32.gmra.mxu0 %v2199
    %v2270 = vpop.f32.mrf.mxu0
    %v2271 = vadd.f32 0.0, %v2270
    %v2272 = vpop.f32.mrf.mxu0
    %2273 = vmatprep.mubr.f32.mxu0 0.0
    %2274 = vmatmul.mubr.f32.gmra.mxu0 %v2202
    %v2275 = vpop.f32.mrf.mxu0
    %v2276 = vadd.f32 0.0, %v2275
    %v2277 = vpop.f32.mrf.mxu0
    %2278 = vdwg.mxu0
    %v2279 = vmul.f32 %v2271, 0.35355338
    %v2280 = vmul.f32 %v2276, 0.35355338
    %v2281 = vadd.f32 %v2279, %v1335
    %v2282 = vadd.f32 %v2280, %v1336
    %v2283 = vsel %vm500, %v2281, -inf
    %2284 = vmax.xlane.f32.xlu0 %v2283
    %v2285 = vpop.xlane.xlu0 %2284
    %v2286 = vsel %vm500, %v2282, -inf
    %2287 = vmax.xlane.f32.xlu0 %v2286
    %v2288 = vpop.xlane.xlu0 %2287
    %v2289 = vsub.f32 %v2281, %v2285
    %v2290 = vsub.f32 %v2282, %v2288
    %v2291 = vmul.f32 %v2289, 1.442695
    %v2292 = vpow.pop %v2291
    %v2293 = vmul.f32 %v2290, 1.442695
    %v2294 = vpow.pop %v2293
    %v2295 = vsel %vm500, %v2292, 0.0
    %2296 = vadd.xlane.f32.xlu0 %v2295
    %v2297 = vpop.xlane.xlu0 %2296
    %v2298 = vsel %vm500, %v2294, 0.0
    %2299 = vadd.xlane.f32.xlu0 %v2298
    %v2300 = vpop.xlane.xlu0 %2299
    %v2301 = vrcp.pop %v2297
    %v2302 = vmul.f32 1.0, %v2301
    %v2303 = vrcp.pop %v2300
    %v2304 = vmul.f32 1.0, %v2303
    %v2305 = vmul.f32 %v2292, %v2302
    %v2306 = vmul.f32 %v2294, %v2304
    %v2307 = vmul.f32 %v1598, %v85
    %v2308 = vmul.f32 %v1603, %v85
    %v2310 = vsel %vm500, %v2305, 0
    %v2313 = vsel %vm500, %v2306, 0
    %2315 = vmatprep.subr.mxu0 0.0
    %2316 = vmatpush1.msra.mxu0 0.0
    %2317 = vmatprep.subr.mxu0 0.0
    %2318 = vmatpush1.msra.mxu0 0.0
    %2319 = vmatprep.subr.mxu0 0.0
    %2320 = vmatpush1.msra.mxu0 0.0
    %2321 = vmatprep.subr.mxu0 0.0
    %2322 = vmatpush1.msra.mxu0 0.0
    %2323 = vmatprep.subr.mxu0 0.0
    %2324 = vmatpush1.msra.mxu0 0.0
    %2325 = vmatprep.subr.mxu0 0.0
    %2326 = vmatpush1.msra.mxu0 0.0
    %2327 = vmatprep.subr.mxu0 0.0
    %2328 = vmatpush1.msra.mxu0 0.0
    %2329 = vmatprep.subr.mxu0 0.0
    %2330 = vmatpush1.msra.mxu0 0.0
    %2331 = vmatprep.subr.mxu0 0.0
    %2332 = vmatpush1.msra.mxu0 0.0
    %2333 = vmatprep.subr.mxu0 0.0
    %2334 = vmatpush1.msra.mxu0 0.0
    %2335 = vmatprep.subr.mxu0 0.0
    %2336 = vmatpush1.msra.mxu0 0.0
    %2337 = vmatprep.subr.mxu0 0.0
    %2338 = vmatpush1.msra.mxu0 0.0
    %2339 = vmatprep.subr.mxu0 0.0
    %2340 = vmatpush1.msra.mxu0 0.0
    %2341 = vmatprep.subr.mxu0 0.0
    %2342 = vmatpush1.msra.mxu0 0.0
    %2343 = vmatprep.subr.mxu0 0.0
    %2344 = vmatpush1.msra.mxu0 %v2308
    %2345 = vmatprep.subr.mxu0 0.0
    %2346 = vmatpush1.msra.mxu0 %v2307
    %2347 = vmatprep.subr.mxu0 0.0
    %2348 = vmatpush2.msra.mxu0 0.0
    %2349 = vmatprep.subr.mxu0 0.0
    %2350 = vmatpush2.msra.mxu0 0.0
    %2351 = vmatprep.subr.mxu0 0.0
    %2352 = vmatpush2.msra.mxu0 0.0
    %2353 = vmatprep.subr.mxu0 0.0
    %2354 = vmatpush2.msra.mxu0 0.0
    %2355 = vmatprep.subr.mxu0 0.0
    %2356 = vmatpush2.msra.mxu0 0.0
    %2357 = vmatprep.subr.mxu0 0.0
    %2358 = vmatpush2.msra.mxu0 0.0
    %2359 = vmatprep.subr.mxu0 0.0
    %2360 = vmatpush2.msra.mxu0 0.0
    %2361 = vmatprep.subr.mxu0 0.0
    %2362 = vmatpush2.msra.mxu0 0.0
    %2363 = vmatprep.subr.mxu0 0.0
    %2364 = vmatpush2.msra.mxu0 0.0
    %2365 = vmatprep.subr.mxu0 0.0
    %2366 = vmatpush2.msra.mxu0 0.0
    %2367 = vmatprep.subr.mxu0 0.0
    %2368 = vmatpush2.msra.mxu0 0.0
    %2369 = vmatprep.subr.mxu0 0.0
    %2370 = vmatpush2.msra.mxu0 0.0
    %2371 = vmatprep.subr.mxu0 0.0
    %2372 = vmatpush2.msra.mxu0 0.0
    %2373 = vmatprep.subr.mxu0 0.0
    %2374 = vmatpush2.msra.mxu0 0.0
    %2375 = vmatprep.subr.mxu0 0.0
    %2376 = vmatpush2.msra.mxu0 0.0
    %2377 = vmatprep.subr.mxu0 0.0
    %2378 = vmatpush2.msra.mxu0 0.0
    %2379 = vmatprep.mubr.f32.mxu0 0.0
    %2380 = vmatmul.mubr.f32.gmra.mxu0 %v2310
    %v2381 = vpop.f32.mrf.mxu0
    %v2382 = vadd.f32 0.0, %v2381
    %v2383 = vpop.f32.mrf.mxu0
    %2384 = vmatprep.mubr.f32.mxu0 0.0
    %2385 = vmatmul.mubr.f32.gmra.mxu0 %v2313
    %v2386 = vpop.f32.mrf.mxu0
    %v2387 = vadd.f32 0.0, %v2386
    %v2388 = vpop.f32.mrf.mxu0
    %2389 = vdwg.mxu0
    %v2390 = vadd.f32 %v2194, %v2382
    %v2391 = vadd.f32 %v2195, %v2387
    %v2392 = vlaneseq
    %v2393 = vshrl.u32 %v2392, 7
    %v2394 = vsub.s32 7, %v2393
    %v2395 = vrot.slane %v62, %v2394
    %v2397 = vsel %vm86, %v2390, 0
    %v2400 = vsel %vm86, %v2391, 0
    %2402 = vmatprep.subr.mxu0 0.0
    %2403 = vmatpush1.msra.mxu0 0.0
    %2404 = vmatprep.subr.mxu0 0.0
    %2405 = vmatpush1.msra.mxu0 0.0
    %2406 = vmatprep.subr.mxu0 0.0
    %2407 = vmatpush1.msra.mxu0 0.0
    %2408 = vmatprep.subr.mxu0 0.0
    %2409 = vmatpush1.msra.mxu0 0.0
    %2410 = vmatprep.subr.mxu0 0.0
    %2411 = vmatpush1.msra.mxu0 0.0
    %2412 = vmatprep.subr.mxu0 0.0
    %2413 = vmatpush1.msra.mxu0 0.0
    %2414 = vmatprep.subr.mxu0 0.0
    %2415 = vmatpush1.msra.mxu0 0.0
    %2416 = vmatprep.subr.mxu0 0.0
    %2417 = vmatpush1.msra.mxu0 0.0
    %2418 = vmatprep.subr.mxu0 0.0
    %2419 = vmatpush1.msra.mxu0 0.0
    %2420 = vmatprep.subr.mxu0 0.0
    %2421 = vmatpush1.msra.mxu0 0.0
    %2422 = vmatprep.subr.mxu0 0.0
    %2423 = vmatpush1.msra.mxu0 0.0
    %2424 = vmatprep.subr.mxu0 0.0
    %2425 = vmatpush1.msra.mxu0 0.0
    %2426 = vmatprep.subr.mxu0 0.0
    %2427 = vmatpush1.msra.mxu0 %v1356
    %2428 = vmatprep.subr.mxu0 0.0
    %2429 = vmatpush1.msra.mxu0 %v1355
    %2430 = vmatprep.subr.mxu0 0.0
    %2431 = vmatpush1.msra.mxu0 %v1354
    %2432 = vmatprep.subr.mxu0 0.0
    %2433 = vmatpush1.msra.mxu0 %v1353
    %2434 = vmatprep.subr.mxu0 0.0
    %2435 = vmatpush2.msra.mxu0 0.0
    %2436 = vmatprep.subr.mxu0 0.0
    %2437 = vmatpush2.msra.mxu0 0.0
    %2438 = vmatprep.subr.mxu0 0.0
    %2439 = vmatpush2.msra.mxu0 0.0
    %2440 = vmatprep.subr.mxu0 0.0
    %2441 = vmatpush2.msra.mxu0 0.0
    %2442 = vmatprep.subr.mxu0 0.0
    %2443 = vmatpush2.msra.mxu0 0.0
    %2444 = vmatprep.subr.mxu0 0.0
    %2445 = vmatpush2.msra.mxu0 0.0
    %2446 = vmatprep.subr.mxu0 0.0
    %2447 = vmatpush2.msra.mxu0 0.0
    %2448 = vmatprep.subr.mxu0 0.0
    %2449 = vmatpush2.msra.mxu0 0.0
    %2450 = vmatprep.subr.mxu0 0.0
    %2451 = vmatpush2.msra.mxu0 0.0
    %2452 = vmatprep.subr.mxu0 0.0
    %2453 = vmatpush2.msra.mxu0 0.0
    %2454 = vmatprep.subr.mxu0 0.0
    %2455 = vmatpush2.msra.mxu0 0.0
    %2456 = vmatprep.subr.mxu0 0.0
    %2457 = vmatpush2.msra.mxu0 0.0
    %2458 = vmatprep.subr.mxu0 0.0
    %2459 = vmatpush2.msra.mxu0 0.0
    %2460 = vmatprep.subr.mxu0 0.0
    %2461 = vmatpush2.msra.mxu0 0.0
    %2462 = vmatprep.subr.mxu0 0.0
    %2463 = vmatpush2.msra.mxu0 0.0
    %2464 = vmatprep.subr.mxu0 0.0
    %2465 = vmatpush2.msra.mxu0 0.0
    %2466 = vmatprep.mubr.f32.mxu0 0.0
    %2467 = vmatmul.mubr.f32.gmra.mxu0 %v2397
    %v2468 = vpop.f32.mrf.mxu0
    %v2469 = vadd.f32 %v2395, %v2468
    %v2470 = vpop.f32.mrf.mxu0
    %2471 = vmatprep.mubr.f32.mxu0 0.0
    %2472 = vmatmul.mubr.f32.gmra.mxu0 %v2400
    %v2473 = vpop.f32.mrf.mxu0
    %v2474 = vadd.f32 %v2395, %v2473
    %v2475 = vpop.f32.mrf.mxu0
    %2476 = vdwg.mxu0
    %v2477 = vadd.f32 %v1279, %v2469
    %v2478 = vadd.f32 %v1280, %v2474
    %v2479 = vsel %vm86, %v2477, 0.0
    %2480 = vadd.xlane.f32.xlu0 %v2479
    %v2481 = vpop.xlane.xlu0 %2480
    %v2482 = vsel %vm86, %v2478, 0.0
    %2483 = vadd.xlane.f32.xlu0 %v2482
    %v2484 = vpop.xlane.xlu0 %2483
    %v2485 = vmul.f32 %v2481, %v93
    %v2486 = vmul.f32 %v2484, %v93
    %v2487 = vsub.f32 %v2477, %v2485
    %v2488 = vsub.f32 %v2478, %v2486
    %v2489 = vmul.f32 %v2487, %v2487
    %v2490 = vmul.f32 %v2488, %v2488
    %v2491 = vsel %vm86, %v2489, 0.0
    %2492 = vadd.xlane.f32.xlu0 %v2491
    %v2493 = vpop.xlane.xlu0 %2492
    %v2494 = vsel %vm86, %v2490, 0.0
    %2495 = vadd.xlane.f32.xlu0 %v2494
    %v2496 = vpop.xlane.xlu0 %2495
    %v2497 = vmul.f32 %v2493, %v106
    %v2498 = vmul.f32 %v2496, %v106
    %v2499 = vrsqrt.pop %v2497
    %v2500 = vmul.f32 %v2497, %v2499
    %vm2501 = vcmp.eq.f32.partialorder %v2497, inf
    %v2502 = vsel %vm2501, %v2497, %v2500
    %vm2503 = vcmp.eq.f32.partialorder %v2497, 0.0
    %v2504 = vand.u32 %v2497, 2147483648
    %v2505 = vsel %vm2503, %v2504, %v2502
    %v2506 = vrsqrt.pop %v2498
    %v2507 = vmul.f32 %v2498, %v2506
    %vm2508 = vcmp.eq.f32.partialorder %v2498, inf
    %v2509 = vsel %vm2508, %v2498, %v2507
    %vm2510 = vcmp.eq.f32.partialorder %v2498, 0.0
    %v2511 = vand.u32 %v2498, 2147483648
    %v2512 = vsel %vm2510, %v2511, %v2509
    %v2513 = vadd.f32 %v2505, 1e-06
    %v2514 = vadd.f32 %v2512, 1e-06
    %v2515 = vrcp.pop %v2513
    %v2516 = vmul.f32 1.0, %v2515
    %v2517 = vrcp.pop %v2514
    %v2518 = vmul.f32 1.0, %v2517
    %v2519 = vlaneseq
    %v2520 = vshrl.u32 %v2519, 7
    %v2521 = vsub.s32 4, %v2520
    %v2522 = vrot.slane %v63, %v2521
    %v2523 = vmul.f32 %v2522, %v2487
    %v2524 = vmul.f32 %v2522, %v2488
    %v2525 = vmul.f32 %v2523, %v2516
    %v2526 = vmul.f32 %v2524, %v2518
    %v2527 = vlaneseq
    %v2528 = vshrl.u32 %v2527, 7
    %v2529 = vsub.s32 7, %v2528
    %v2530 = vrot.slane %v63, %v2529
    %v2531 = vadd.f32 %v2525, %v2530
    %v2532 = vadd.f32 %v2526, %v2530
    %v2533 = vld [vmem:[%s5] sm:$0xff]
    %v2534 = vld [vmem:[%s5 + $0x8] sm:$0xff]
    %v2535 = vld [vmem:[%s5 + $0x10] sm:$0xff]
    %v2536 = vld [vmem:[%s5 + $0x18] sm:$0xff]
    %v2537 = vlaneseq
    %v2538 = vshrl.u32 %v2537, 7
    %v2539 = vsub.s32 0, %v2538
    %v2540 = vrot.slane %v63, %v2539
    %v2542 = vsel %vm86, %v2531, 0
    %v2545 = vsel %vm86, %v2532, 0
    %2547 = vmatprep.subr.mxu0 0.0
    %2548 = vmatpush1.msra.mxu0 0.0
    %2549 = vmatprep.subr.mxu0 0.0
    %2550 = vmatpush1.msra.mxu0 0.0
    %2551 = vmatprep.subr.mxu0 0.0
    %2552 = vmatpush1.msra.mxu0 0.0
    %2553 = vmatprep.subr.mxu0 0.0
    %2554 = vmatpush1.msra.mxu0 0.0
    %2555 = vmatprep.subr.mxu0 0.0
    %2556 = vmatpush1.msra.mxu0 0.0
    %2557 = vmatprep.subr.mxu0 0.0
    %2558 = vmatpush1.msra.mxu0 0.0
    %2559 = vmatprep.subr.mxu0 0.0
    %2560 = vmatpush1.msra.mxu0 0.0
    %2561 = vmatprep.subr.mxu0 0.0
    %2562 = vmatpush1.msra.mxu0 0.0
    %2563 = vmatprep.subr.mxu0 0.0
    %2564 = vmatpush1.msra.mxu0 0.0
    %2565 = vmatprep.subr.mxu0 0.0
    %2566 = vmatpush1.msra.mxu0 0.0
    %2567 = vmatprep.subr.mxu0 0.0
    %2568 = vmatpush1.msra.mxu0 0.0
    %2569 = vmatprep.subr.mxu0 0.0
    %2570 = vmatpush1.msra.mxu0 0.0
    %2571 = vmatprep.subr.mxu0 0.0
    %2572 = vmatpush1.msra.mxu0 %v2536
    %2573 = vmatprep.subr.mxu0 0.0
    %2574 = vmatpush1.msra.mxu0 %v2535
    %2575 = vmatprep.subr.mxu0 0.0
    %2576 = vmatpush1.msra.mxu0 %v2534
    %2577 = vmatprep.subr.mxu0 0.0
    %2578 = vmatpush1.msra.mxu0 %v2533
    %2579 = vmatprep.subr.mxu0 0.0
    %2580 = vmatpush2.msra.mxu0 0.0
    %2581 = vmatprep.subr.mxu0 0.0
    %2582 = vmatpush2.msra.mxu0 0.0
    %2583 = vmatprep.subr.mxu0 0.0
    %2584 = vmatpush2.msra.mxu0 0.0
    %2585 = vmatprep.subr.mxu0 0.0
    %2586 = vmatpush2.msra.mxu0 0.0
    %2587 = vmatprep.subr.mxu0 0.0
    %2588 = vmatpush2.msra.mxu0 0.0
    %2589 = vmatprep.subr.mxu0 0.0
    %2590 = vmatpush2.msra.mxu0 0.0
    %2591 = vmatprep.subr.mxu0 0.0
    %2592 = vmatpush2.msra.mxu0 0.0
    %2593 = vmatprep.subr.mxu0 0.0
    %2594 = vmatpush2.msra.mxu0 0.0
    %2595 = vmatprep.subr.mxu0 0.0
    %2596 = vmatpush2.msra.mxu0 0.0
    %2597 = vmatprep.subr.mxu0 0.0
    %2598 = vmatpush2.msra.mxu0 0.0
    %2599 = vmatprep.subr.mxu0 0.0
    %2600 = vmatpush2.msra.mxu0 0.0
    %2601 = vmatprep.subr.mxu0 0.0
    %2602 = vmatpush2.msra.mxu0 0.0
    %2603 = vmatprep.subr.mxu0 0.0
    %2604 = vmatpush2.msra.mxu0 0.0
    %2605 = vmatprep.subr.mxu0 0.0
    %2606 = vmatpush2.msra.mxu0 0.0
    %2607 = vmatprep.subr.mxu0 0.0
    %2608 = vmatpush2.msra.mxu0 0.0
    %2609 = vmatprep.subr.mxu0 0.0
    %2610 = vmatpush2.msra.mxu0 0.0
    %2611 = vmatprep.mubr.f32.mxu0 0.0
    %2612 = vmatmul.mubr.f32.gmra.mxu0 %v2542
    %v2613 = vpop.f32.mrf.mxu0
    %v2614 = vadd.f32 %v2540, %v2613
    %v2615 = vpop.f32.mrf.mxu0
    %2616 = vmatprep.mubr.f32.mxu0 0.0
    %2617 = vmatmul.mubr.f32.gmra.mxu0 %v2545
    %v2618 = vpop.f32.mrf.mxu0
    %v2619 = vadd.f32 %v2540, %v2618
    %v2620 = vpop.f32.mrf.mxu0
    %2621 = vdwg.mxu0
    %v2622 = vmax.f32 %v2614, 0.0
    %v2623 = vmax.f32 %v2619, 0.0
    %v2624 = vld [vmem:[%s6] sm:$0xff]
    %v2625 = vld [vmem:[%s6 + $0x8] sm:$0xff]
    %v2626 = vld [vmem:[%s6 + $0x10] sm:$0xff]
    %v2627 = vld [vmem:[%s6 + $0x18] sm:$0xff]
    %v2628 = vld [vmem:[%s6 + $0x20] sm:$0xff]
    %v2629 = vld [vmem:[%s6 + $0x28] sm:$0xff]
    %v2630 = vld [vmem:[%s6 + $0x30] sm:$0xff]
    %v2631 = vld [vmem:[%s6 + $0x38] sm:$0xff]
    %vm2632 = vcmask 523264
    %v2634 = vsel %vm2632, %v2622, 0
    %v2637 = vsel %vm2632, %v2623, 0
    %2639 = vmatprep.subr.mxu0 0.0
    %2640 = vmatpush1.msra.mxu0 0.0
    %2641 = vmatprep.subr.mxu0 0.0
    %2642 = vmatpush1.msra.mxu0 0.0
    %2643 = vmatprep.subr.mxu0 0.0
    %2644 = vmatpush1.msra.mxu0 0.0
    %2645 = vmatprep.subr.mxu0 0.0
    %2646 = vmatpush1.msra.mxu0 0.0
    %2647 = vmatprep.subr.mxu0 0.0
    %2648 = vmatpush1.msra.mxu0 0.0
    %2649 = vmatprep.subr.mxu0 0.0
    %2650 = vmatpush1.msra.mxu0 0.0
    %2651 = vmatprep.subr.mxu0 0.0
    %2652 = vmatpush1.msra.mxu0 0.0
    %2653 = vmatprep.subr.mxu0 0.0
    %2654 = vmatpush1.msra.mxu0 0.0
    %2655 = vmatprep.subr.mxu0 0.0
    %2656 = vmatpush1.msra.mxu0 %v2631
    %2657 = vmatprep.subr.mxu0 0.0
    %2658 = vmatpush1.msra.mxu0 %v2630
    %2659 = vmatprep.subr.mxu0 0.0
    %2660 = vmatpush1.msra.mxu0 %v2629
    %2661 = vmatprep.subr.mxu0 0.0
    %2662 = vmatpush1.msra.mxu0 %v2628
    %2663 = vmatprep.subr.mxu0 0.0
    %2664 = vmatpush1.msra.mxu0 %v2627
    %2665 = vmatprep.subr.mxu0 0.0
    %2666 = vmatpush1.msra.mxu0 %v2626
    %2667 = vmatprep.subr.mxu0 0.0
    %2668 = vmatpush1.msra.mxu0 %v2625
    %2669 = vmatprep.subr.mxu0 0.0
    %2670 = vmatpush1.msra.mxu0 %v2624
    %2671 = vmatprep.subr.mxu0 0.0
    %2672 = vmatpush2.msra.mxu0 0.0
    %2673 = vmatprep.subr.mxu0 0.0
    %2674 = vmatpush2.msra.mxu0 0.0
    %2675 = vmatprep.subr.mxu0 0.0
    %2676 = vmatpush2.msra.mxu0 0.0
    %2677 = vmatprep.subr.mxu0 0.0
    %2678 = vmatpush2.msra.mxu0 0.0
    %2679 = vmatprep.subr.mxu0 0.0
    %2680 = vmatpush2.msra.mxu0 0.0
    %2681 = vmatprep.subr.mxu0 0.0
    %2682 = vmatpush2.msra.mxu0 0.0
    %2683 = vmatprep.subr.mxu0 0.0
    %2684 = vmatpush2.msra.mxu0 0.0
    %2685 = vmatprep.subr.mxu0 0.0
    %2686 = vmatpush2.msra.mxu0 0.0
    %2687 = vmatprep.subr.mxu0 0.0
    %2688 = vmatpush2.msra.mxu0 0.0
    %2689 = vmatprep.subr.mxu0 0.0
    %2690 = vmatpush2.msra.mxu0 0.0
    %2691 = vmatprep.subr.mxu0 0.0
    %2692 = vmatpush2.msra.mxu0 0.0
    %2693 = vmatprep.subr.mxu0 0.0
    %2694 = vmatpush2.msra.mxu0 0.0
    %2695 = vmatprep.subr.mxu0 0.0
    %2696 = vmatpush2.msra.mxu0 0.0
    %2697 = vmatprep.subr.mxu0 0.0
    %2698 = vmatpush2.msra.mxu0 0.0
    %2699 = vmatprep.subr.mxu0 0.0
    %2700 = vmatpush2.msra.mxu0 0.0
    %2701 = vmatprep.subr.mxu0 0.0
    %2702 = vmatpush2.msra.mxu0 0.0
    %2703 = vmatprep.mubr.f32.mxu0 0.0
    %2704 = vmatmul.mubr.f32.gmra.mxu0 %v2634
    %v2705 = vpop.f32.mrf.mxu0
    %v2706 = vadd.f32 0.0, %v2705
    %v2707 = vpop.f32.mrf.mxu0
    %2708 = vmatprep.mubr.f32.mxu0 0.0
    %2709 = vmatmul.mubr.f32.gmra.mxu0 %v2637
    %v2710 = vpop.f32.mrf.mxu0
    %v2711 = vadd.f32 0.0, %v2710
    %v2712 = vpop.f32.mrf.mxu0
    %2713 = vdwg.mxu0
    %v2714 = vadd.f32 %v2477, %v2706
    %v2715 = vadd.f32 %v2478, %v2711
    %v2716 = vlaneseq
    %v2717 = vshrl.u32 %v2716, 7
    %v2718 = vsub.s32 1, %v2717
    %v2719 = vrot.slane %v63, %v2718
    %v2720 = vadd.f32 %v2714, %v2719
    %v2721 = vadd.f32 %v2715, %v2719
    %2722 = vst.msk [vmem:[#allocation7] sm:$0xff] %vm86, %v2720
    %2723 = vst.msk [vmem:[#allocation7 + $0x8] sm:$0xff] %vm86, %v2721
    // Predicated region
    $region42: #{tpu_custom_call.1} parent=1 // pred_check
      _
    $region43: #{tpu_custom_call.1} parent=1 // pred_check_branch
      %2725 = sbr.rel (0) target = $region45
    $region44: #{tpu_custom_call.1} parent=1 // pred_region
      %s2727 = ssub.s32 256, 256
      %2728 = vsyncadd [#allocation4], %s2727
      %s2729 = sshll.u32 [#allocation7], 4
      %s2730 = int_to_ptr.vmem [resolvable:$true] %s2729
      %2735 = dma.vmem_to_hbm [thread:$0]  %s2730, 256, %s8, [#allocation4], 128, 128, 8
    $region45: #{tpu_custom_call.1} parent=1 // pred_fallthru
      _
    // Predicated region
    $region46: #{tpu_custom_call.1} parent=1 // pred_check
      _
    $region47: #{tpu_custom_call.1} parent=1 // pred_check_branch
      %2737 = sbr.rel (0) target = $region49
    $region48: #{tpu_custom_call.1} parent=1 // pred_region
      %2738 = dma.done [#allocation4], 256
    $region49: #{tpu_custom_call.1} parent=1 // pred_fallthru
      _
    %2739 = vsyncpa [#allocation3], 1
    %2740 = vsyncpa [#allocation6], 1
    %2741 = vsyncpa [#allocation4], 1

</llo_original>
